<compile_context>
chip_gen: v6e
topology: v6e:2x2x1
jax: 0.10.0
libtpu: 0.0.40
codegen_flags: <defaults>
</compile_context>

<pallas_src>
import jax
import jax.numpy as jnp
from jax.experimental import pallas as pl
from jax.experimental.pallas import tpu as pltpu

EMBED_DIM = 64
HIDDEN_DIM = 128
VOCAB_SIZE = 4  # Vocabulary() only contains <PAD>, <SOS>, <EOS>, <UNK>


# ----------------------------------------------------------------------------
# Kernel helpers
# ----------------------------------------------------------------------------
def _mm(a, b):
    """MXU matmul with bf16 operands and f32 accumulation."""
    return jnp.dot(a.astype(jnp.bfloat16), b.astype(jnp.bfloat16),
                   preferred_element_type=jnp.float32)


def _select_rows(ids_col, table):
    """In-kernel embedding 'gather' over a tiny (V, C) table: sum_v (ids==v) * table[v]."""
    V = table.shape[0]
    out = None
    for v in range(V):
        m = (ids_col == v).astype(jnp.float32)      # (B, 1) 0/1 mask
        contrib = m * table[v:v + 1, :]             # (B, C)
        out = contrib if out is None else out + contrib
    return out


def _gru_gates(gi, gh, h, H):
    """PyTorch GRUCell semantics, gate order (r, z, n); all gate math in f32."""
    r = jax.nn.sigmoid(gi[:, :H] + gh[:, :H])
    z = jax.nn.sigmoid(gi[:, H:2 * H] + gh[:, H:2 * H])
    n = jnp.tanh(gi[:, 2 * H:] + r * gh[:, 2 * H:])
    return (1.0 - z) * n + z * h


# ----------------------------------------------------------------------------
# Fused Seq2Seq kernel (no grid: full recurrence inside one invocation)
# ----------------------------------------------------------------------------
def seq2seq_kernel(src_ref, trg_ref,
                   enc_emb_ref, enc_w_ih_ref, enc_w_hh_ref, enc_b_ih_ref, enc_b_hh_ref,
                   dec_emb_ref, dec_w_ih_x_ref, dec_w_ih_c_ref, dec_w_hh_ref,
                   dec_b_ih_ref, dec_b_hh_ref,
                   fc_w_ref, fc_b_ref,
                   out_ref, h_scr_ref):
    B, S = src_ref.shape
    T = trg_ref.shape[1]
    Tm1 = T - 1
    H = enc_w_hh_ref.shape[0]
    V = fc_w_ref.shape[1]
    TPAD = h_scr_ref.shape[0] // B          # 8-aligned time slots per batch row group

    # --- Fold the (V, E) embedding tables into per-token gate-input tables (off the chain).
    # enc_gi_tbl[v] = enc_emb[v] @ enc_W_ih + enc_b_ih        (V, 3H)
    # dec_gix_tbl[v] = dec_emb[v] @ dec_W_ih_x                (V, 3H) (b_ih folded into gi_ctx)
    enc_gi_tbl = _mm(enc_emb_ref[...], enc_w_ih_ref[...]) + enc_b_ih_ref[...]
    dec_gix_tbl = _mm(dec_emb_ref[...], dec_w_ih_x_ref[...])

    # Loop-invariant recurrent weights, cast to bf16 once.
    enc_w_hh = enc_w_hh_ref[...].astype(jnp.bfloat16)
    dec_w_hh = dec_w_hh_ref[...].astype(jnp.bfloat16)
    enc_b_hh = enc_b_hh_ref[...]
    dec_b_hh = dec_b_hh_ref[...]

    src = src_ref[...]                      # (B, S) int32
    trg = trg_ref[...]                      # (B, T) int32 (last column unused)

    # Hoisted per-step input projections (independent of the recurrent state).
    enc_gi = [_select_rows(src[:, t:t + 1], enc_gi_tbl) for t in range(S)]

    # ------------------- Encoder -------------------
    h = jnp.zeros((B, H), jnp.float32)
    for t in range(S):                      # static, fully unrolled
        gh = _mm(h, enc_w_hh) + enc_b_hh
        h = _gru_gates(enc_gi[t], gh, h, H)
    context = h                             # (B, H)

    # ------------------- Decoder -------------------
    # Context projection + input bias is constant across steps; the add onto the per-step token
    # projection is hoisted off the serial chain too.
    gi_ctx = _mm(context, dec_w_ih_c_ref[...]) + dec_b_ih_ref[...]          # (B, 3H)
    dec_gi = [_select_rows(trg[:, t:t + 1], dec_gix_tbl) + gi_ctx for t in range(Tm1)]

    h_scr_ref[...] = jnp.zeros_like(h_scr_ref)   # zero the padded / unused time slots
    h = context
    for t in range(Tm1):                    # static, fully unrolled
        gh = _mm(h, dec_w_hh) + dec_b_hh
        h = _gru_gates(dec_gi[t], gh, h, H)
        for b in range(B):                  # batch-major scratch rows: b * TPAD + t
            h_scr_ref[pl.ds(b * TPAD + t, 1), :] = h[b:b + 1, :]

    # ------------------- Batched output projection -------------------
    logits = _mm(h_scr_ref[...], fc_w_ref[...]) + fc_b_ref[...]             # (B*TPAD, V)
    logits = logits.reshape(B, TPAD, V)                                      # 8-aligned split

    # outputs[:, 0] stays zero exactly as in the PyTorch loop; no concat, just two stores.
    out_ref[:, 0:1, :] = jnp.zeros((B, 1, V), out_ref.dtype)
    out_ref[:, 1:, :] = logits[:, :Tm1, :].astype(out_ref.dtype)


# ----------------------------------------------------------------------------
# Seq2Seq forward (single fused Pallas call, no wrapper-side XLA ops)
# ----------------------------------------------------------------------------
def seq2seq_forward(params, src, trg):
    B, S = src.shape
    T = trg.shape[1]
    Tm1 = T - 1
    TPAD = max(8, ((Tm1 + 7) // 8) * 8)     # tile-aligned time slots for the hidden scratch

    num_inputs = 15
    return pl.pallas_call(
        seq2seq_kernel,
        out_shape=jax.ShapeDtypeStruct((B, T, VOCAB_SIZE), jnp.float32),
        in_specs=[pl.BlockSpec(memory_space=pltpu.MemorySpace.VMEM)] * num_inputs,
        out_specs=pl.BlockSpec(memory_space=pltpu.MemorySpace.VMEM),
        scratch_shapes=[pltpu.VMEM((B * TPAD, HIDDEN_DIM), jnp.float32)],
    )(src, trg,
      params["enc_emb"], params["enc_w_ih"], params["enc_w_hh"],
      params["enc_b_ih"], params["enc_b_hh"],
      params["dec_emb"], params["dec_w_ih_x"], params["dec_w_ih_ctx"], params["dec_w_hh"],
      params["dec_b_ih"], params["dec_b_hh"],
      params["fc_w"], params["fc_b"])


# ----------------------------------------------------------------------------
# Pure-JAX reference (mirrors PyTorch semantics) for a correctness check
# ----------------------------------------------------------------------------
def _gru_step_ref(h, x, w_ih, w_hh, b_ih, b_hh):
    H = h.shape[-1]
    gi = x @ w_ih + b_ih
    gh = h @ w_hh + b_hh
    r = jax.nn.sigmoid(gi[:, :H] + gh[:, :H])
    z = jax.nn.sigmoid(gi[:, H:2 * H] + gh[:, H:2 * H])
    n = jnp.tanh(gi[:, 2 * H:] + r * gh[:, 2 * H:])
    return (1.0 - z) * n + z * h


def seq2seq_reference(params, src, trg):
    B, S = src.shape
    T = trg.shape[1]
    h = jnp.zeros((B, HIDDEN_DIM), jnp.float32)
    enc_emb = jnp.take(params["enc_emb"], src, axis=0)
    for t in range(S):
        h = _gru_step_ref(h, enc_emb[:, t], params["enc_w_ih"], params["enc_w_hh"],
                          params["enc_b_ih"], params["enc_b_hh"])
    context = h
    hidden = context
    outputs = jnp.zeros((B, T, VOCAB_SIZE), jnp.float32)
    dec_emb = jnp.take(params["dec_emb"], trg, axis=0)
    dec_w_ih = jnp.concatenate([params["dec_w_ih_x"], params["dec_w_ih_ctx"]], axis=0)
    for t in range(T - 1):
        combined = jnp.concatenate([dec_emb[:, t], context], axis=-1)
        hidden = _gru_step_ref(hidden, combined, dec_w_ih, params["dec_w_hh"],
                               params["dec_b_ih"], params["dec_b_hh"])
        step_out = hidden @ params["fc_w"] + params["fc_b"]
        outputs = outputs.at[:, t + 1].set(step_out)
    return outputs


# ----------------------------------------------------------------------------
# Deterministic parameter init (matches nn.Module shapes, transposed layout;
# decoder input weight stored pre-split into token / context halves)
# ----------------------------------------------------------------------------
def init_params(key):
    E, H, V = EMBED_DIM, HIDDEN_DIM, VOCAB_SIZE
    keys = jax.random.split(key, 12)
    u = lambda k, shape: jax.random.uniform(k, shape, jnp.float32, -0.1, 0.1)
    return {
        "enc_emb": u(keys[0], (V, E)),
        "enc_w_ih": u(keys[1], (E, 3 * H)),
        "enc_w_hh": u(keys[2], (H, 3 * H)),
        "enc_b_ih": u(keys[3], (1, 3 * H)),
        "enc_b_hh": u(keys[4], (1, 3 * H)),
        "dec_emb": u(keys[5], (V, E)),
        "dec_w_ih_x": u(keys[6], (E, 3 * H)),
        "dec_w_ih_ctx": u(keys[7], (H, 3 * H)),
        "dec_w_hh": u(keys[8], (H, 3 * H)),
        "dec_b_ih": u(keys[9], (1, 3 * H)),
        "dec_b_hh": u(keys[10], (1, 3 * H)),
        "fc_w": u(keys[11], (H, V)),
        "fc_b": jnp.zeros((1, V), jnp.float32),
    }


if __name__ == "__main__":
    key = jax.random.PRNGKey(0)
    pkey, skey, tkey = jax.random.split(key, 3)

    B, S, T = 2, 8, 8
    params = init_params(pkey)
    src = jax.random.randint(skey, (B, S), 0, VOCAB_SIZE, dtype=jnp.int32)
    trg = jax.random.randint(tkey, (B, T), 0, VOCAB_SIZE, dtype=jnp.int32)

    out = jax.jit(seq2seq_forward)(params, src, trg)
    out = jax.block_until_ready(out)

    ref = seq2seq_reference(params, src, trg)

    assert out.shape == (B, T, VOCAB_SIZE), out.shape
    assert out.dtype == jnp.float32
    assert bool(jnp.all(out[:, 0] == 0.0))
    # Kernel uses bf16 matmul operands (per perf review) vs. an f32 XLA reference,
    # so the tolerance is slightly wider than pure-f32 would need.
    assert bool(jnp.allclose(out, ref, atol=5e-3, rtol=5e-3)), "mismatch vs reference"

    print("KERNEL_OK")
</pallas_src>

<mosaic_0001>
module attributes {stable_mosaic.version = 11 : i64} {
  func.func @seq2seq_kernel(%arg0: memref<2x8xi32, #tpu.memory_space<vmem>>, %arg1: memref<2x8xi32, #tpu.memory_space<vmem>>, %arg2: memref<4x64xf32, #tpu.memory_space<vmem>>, %arg3: memref<64x384xf32, #tpu.memory_space<vmem>>, %arg4: memref<128x384xf32, #tpu.memory_space<vmem>>, %arg5: memref<1x384xf32, #tpu.memory_space<vmem>>, %arg6: memref<1x384xf32, #tpu.memory_space<vmem>>, %arg7: memref<4x64xf32, #tpu.memory_space<vmem>>, %arg8: memref<64x384xf32, #tpu.memory_space<vmem>>, %arg9: memref<128x384xf32, #tpu.memory_space<vmem>>, %arg10: memref<128x384xf32, #tpu.memory_space<vmem>>, %arg11: memref<1x384xf32, #tpu.memory_space<vmem>>, %arg12: memref<1x384xf32, #tpu.memory_space<vmem>>, %arg13: memref<128x4xf32, #tpu.memory_space<vmem>>, %arg14: memref<1x4xf32, #tpu.memory_space<vmem>>, %arg15: memref<2x8x4xf32, #tpu.memory_space<vmem>>, %arg16: memref<16x128xf32, #tpu.memory_space<vmem>>) attributes {dimension_semantics = [], scalar_prefetch = 0 : i64, scratch_operands = 1 : i64, tpu.core_type = #tpu.core_type<tc>} {
    %c0 = arith.constant 0 : index
    %c0_0 = arith.constant 0 : index
    %0 = vector.load %arg2[%c0, %c0_0] : memref<4x64xf32, #tpu.memory_space<vmem>>, vector<4x64xf32>
    %c0_1 = arith.constant 0 : index
    %c0_2 = arith.constant 0 : index
    %1 = vector.load %arg3[%c0_1, %c0_2] : memref<64x384xf32, #tpu.memory_space<vmem>>, vector<64x384xf32>
    %2 = arith.truncf %0 : vector<4x64xf32> to vector<4x64xbf16>
    %3 = arith.truncf %1 : vector<64x384xf32> to vector<64x384xbf16>
    %cst = arith.constant dense<0.000000e+00> : vector<4x384xf32>
    %4 = tpu.matmul %2, %3, %cst {dimension_numbers = #tpu.dot_dimension_numbers<[1], [0], [0], [1], [0, 0, 1, 1], [], []>} : vector<4x64xbf16>, vector<64x384xbf16>, vector<4x384xf32> -> vector<4x384xf32>
    %c0_3 = arith.constant 0 : index
    %c0_4 = arith.constant 0 : index
    %5 = vector.load %arg5[%c0_3, %c0_4] : memref<1x384xf32, #tpu.memory_space<vmem>>, vector<1x384xf32>
    %6 = vector.broadcast %5 : vector<1x384xf32> to vector<4x384xf32>
    %7 = arith.addf %4, %6 : vector<4x384xf32>
    %c0_5 = arith.constant 0 : index
    %c0_6 = arith.constant 0 : index
    %8 = vector.load %arg7[%c0_5, %c0_6] : memref<4x64xf32, #tpu.memory_space<vmem>>, vector<4x64xf32>
    %c0_7 = arith.constant 0 : index
    %c0_8 = arith.constant 0 : index
    %9 = vector.load %arg8[%c0_7, %c0_8] : memref<64x384xf32, #tpu.memory_space<vmem>>, vector<64x384xf32>
    %10 = arith.truncf %8 : vector<4x64xf32> to vector<4x64xbf16>
    %11 = arith.truncf %9 : vector<64x384xf32> to vector<64x384xbf16>
    %cst_9 = arith.constant dense<0.000000e+00> : vector<4x384xf32>
    %12 = tpu.matmul %10, %11, %cst_9 {dimension_numbers = #tpu.dot_dimension_numbers<[1], [0], [0], [1], [0, 0, 1, 1], [], []>} : vector<4x64xbf16>, vector<64x384xbf16>, vector<4x384xf32> -> vector<4x384xf32>
    %c0_10 = arith.constant 0 : index
    %c0_11 = arith.constant 0 : index
    %13 = vector.load %arg4[%c0_10, %c0_11] : memref<128x384xf32, #tpu.memory_space<vmem>>, vector<128x384xf32>
    %14 = arith.truncf %13 : vector<128x384xf32> to vector<128x384xbf16>
    %c0_12 = arith.constant 0 : index
    %c0_13 = arith.constant 0 : index
    %15 = vector.load %arg10[%c0_12, %c0_13] : memref<128x384xf32, #tpu.memory_space<vmem>>, vector<128x384xf32>
    %16 = arith.truncf %15 : vector<128x384xf32> to vector<128x384xbf16>
    %c0_14 = arith.constant 0 : index
    %c0_15 = arith.constant 0 : index
    %17 = vector.load %arg6[%c0_14, %c0_15] : memref<1x384xf32, #tpu.memory_space<vmem>>, vector<1x384xf32>
    %c0_16 = arith.constant 0 : index
    %c0_17 = arith.constant 0 : index
    %18 = vector.load %arg12[%c0_16, %c0_17] : memref<1x384xf32, #tpu.memory_space<vmem>>, vector<1x384xf32>
    %c0_18 = arith.constant 0 : index
    %c0_19 = arith.constant 0 : index
    %19 = vector.load %arg0[%c0_18, %c0_19] : memref<2x8xi32, #tpu.memory_space<vmem>>, vector<2x8xi32>
    %c0_20 = arith.constant 0 : index
    %c0_21 = arith.constant 0 : index
    %20 = vector.load %arg1[%c0_20, %c0_21] : memref<2x8xi32, #tpu.memory_space<vmem>>, vector<2x8xi32>
    %21 = vector.extract_strided_slice %19 {offsets = [0, 0], sizes = [2, 1], strides = [1, 1]} : vector<2x8xi32> to vector<2x1xi32>
    %c0_i32 = arith.constant 0 : i32
    %22 = vector.broadcast %c0_i32 : i32 to vector<2x1xi32>
    %23 = arith.cmpi eq, %21, %22 : vector<2x1xi32>
    %24 = arith.extui %23 : vector<2x1xi1> to vector<2x1xi32>
    %25 = arith.sitofp %24 : vector<2x1xi32> to vector<2x1xf32>
    %26 = vector.extract_strided_slice %7 {offsets = [0, 0], sizes = [1, 384], strides = [1, 1]} : vector<4x384xf32> to vector<1x384xf32>
    %27 = vector.broadcast %25 : vector<2x1xf32> to vector<2x384xf32>
    %28 = vector.broadcast %26 : vector<1x384xf32> to vector<2x384xf32>
    %29 = arith.mulf %27, %28 : vector<2x384xf32>
    %c1_i32 = arith.constant 1 : i32
    %30 = vector.broadcast %c1_i32 : i32 to vector<2x1xi32>
    %31 = arith.cmpi eq, %21, %30 : vector<2x1xi32>
    %32 = arith.extui %31 : vector<2x1xi1> to vector<2x1xi32>
    %33 = arith.sitofp %32 : vector<2x1xi32> to vector<2x1xf32>
    %34 = vector.extract_strided_slice %7 {offsets = [1, 0], sizes = [1, 384], strides = [1, 1]} : vector<4x384xf32> to vector<1x384xf32>
    %35 = vector.broadcast %33 : vector<2x1xf32> to vector<2x384xf32>
    %36 = vector.broadcast %34 : vector<1x384xf32> to vector<2x384xf32>
    %37 = arith.mulf %35, %36 : vector<2x384xf32>
    %38 = arith.addf %29, %37 : vector<2x384xf32>
    %c2_i32 = arith.constant 2 : i32
    %39 = vector.broadcast %c2_i32 : i32 to vector<2x1xi32>
    %40 = arith.cmpi eq, %21, %39 : vector<2x1xi32>
    %41 = arith.extui %40 : vector<2x1xi1> to vector<2x1xi32>
    %42 = arith.sitofp %41 : vector<2x1xi32> to vector<2x1xf32>
    %43 = vector.extract_strided_slice %7 {offsets = [2, 0], sizes = [1, 384], strides = [1, 1]} : vector<4x384xf32> to vector<1x384xf32>
    %44 = vector.broadcast %42 : vector<2x1xf32> to vector<2x384xf32>
    %45 = vector.broadcast %43 : vector<1x384xf32> to vector<2x384xf32>
    %46 = arith.mulf %44, %45 : vector<2x384xf32>
    %47 = arith.addf %38, %46 : vector<2x384xf32>
    %c3_i32 = arith.constant 3 : i32
    %48 = vector.broadcast %c3_i32 : i32 to vector<2x1xi32>
    %49 = arith.cmpi eq, %21, %48 : vector<2x1xi32>
    %50 = arith.extui %49 : vector<2x1xi1> to vector<2x1xi32>
    %51 = arith.sitofp %50 : vector<2x1xi32> to vector<2x1xf32>
    %52 = vector.extract_strided_slice %7 {offsets = [3, 0], sizes = [1, 384], strides = [1, 1]} : vector<4x384xf32> to vector<1x384xf32>
    %53 = vector.broadcast %51 : vector<2x1xf32> to vector<2x384xf32>
    %54 = vector.broadcast %52 : vector<1x384xf32> to vector<2x384xf32>
    %55 = arith.mulf %53, %54 : vector<2x384xf32>
    %56 = arith.addf %47, %55 : vector<2x384xf32>
    %57 = vector.extract_strided_slice %19 {offsets = [0, 1], sizes = [2, 1], strides = [1, 1]} : vector<2x8xi32> to vector<2x1xi32>
    %c0_i32_22 = arith.constant 0 : i32
    %58 = vector.broadcast %c0_i32_22 : i32 to vector<2x1xi32>
    %59 = arith.cmpi eq, %57, %58 : vector<2x1xi32>
    %60 = arith.extui %59 : vector<2x1xi1> to vector<2x1xi32>
    %61 = arith.sitofp %60 : vector<2x1xi32> to vector<2x1xf32>
    %62 = vector.extract_strided_slice %7 {offsets = [0, 0], sizes = [1, 384], strides = [1, 1]} : vector<4x384xf32> to vector<1x384xf32>
    %63 = vector.broadcast %61 : vector<2x1xf32> to vector<2x384xf32>
    %64 = vector.broadcast %62 : vector<1x384xf32> to vector<2x384xf32>
    %65 = arith.mulf %63, %64 : vector<2x384xf32>
    %c1_i32_23 = arith.constant 1 : i32
    %66 = vector.broadcast %c1_i32_23 : i32 to vector<2x1xi32>
    %67 = arith.cmpi eq, %57, %66 : vector<2x1xi32>
    %68 = arith.extui %67 : vector<2x1xi1> to vector<2x1xi32>
    %69 = arith.sitofp %68 : vector<2x1xi32> to vector<2x1xf32>
    %70 = vector.extract_strided_slice %7 {offsets = [1, 0], sizes = [1, 384], strides = [1, 1]} : vector<4x384xf32> to vector<1x384xf32>
    %71 = vector.broadcast %69 : vector<2x1xf32> to vector<2x384xf32>
    %72 = vector.broadcast %70 : vector<1x384xf32> to vector<2x384xf32>
    %73 = arith.mulf %71, %72 : vector<2x384xf32>
    %74 = arith.addf %65, %73 : vector<2x384xf32>
    %c2_i32_24 = arith.constant 2 : i32
    %75 = vector.broadcast %c2_i32_24 : i32 to vector<2x1xi32>
    %76 = arith.cmpi eq, %57, %75 : vector<2x1xi32>
    %77 = arith.extui %76 : vector<2x1xi1> to vector<2x1xi32>
    %78 = arith.sitofp %77 : vector<2x1xi32> to vector<2x1xf32>
    %79 = vector.extract_strided_slice %7 {offsets = [2, 0], sizes = [1, 384], strides = [1, 1]} : vector<4x384xf32> to vector<1x384xf32>
    %80 = vector.broadcast %78 : vector<2x1xf32> to vector<2x384xf32>
    %81 = vector.broadcast %79 : vector<1x384xf32> to vector<2x384xf32>
    %82 = arith.mulf %80, %81 : vector<2x384xf32>
    %83 = arith.addf %74, %82 : vector<2x384xf32>
    %c3_i32_25 = arith.constant 3 : i32
    %84 = vector.broadcast %c3_i32_25 : i32 to vector<2x1xi32>
    %85 = arith.cmpi eq, %57, %84 : vector<2x1xi32>
    %86 = arith.extui %85 : vector<2x1xi1> to vector<2x1xi32>
    %87 = arith.sitofp %86 : vector<2x1xi32> to vector<2x1xf32>
    %88 = vector.extract_strided_slice %7 {offsets = [3, 0], sizes = [1, 384], strides = [1, 1]} : vector<4x384xf32> to vector<1x384xf32>
    %89 = vector.broadcast %87 : vector<2x1xf32> to vector<2x384xf32>
    %90 = vector.broadcast %88 : vector<1x384xf32> to vector<2x384xf32>
    %91 = arith.mulf %89, %90 : vector<2x384xf32>
    %92 = arith.addf %83, %91 : vector<2x384xf32>
    %93 = vector.extract_strided_slice %19 {offsets = [0, 2], sizes = [2, 1], strides = [1, 1]} : vector<2x8xi32> to vector<2x1xi32>
    %c0_i32_26 = arith.constant 0 : i32
    %94 = vector.broadcast %c0_i32_26 : i32 to vector<2x1xi32>
    %95 = arith.cmpi eq, %93, %94 : vector<2x1xi32>
    %96 = arith.extui %95 : vector<2x1xi1> to vector<2x1xi32>
    %97 = arith.sitofp %96 : vector<2x1xi32> to vector<2x1xf32>
    %98 = vector.extract_strided_slice %7 {offsets = [0, 0], sizes = [1, 384], strides = [1, 1]} : vector<4x384xf32> to vector<1x384xf32>
    %99 = vector.broadcast %97 : vector<2x1xf32> to vector<2x384xf32>
    %100 = vector.broadcast %98 : vector<1x384xf32> to vector<2x384xf32>
    %101 = arith.mulf %99, %100 : vector<2x384xf32>
    %c1_i32_27 = arith.constant 1 : i32
    %102 = vector.broadcast %c1_i32_27 : i32 to vector<2x1xi32>
    %103 = arith.cmpi eq, %93, %102 : vector<2x1xi32>
    %104 = arith.extui %103 : vector<2x1xi1> to vector<2x1xi32>
    %105 = arith.sitofp %104 : vector<2x1xi32> to vector<2x1xf32>
    %106 = vector.extract_strided_slice %7 {offsets = [1, 0], sizes = [1, 384], strides = [1, 1]} : vector<4x384xf32> to vector<1x384xf32>
    %107 = vector.broadcast %105 : vector<2x1xf32> to vector<2x384xf32>
    %108 = vector.broadcast %106 : vector<1x384xf32> to vector<2x384xf32>
    %109 = arith.mulf %107, %108 : vector<2x384xf32>
    %110 = arith.addf %101, %109 : vector<2x384xf32>
    %c2_i32_28 = arith.constant 2 : i32
    %111 = vector.broadcast %c2_i32_28 : i32 to vector<2x1xi32>
    %112 = arith.cmpi eq, %93, %111 : vector<2x1xi32>
    %113 = arith.extui %112 : vector<2x1xi1> to vector<2x1xi32>
    %114 = arith.sitofp %113 : vector<2x1xi32> to vector<2x1xf32>
    %115 = vector.extract_strided_slice %7 {offsets = [2, 0], sizes = [1, 384], strides = [1, 1]} : vector<4x384xf32> to vector<1x384xf32>
    %116 = vector.broadcast %114 : vector<2x1xf32> to vector<2x384xf32>
    %117 = vector.broadcast %115 : vector<1x384xf32> to vector<2x384xf32>
    %118 = arith.mulf %116, %117 : vector<2x384xf32>
    %119 = arith.addf %110, %118 : vector<2x384xf32>
    %c3_i32_29 = arith.constant 3 : i32
    %120 = vector.broadcast %c3_i32_29 : i32 to vector<2x1xi32>
    %121 = arith.cmpi eq, %93, %120 : vector<2x1xi32>
    %122 = arith.extui %121 : vector<2x1xi1> to vector<2x1xi32>
    %123 = arith.sitofp %122 : vector<2x1xi32> to vector<2x1xf32>
    %124 = vector.extract_strided_slice %7 {offsets = [3, 0], sizes = [1, 384], strides = [1, 1]} : vector<4x384xf32> to vector<1x384xf32>
    %125 = vector.broadcast %123 : vector<2x1xf32> to vector<2x384xf32>
    %126 = vector.broadcast %124 : vector<1x384xf32> to vector<2x384xf32>
    %127 = arith.mulf %125, %126 : vector<2x384xf32>
    %128 = arith.addf %119, %127 : vector<2x384xf32>
    %129 = vector.extract_strided_slice %19 {offsets = [0, 3], sizes = [2, 1], strides = [1, 1]} : vector<2x8xi32> to vector<2x1xi32>
    %c0_i32_30 = arith.constant 0 : i32
    %130 = vector.broadcast %c0_i32_30 : i32 to vector<2x1xi32>
    %131 = arith.cmpi eq, %129, %130 : vector<2x1xi32>
    %132 = arith.extui %131 : vector<2x1xi1> to vector<2x1xi32>
    %133 = arith.sitofp %132 : vector<2x1xi32> to vector<2x1xf32>
    %134 = vector.extract_strided_slice %7 {offsets = [0, 0], sizes = [1, 384], strides = [1, 1]} : vector<4x384xf32> to vector<1x384xf32>
    %135 = vector.broadcast %133 : vector<2x1xf32> to vector<2x384xf32>
    %136 = vector.broadcast %134 : vector<1x384xf32> to vector<2x384xf32>
    %137 = arith.mulf %135, %136 : vector<2x384xf32>
    %c1_i32_31 = arith.constant 1 : i32
    %138 = vector.broadcast %c1_i32_31 : i32 to vector<2x1xi32>
    %139 = arith.cmpi eq, %129, %138 : vector<2x1xi32>
    %140 = arith.extui %139 : vector<2x1xi1> to vector<2x1xi32>
    %141 = arith.sitofp %140 : vector<2x1xi32> to vector<2x1xf32>
    %142 = vector.extract_strided_slice %7 {offsets = [1, 0], sizes = [1, 384], strides = [1, 1]} : vector<4x384xf32> to vector<1x384xf32>
    %143 = vector.broadcast %141 : vector<2x1xf32> to vector<2x384xf32>
    %144 = vector.broadcast %142 : vector<1x384xf32> to vector<2x384xf32>
    %145 = arith.mulf %143, %144 : vector<2x384xf32>
    %146 = arith.addf %137, %145 : vector<2x384xf32>
    %c2_i32_32 = arith.constant 2 : i32
    %147 = vector.broadcast %c2_i32_32 : i32 to vector<2x1xi32>
    %148 = arith.cmpi eq, %129, %147 : vector<2x1xi32>
    %149 = arith.extui %148 : vector<2x1xi1> to vector<2x1xi32>
    %150 = arith.sitofp %149 : vector<2x1xi32> to vector<2x1xf32>
    %151 = vector.extract_strided_slice %7 {offsets = [2, 0], sizes = [1, 384], strides = [1, 1]} : vector<4x384xf32> to vector<1x384xf32>
    %152 = vector.broadcast %150 : vector<2x1xf32> to vector<2x384xf32>
    %153 = vector.broadcast %151 : vector<1x384xf32> to vector<2x384xf32>
    %154 = arith.mulf %152, %153 : vector<2x384xf32>
    %155 = arith.addf %146, %154 : vector<2x384xf32>
    %c3_i32_33 = arith.constant 3 : i32
    %156 = vector.broadcast %c3_i32_33 : i32 to vector<2x1xi32>
    %157 = arith.cmpi eq, %129, %156 : vector<2x1xi32>
    %158 = arith.extui %157 : vector<2x1xi1> to vector<2x1xi32>
    %159 = arith.sitofp %158 : vector<2x1xi32> to vector<2x1xf32>
    %160 = vector.extract_strided_slice %7 {offsets = [3, 0], sizes = [1, 384], strides = [1, 1]} : vector<4x384xf32> to vector<1x384xf32>
    %161 = vector.broadcast %159 : vector<2x1xf32> to vector<2x384xf32>
    %162 = vector.broadcast %160 : vector<1x384xf32> to vector<2x384xf32>
    %163 = arith.mulf %161, %162 : vector<2x384xf32>
    %164 = arith.addf %155, %163 : vector<2x384xf32>
    %165 = vector.extract_strided_slice %19 {offsets = [0, 4], sizes = [2, 1], strides = [1, 1]} : vector<2x8xi32> to vector<2x1xi32>
    %c0_i32_34 = arith.constant 0 : i32
    %166 = vector.broadcast %c0_i32_34 : i32 to vector<2x1xi32>
    %167 = arith.cmpi eq, %165, %166 : vector<2x1xi32>
    %168 = arith.extui %167 : vector<2x1xi1> to vector<2x1xi32>
    %169 = arith.sitofp %168 : vector<2x1xi32> to vector<2x1xf32>
    %170 = vector.extract_strided_slice %7 {offsets = [0, 0], sizes = [1, 384], strides = [1, 1]} : vector<4x384xf32> to vector<1x384xf32>
    %171 = vector.broadcast %169 : vector<2x1xf32> to vector<2x384xf32>
    %172 = vector.broadcast %170 : vector<1x384xf32> to vector<2x384xf32>
    %173 = arith.mulf %171, %172 : vector<2x384xf32>
    %c1_i32_35 = arith.constant 1 : i32
    %174 = vector.broadcast %c1_i32_35 : i32 to vector<2x1xi32>
    %175 = arith.cmpi eq, %165, %174 : vector<2x1xi32>
    %176 = arith.extui %175 : vector<2x1xi1> to vector<2x1xi32>
    %177 = arith.sitofp %176 : vector<2x1xi32> to vector<2x1xf32>
    %178 = vector.extract_strided_slice %7 {offsets = [1, 0], sizes = [1, 384], strides = [1, 1]} : vector<4x384xf32> to vector<1x384xf32>
    %179 = vector.broadcast %177 : vector<2x1xf32> to vector<2x384xf32>
    %180 = vector.broadcast %178 : vector<1x384xf32> to vector<2x384xf32>
    %181 = arith.mulf %179, %180 : vector<2x384xf32>
    %182 = arith.addf %173, %181 : vector<2x384xf32>
    %c2_i32_36 = arith.constant 2 : i32
    %183 = vector.broadcast %c2_i32_36 : i32 to vector<2x1xi32>
    %184 = arith.cmpi eq, %165, %183 : vector<2x1xi32>
    %185 = arith.extui %184 : vector<2x1xi1> to vector<2x1xi32>
    %186 = arith.sitofp %185 : vector<2x1xi32> to vector<2x1xf32>
    %187 = vector.extract_strided_slice %7 {offsets = [2, 0], sizes = [1, 384], strides = [1, 1]} : vector<4x384xf32> to vector<1x384xf32>
    %188 = vector.broadcast %186 : vector<2x1xf32> to vector<2x384xf32>
    %189 = vector.broadcast %187 : vector<1x384xf32> to vector<2x384xf32>
    %190 = arith.mulf %188, %189 : vector<2x384xf32>
    %191 = arith.addf %182, %190 : vector<2x384xf32>
    %c3_i32_37 = arith.constant 3 : i32
    %192 = vector.broadcast %c3_i32_37 : i32 to vector<2x1xi32>
    %193 = arith.cmpi eq, %165, %192 : vector<2x1xi32>
    %194 = arith.extui %193 : vector<2x1xi1> to vector<2x1xi32>
    %195 = arith.sitofp %194 : vector<2x1xi32> to vector<2x1xf32>
    %196 = vector.extract_strided_slice %7 {offsets = [3, 0], sizes = [1, 384], strides = [1, 1]} : vector<4x384xf32> to vector<1x384xf32>
    %197 = vector.broadcast %195 : vector<2x1xf32> to vector<2x384xf32>
    %198 = vector.broadcast %196 : vector<1x384xf32> to vector<2x384xf32>
    %199 = arith.mulf %197, %198 : vector<2x384xf32>
    %200 = arith.addf %191, %199 : vector<2x384xf32>
    %201 = vector.extract_strided_slice %19 {offsets = [0, 5], sizes = [2, 1], strides = [1, 1]} : vector<2x8xi32> to vector<2x1xi32>
    %c0_i32_38 = arith.constant 0 : i32
    %202 = vector.broadcast %c0_i32_38 : i32 to vector<2x1xi32>
    %203 = arith.cmpi eq, %201, %202 : vector<2x1xi32>
    %204 = arith.extui %203 : vector<2x1xi1> to vector<2x1xi32>
    %205 = arith.sitofp %204 : vector<2x1xi32> to vector<2x1xf32>
    %206 = vector.extract_strided_slice %7 {offsets = [0, 0], sizes = [1, 384], strides = [1, 1]} : vector<4x384xf32> to vector<1x384xf32>
    %207 = vector.broadcast %205 : vector<2x1xf32> to vector<2x384xf32>
    %208 = vector.broadcast %206 : vector<1x384xf32> to vector<2x384xf32>
    %209 = arith.mulf %207, %208 : vector<2x384xf32>
    %c1_i32_39 = arith.constant 1 : i32
    %210 = vector.broadcast %c1_i32_39 : i32 to vector<2x1xi32>
    %211 = arith.cmpi eq, %201, %210 : vector<2x1xi32>
    %212 = arith.extui %211 : vector<2x1xi1> to vector<2x1xi32>
    %213 = arith.sitofp %212 : vector<2x1xi32> to vector<2x1xf32>
    %214 = vector.extract_strided_slice %7 {offsets = [1, 0], sizes = [1, 384], strides = [1, 1]} : vector<4x384xf32> to vector<1x384xf32>
    %215 = vector.broadcast %213 : vector<2x1xf32> to vector<2x384xf32>
    %216 = vector.broadcast %214 : vector<1x384xf32> to vector<2x384xf32>
    %217 = arith.mulf %215, %216 : vector<2x384xf32>
    %218 = arith.addf %209, %217 : vector<2x384xf32>
    %c2_i32_40 = arith.constant 2 : i32
    %219 = vector.broadcast %c2_i32_40 : i32 to vector<2x1xi32>
    %220 = arith.cmpi eq, %201, %219 : vector<2x1xi32>
    %221 = arith.extui %220 : vector<2x1xi1> to vector<2x1xi32>
    %222 = arith.sitofp %221 : vector<2x1xi32> to vector<2x1xf32>
    %223 = vector.extract_strided_slice %7 {offsets = [2, 0], sizes = [1, 384], strides = [1, 1]} : vector<4x384xf32> to vector<1x384xf32>
    %224 = vector.broadcast %222 : vector<2x1xf32> to vector<2x384xf32>
    %225 = vector.broadcast %223 : vector<1x384xf32> to vector<2x384xf32>
    %226 = arith.mulf %224, %225 : vector<2x384xf32>
    %227 = arith.addf %218, %226 : vector<2x384xf32>
    %c3_i32_41 = arith.constant 3 : i32
    %228 = vector.broadcast %c3_i32_41 : i32 to vector<2x1xi32>
    %229 = arith.cmpi eq, %201, %228 : vector<2x1xi32>
    %230 = arith.extui %229 : vector<2x1xi1> to vector<2x1xi32>
    %231 = arith.sitofp %230 : vector<2x1xi32> to vector<2x1xf32>
    %232 = vector.extract_strided_slice %7 {offsets = [3, 0], sizes = [1, 384], strides = [1, 1]} : vector<4x384xf32> to vector<1x384xf32>
    %233 = vector.broadcast %231 : vector<2x1xf32> to vector<2x384xf32>
    %234 = vector.broadcast %232 : vector<1x384xf32> to vector<2x384xf32>
    %235 = arith.mulf %233, %234 : vector<2x384xf32>
    %236 = arith.addf %227, %235 : vector<2x384xf32>
    %237 = vector.extract_strided_slice %19 {offsets = [0, 6], sizes = [2, 1], strides = [1, 1]} : vector<2x8xi32> to vector<2x1xi32>
    %c0_i32_42 = arith.constant 0 : i32
    %238 = vector.broadcast %c0_i32_42 : i32 to vector<2x1xi32>
    %239 = arith.cmpi eq, %237, %238 : vector<2x1xi32>
    %240 = arith.extui %239 : vector<2x1xi1> to vector<2x1xi32>
    %241 = arith.sitofp %240 : vector<2x1xi32> to vector<2x1xf32>
    %242 = vector.extract_strided_slice %7 {offsets = [0, 0], sizes = [1, 384], strides = [1, 1]} : vector<4x384xf32> to vector<1x384xf32>
    %243 = vector.broadcast %241 : vector<2x1xf32> to vector<2x384xf32>
    %244 = vector.broadcast %242 : vector<1x384xf32> to vector<2x384xf32>
    %245 = arith.mulf %243, %244 : vector<2x384xf32>
    %c1_i32_43 = arith.constant 1 : i32
    %246 = vector.broadcast %c1_i32_43 : i32 to vector<2x1xi32>
    %247 = arith.cmpi eq, %237, %246 : vector<2x1xi32>
    %248 = arith.extui %247 : vector<2x1xi1> to vector<2x1xi32>
    %249 = arith.sitofp %248 : vector<2x1xi32> to vector<2x1xf32>
    %250 = vector.extract_strided_slice %7 {offsets = [1, 0], sizes = [1, 384], strides = [1, 1]} : vector<4x384xf32> to vector<1x384xf32>
    %251 = vector.broadcast %249 : vector<2x1xf32> to vector<2x384xf32>
    %252 = vector.broadcast %250 : vector<1x384xf32> to vector<2x384xf32>
    %253 = arith.mulf %251, %252 : vector<2x384xf32>
    %254 = arith.addf %245, %253 : vector<2x384xf32>
    %c2_i32_44 = arith.constant 2 : i32
    %255 = vector.broadcast %c2_i32_44 : i32 to vector<2x1xi32>
    %256 = arith.cmpi eq, %237, %255 : vector<2x1xi32>
    %257 = arith.extui %256 : vector<2x1xi1> to vector<2x1xi32>
    %258 = arith.sitofp %257 : vector<2x1xi32> to vector<2x1xf32>
    %259 = vector.extract_strided_slice %7 {offsets = [2, 0], sizes = [1, 384], strides = [1, 1]} : vector<4x384xf32> to vector<1x384xf32>
    %260 = vector.broadcast %258 : vector<2x1xf32> to vector<2x384xf32>
    %261 = vector.broadcast %259 : vector<1x384xf32> to vector<2x384xf32>
    %262 = arith.mulf %260, %261 : vector<2x384xf32>
    %263 = arith.addf %254, %262 : vector<2x384xf32>
    %c3_i32_45 = arith.constant 3 : i32
    %264 = vector.broadcast %c3_i32_45 : i32 to vector<2x1xi32>
    %265 = arith.cmpi eq, %237, %264 : vector<2x1xi32>
    %266 = arith.extui %265 : vector<2x1xi1> to vector<2x1xi32>
    %267 = arith.sitofp %266 : vector<2x1xi32> to vector<2x1xf32>
    %268 = vector.extract_strided_slice %7 {offsets = [3, 0], sizes = [1, 384], strides = [1, 1]} : vector<4x384xf32> to vector<1x384xf32>
    %269 = vector.broadcast %267 : vector<2x1xf32> to vector<2x384xf32>
    %270 = vector.broadcast %268 : vector<1x384xf32> to vector<2x384xf32>
    %271 = arith.mulf %269, %270 : vector<2x384xf32>
    %272 = arith.addf %263, %271 : vector<2x384xf32>
    %273 = vector.extract_strided_slice %19 {offsets = [0, 7], sizes = [2, 1], strides = [1, 1]} : vector<2x8xi32> to vector<2x1xi32>
    %c0_i32_46 = arith.constant 0 : i32
    %274 = vector.broadcast %c0_i32_46 : i32 to vector<2x1xi32>
    %275 = arith.cmpi eq, %273, %274 : vector<2x1xi32>
    %276 = arith.extui %275 : vector<2x1xi1> to vector<2x1xi32>
    %277 = arith.sitofp %276 : vector<2x1xi32> to vector<2x1xf32>
    %278 = vector.extract_strided_slice %7 {offsets = [0, 0], sizes = [1, 384], strides = [1, 1]} : vector<4x384xf32> to vector<1x384xf32>
    %279 = vector.broadcast %277 : vector<2x1xf32> to vector<2x384xf32>
    %280 = vector.broadcast %278 : vector<1x384xf32> to vector<2x384xf32>
    %281 = arith.mulf %279, %280 : vector<2x384xf32>
    %c1_i32_47 = arith.constant 1 : i32
    %282 = vector.broadcast %c1_i32_47 : i32 to vector<2x1xi32>
    %283 = arith.cmpi eq, %273, %282 : vector<2x1xi32>
    %284 = arith.extui %283 : vector<2x1xi1> to vector<2x1xi32>
    %285 = arith.sitofp %284 : vector<2x1xi32> to vector<2x1xf32>
    %286 = vector.extract_strided_slice %7 {offsets = [1, 0], sizes = [1, 384], strides = [1, 1]} : vector<4x384xf32> to vector<1x384xf32>
    %287 = vector.broadcast %285 : vector<2x1xf32> to vector<2x384xf32>
    %288 = vector.broadcast %286 : vector<1x384xf32> to vector<2x384xf32>
    %289 = arith.mulf %287, %288 : vector<2x384xf32>
    %290 = arith.addf %281, %289 : vector<2x384xf32>
    %c2_i32_48 = arith.constant 2 : i32
    %291 = vector.broadcast %c2_i32_48 : i32 to vector<2x1xi32>
    %292 = arith.cmpi eq, %273, %291 : vector<2x1xi32>
    %293 = arith.extui %292 : vector<2x1xi1> to vector<2x1xi32>
    %294 = arith.sitofp %293 : vector<2x1xi32> to vector<2x1xf32>
    %295 = vector.extract_strided_slice %7 {offsets = [2, 0], sizes = [1, 384], strides = [1, 1]} : vector<4x384xf32> to vector<1x384xf32>
    %296 = vector.broadcast %294 : vector<2x1xf32> to vector<2x384xf32>
    %297 = vector.broadcast %295 : vector<1x384xf32> to vector<2x384xf32>
    %298 = arith.mulf %296, %297 : vector<2x384xf32>
    %299 = arith.addf %290, %298 : vector<2x384xf32>
    %c3_i32_49 = arith.constant 3 : i32
    %300 = vector.broadcast %c3_i32_49 : i32 to vector<2x1xi32>
    %301 = arith.cmpi eq, %273, %300 : vector<2x1xi32>
    %302 = arith.extui %301 : vector<2x1xi1> to vector<2x1xi32>
    %303 = arith.sitofp %302 : vector<2x1xi32> to vector<2x1xf32>
    %304 = vector.extract_strided_slice %7 {offsets = [3, 0], sizes = [1, 384], strides = [1, 1]} : vector<4x384xf32> to vector<1x384xf32>
    %305 = vector.broadcast %303 : vector<2x1xf32> to vector<2x384xf32>
    %306 = vector.broadcast %304 : vector<1x384xf32> to vector<2x384xf32>
    %307 = arith.mulf %305, %306 : vector<2x384xf32>
    %308 = arith.addf %299, %307 : vector<2x384xf32>
    %cst_50 = arith.constant 0.000000e+00 : f32
    %309 = vector.broadcast %cst_50 : f32 to vector<2x128xf32>
    %310 = arith.truncf %309 : vector<2x128xf32> to vector<2x128xbf16>
    %cst_51 = arith.constant dense<0.000000e+00> : vector<2x384xf32>
    %311 = tpu.matmul %310, %14, %cst_51 {dimension_numbers = #tpu.dot_dimension_numbers<[1], [0], [0], [1], [0, 0, 1, 1], [], []>} : vector<2x128xbf16>, vector<128x384xbf16>, vector<2x384xf32> -> vector<2x384xf32>
    %312 = vector.broadcast %17 : vector<1x384xf32> to vector<2x384xf32>
    %313 = arith.addf %311, %312 : vector<2x384xf32>
    %314 = vector.extract_strided_slice %56 {offsets = [0, 0], sizes = [2, 128], strides = [1, 1]} : vector<2x384xf32> to vector<2x128xf32>
    %315 = vector.extract_strided_slice %313 {offsets = [0, 0], sizes = [2, 128], strides = [1, 1]} : vector<2x384xf32> to vector<2x128xf32>
    %316 = arith.addf %314, %315 : vector<2x128xf32>
    %317 = arith.negf %316 : vector<2x128xf32>
    %318 = math.exp %317 : vector<2x128xf32>
    %cst_52 = arith.constant 1.000000e+00 : f32
    %319 = vector.broadcast %cst_52 : f32 to vector<2x128xf32>
    %320 = arith.addf %319, %318 : vector<2x128xf32>
    %321 = arith.divf %319, %320 : vector<2x128xf32>
    %322 = vector.extract_strided_slice %56 {offsets = [0, 128], sizes = [2, 128], strides = [1, 1]} : vector<2x384xf32> to vector<2x128xf32>
    %323 = vector.extract_strided_slice %313 {offsets = [0, 128], sizes = [2, 128], strides = [1, 1]} : vector<2x384xf32> to vector<2x128xf32>
    %324 = arith.addf %322, %323 : vector<2x128xf32>
    %325 = arith.negf %324 : vector<2x128xf32>
    %326 = math.exp %325 : vector<2x128xf32>
    %cst_53 = arith.constant 1.000000e+00 : f32
    %327 = vector.broadcast %cst_53 : f32 to vector<2x128xf32>
    %328 = arith.addf %327, %326 : vector<2x128xf32>
    %329 = arith.divf %327, %328 : vector<2x128xf32>
    %330 = vector.extract_strided_slice %56 {offsets = [0, 256], sizes = [2, 128], strides = [1, 1]} : vector<2x384xf32> to vector<2x128xf32>
    %331 = vector.extract_strided_slice %313 {offsets = [0, 256], sizes = [2, 128], strides = [1, 1]} : vector<2x384xf32> to vector<2x128xf32>
    %332 = arith.mulf %321, %331 : vector<2x128xf32>
    %333 = arith.addf %330, %332 : vector<2x128xf32>
    %334 = math.tanh %333 : vector<2x128xf32>
    %cst_54 = arith.constant 1.000000e+00 : f32
    %335 = vector.broadcast %cst_54 : f32 to vector<2x128xf32>
    %336 = arith.subf %335, %329 : vector<2x128xf32>
    %337 = arith.mulf %336, %334 : vector<2x128xf32>
    %338 = arith.mulf %329, %309 : vector<2x128xf32>
    %339 = arith.addf %337, %338 : vector<2x128xf32>
    %340 = arith.truncf %339 : vector<2x128xf32> to vector<2x128xbf16>
    %cst_55 = arith.constant dense<0.000000e+00> : vector<2x384xf32>
    %341 = tpu.matmul %340, %14, %cst_55 {dimension_numbers = #tpu.dot_dimension_numbers<[1], [0], [0], [1], [0, 0, 1, 1], [], []>} : vector<2x128xbf16>, vector<128x384xbf16>, vector<2x384xf32> -> vector<2x384xf32>
    %342 = vector.broadcast %17 : vector<1x384xf32> to vector<2x384xf32>
    %343 = arith.addf %341, %342 : vector<2x384xf32>
    %344 = vector.extract_strided_slice %92 {offsets = [0, 0], sizes = [2, 128], strides = [1, 1]} : vector<2x384xf32> to vector<2x128xf32>
    %345 = vector.extract_strided_slice %343 {offsets = [0, 0], sizes = [2, 128], strides = [1, 1]} : vector<2x384xf32> to vector<2x128xf32>
    %346 = arith.addf %344, %345 : vector<2x128xf32>
    %347 = arith.negf %346 : vector<2x128xf32>
    %348 = math.exp %347 : vector<2x128xf32>
    %cst_56 = arith.constant 1.000000e+00 : f32
    %349 = vector.broadcast %cst_56 : f32 to vector<2x128xf32>
    %350 = arith.addf %349, %348 : vector<2x128xf32>
    %351 = arith.divf %349, %350 : vector<2x128xf32>
    %352 = vector.extract_strided_slice %92 {offsets = [0, 128], sizes = [2, 128], strides = [1, 1]} : vector<2x384xf32> to vector<2x128xf32>
    %353 = vector.extract_strided_slice %343 {offsets = [0, 128], sizes = [2, 128], strides = [1, 1]} : vector<2x384xf32> to vector<2x128xf32>
    %354 = arith.addf %352, %353 : vector<2x128xf32>
    %355 = arith.negf %354 : vector<2x128xf32>
    %356 = math.exp %355 : vector<2x128xf32>
    %cst_57 = arith.constant 1.000000e+00 : f32
    %357 = vector.broadcast %cst_57 : f32 to vector<2x128xf32>
    %358 = arith.addf %357, %356 : vector<2x128xf32>
    %359 = arith.divf %357, %358 : vector<2x128xf32>
    %360 = vector.extract_strided_slice %92 {offsets = [0, 256], sizes = [2, 128], strides = [1, 1]} : vector<2x384xf32> to vector<2x128xf32>
    %361 = vector.extract_strided_slice %343 {offsets = [0, 256], sizes = [2, 128], strides = [1, 1]} : vector<2x384xf32> to vector<2x128xf32>
    %362 = arith.mulf %351, %361 : vector<2x128xf32>
    %363 = arith.addf %360, %362 : vector<2x128xf32>
    %364 = math.tanh %363 : vector<2x128xf32>
    %cst_58 = arith.constant 1.000000e+00 : f32
    %365 = vector.broadcast %cst_58 : f32 to vector<2x128xf32>
    %366 = arith.subf %365, %359 : vector<2x128xf32>
    %367 = arith.mulf %366, %364 : vector<2x128xf32>
    %368 = arith.mulf %359, %339 : vector<2x128xf32>
    %369 = arith.addf %367, %368 : vector<2x128xf32>
    %370 = arith.truncf %369 : vector<2x128xf32> to vector<2x128xbf16>
    %cst_59 = arith.constant dense<0.000000e+00> : vector<2x384xf32>
    %371 = tpu.matmul %370, %14, %cst_59 {dimension_numbers = #tpu.dot_dimension_numbers<[1], [0], [0], [1], [0, 0, 1, 1], [], []>} : vector<2x128xbf16>, vector<128x384xbf16>, vector<2x384xf32> -> vector<2x384xf32>
    %372 = vector.broadcast %17 : vector<1x384xf32> to vector<2x384xf32>
    %373 = arith.addf %371, %372 : vector<2x384xf32>
    %374 = vector.extract_strided_slice %128 {offsets = [0, 0], sizes = [2, 128], strides = [1, 1]} : vector<2x384xf32> to vector<2x128xf32>
    %375 = vector.extract_strided_slice %373 {offsets = [0, 0], sizes = [2, 128], strides = [1, 1]} : vector<2x384xf32> to vector<2x128xf32>
    %376 = arith.addf %374, %375 : vector<2x128xf32>
    %377 = arith.negf %376 : vector<2x128xf32>
    %378 = math.exp %377 : vector<2x128xf32>
    %cst_60 = arith.constant 1.000000e+00 : f32
    %379 = vector.broadcast %cst_60 : f32 to vector<2x128xf32>
    %380 = arith.addf %379, %378 : vector<2x128xf32>
    %381 = arith.divf %379, %380 : vector<2x128xf32>
    %382 = vector.extract_strided_slice %128 {offsets = [0, 128], sizes = [2, 128], strides = [1, 1]} : vector<2x384xf32> to vector<2x128xf32>
    %383 = vector.extract_strided_slice %373 {offsets = [0, 128], sizes = [2, 128], strides = [1, 1]} : vector<2x384xf32> to vector<2x128xf32>
    %384 = arith.addf %382, %383 : vector<2x128xf32>
    %385 = arith.negf %384 : vector<2x128xf32>
    %386 = math.exp %385 : vector<2x128xf32>
    %cst_61 = arith.constant 1.000000e+00 : f32
    %387 = vector.broadcast %cst_61 : f32 to vector<2x128xf32>
    %388 = arith.addf %387, %386 : vector<2x128xf32>
    %389 = arith.divf %387, %388 : vector<2x128xf32>
    %390 = vector.extract_strided_slice %128 {offsets = [0, 256], sizes = [2, 128], strides = [1, 1]} : vector<2x384xf32> to vector<2x128xf32>
    %391 = vector.extract_strided_slice %373 {offsets = [0, 256], sizes = [2, 128], strides = [1, 1]} : vector<2x384xf32> to vector<2x128xf32>
    %392 = arith.mulf %381, %391 : vector<2x128xf32>
    %393 = arith.addf %390, %392 : vector<2x128xf32>
    %394 = math.tanh %393 : vector<2x128xf32>
    %cst_62 = arith.constant 1.000000e+00 : f32
    %395 = vector.broadcast %cst_62 : f32 to vector<2x128xf32>
    %396 = arith.subf %395, %389 : vector<2x128xf32>
    %397 = arith.mulf %396, %394 : vector<2x128xf32>
    %398 = arith.mulf %389, %369 : vector<2x128xf32>
    %399 = arith.addf %397, %398 : vector<2x128xf32>
    %400 = arith.truncf %399 : vector<2x128xf32> to vector<2x128xbf16>
    %cst_63 = arith.constant dense<0.000000e+00> : vector<2x384xf32>
    %401 = tpu.matmul %400, %14, %cst_63 {dimension_numbers = #tpu.dot_dimension_numbers<[1], [0], [0], [1], [0, 0, 1, 1], [], []>} : vector<2x128xbf16>, vector<128x384xbf16>, vector<2x384xf32> -> vector<2x384xf32>
    %402 = vector.broadcast %17 : vector<1x384xf32> to vector<2x384xf32>
    %403 = arith.addf %401, %402 : vector<2x384xf32>
    %404 = vector.extract_strided_slice %164 {offsets = [0, 0], sizes = [2, 128], strides = [1, 1]} : vector<2x384xf32> to vector<2x128xf32>
    %405 = vector.extract_strided_slice %403 {offsets = [0, 0], sizes = [2, 128], strides = [1, 1]} : vector<2x384xf32> to vector<2x128xf32>
    %406 = arith.addf %404, %405 : vector<2x128xf32>
    %407 = arith.negf %406 : vector<2x128xf32>
    %408 = math.exp %407 : vector<2x128xf32>
    %cst_64 = arith.constant 1.000000e+00 : f32
    %409 = vector.broadcast %cst_64 : f32 to vector<2x128xf32>
    %410 = arith.addf %409, %408 : vector<2x128xf32>
    %411 = arith.divf %409, %410 : vector<2x128xf32>
    %412 = vector.extract_strided_slice %164 {offsets = [0, 128], sizes = [2, 128], strides = [1, 1]} : vector<2x384xf32> to vector<2x128xf32>
    %413 = vector.extract_strided_slice %403 {offsets = [0, 128], sizes = [2, 128], strides = [1, 1]} : vector<2x384xf32> to vector<2x128xf32>
    %414 = arith.addf %412, %413 : vector<2x128xf32>
    %415 = arith.negf %414 : vector<2x128xf32>
    %416 = math.exp %415 : vector<2x128xf32>
    %cst_65 = arith.constant 1.000000e+00 : f32
    %417 = vector.broadcast %cst_65 : f32 to vector<2x128xf32>
    %418 = arith.addf %417, %416 : vector<2x128xf32>
    %419 = arith.divf %417, %418 : vector<2x128xf32>
    %420 = vector.extract_strided_slice %164 {offsets = [0, 256], sizes = [2, 128], strides = [1, 1]} : vector<2x384xf32> to vector<2x128xf32>
    %421 = vector.extract_strided_slice %403 {offsets = [0, 256], sizes = [2, 128], strides = [1, 1]} : vector<2x384xf32> to vector<2x128xf32>
    %422 = arith.mulf %411, %421 : vector<2x128xf32>
    %423 = arith.addf %420, %422 : vector<2x128xf32>
    %424 = math.tanh %423 : vector<2x128xf32>
    %cst_66 = arith.constant 1.000000e+00 : f32
    %425 = vector.broadcast %cst_66 : f32 to vector<2x128xf32>
    %426 = arith.subf %425, %419 : vector<2x128xf32>
    %427 = arith.mulf %426, %424 : vector<2x128xf32>
    %428 = arith.mulf %419, %399 : vector<2x128xf32>
    %429 = arith.addf %427, %428 : vector<2x128xf32>
    %430 = arith.truncf %429 : vector<2x128xf32> to vector<2x128xbf16>
    %cst_67 = arith.constant dense<0.000000e+00> : vector<2x384xf32>
    %431 = tpu.matmul %430, %14, %cst_67 {dimension_numbers = #tpu.dot_dimension_numbers<[1], [0], [0], [1], [0, 0, 1, 1], [], []>} : vector<2x128xbf16>, vector<128x384xbf16>, vector<2x384xf32> -> vector<2x384xf32>
    %432 = vector.broadcast %17 : vector<1x384xf32> to vector<2x384xf32>
    %433 = arith.addf %431, %432 : vector<2x384xf32>
    %434 = vector.extract_strided_slice %200 {offsets = [0, 0], sizes = [2, 128], strides = [1, 1]} : vector<2x384xf32> to vector<2x128xf32>
    %435 = vector.extract_strided_slice %433 {offsets = [0, 0], sizes = [2, 128], strides = [1, 1]} : vector<2x384xf32> to vector<2x128xf32>
    %436 = arith.addf %434, %435 : vector<2x128xf32>
    %437 = arith.negf %436 : vector<2x128xf32>
    %438 = math.exp %437 : vector<2x128xf32>
    %cst_68 = arith.constant 1.000000e+00 : f32
    %439 = vector.broadcast %cst_68 : f32 to vector<2x128xf32>
    %440 = arith.addf %439, %438 : vector<2x128xf32>
    %441 = arith.divf %439, %440 : vector<2x128xf32>
    %442 = vector.extract_strided_slice %200 {offsets = [0, 128], sizes = [2, 128], strides = [1, 1]} : vector<2x384xf32> to vector<2x128xf32>
    %443 = vector.extract_strided_slice %433 {offsets = [0, 128], sizes = [2, 128], strides = [1, 1]} : vector<2x384xf32> to vector<2x128xf32>
    %444 = arith.addf %442, %443 : vector<2x128xf32>
    %445 = arith.negf %444 : vector<2x128xf32>
    %446 = math.exp %445 : vector<2x128xf32>
    %cst_69 = arith.constant 1.000000e+00 : f32
    %447 = vector.broadcast %cst_69 : f32 to vector<2x128xf32>
    %448 = arith.addf %447, %446 : vector<2x128xf32>
    %449 = arith.divf %447, %448 : vector<2x128xf32>
    %450 = vector.extract_strided_slice %200 {offsets = [0, 256], sizes = [2, 128], strides = [1, 1]} : vector<2x384xf32> to vector<2x128xf32>
    %451 = vector.extract_strided_slice %433 {offsets = [0, 256], sizes = [2, 128], strides = [1, 1]} : vector<2x384xf32> to vector<2x128xf32>
    %452 = arith.mulf %441, %451 : vector<2x128xf32>
    %453 = arith.addf %450, %452 : vector<2x128xf32>
    %454 = math.tanh %453 : vector<2x128xf32>
    %cst_70 = arith.constant 1.000000e+00 : f32
    %455 = vector.broadcast %cst_70 : f32 to vector<2x128xf32>
    %456 = arith.subf %455, %449 : vector<2x128xf32>
    %457 = arith.mulf %456, %454 : vector<2x128xf32>
    %458 = arith.mulf %449, %429 : vector<2x128xf32>
    %459 = arith.addf %457, %458 : vector<2x128xf32>
    %460 = arith.truncf %459 : vector<2x128xf32> to vector<2x128xbf16>
    %cst_71 = arith.constant dense<0.000000e+00> : vector<2x384xf32>
    %461 = tpu.matmul %460, %14, %cst_71 {dimension_numbers = #tpu.dot_dimension_numbers<[1], [0], [0], [1], [0, 0, 1, 1], [], []>} : vector<2x128xbf16>, vector<128x384xbf16>, vector<2x384xf32> -> vector<2x384xf32>
    %462 = vector.broadcast %17 : vector<1x384xf32> to vector<2x384xf32>
    %463 = arith.addf %461, %462 : vector<2x384xf32>
    %464 = vector.extract_strided_slice %236 {offsets = [0, 0], sizes = [2, 128], strides = [1, 1]} : vector<2x384xf32> to vector<2x128xf32>
    %465 = vector.extract_strided_slice %463 {offsets = [0, 0], sizes = [2, 128], strides = [1, 1]} : vector<2x384xf32> to vector<2x128xf32>
    %466 = arith.addf %464, %465 : vector<2x128xf32>
    %467 = arith.negf %466 : vector<2x128xf32>
    %468 = math.exp %467 : vector<2x128xf32>
    %cst_72 = arith.constant 1.000000e+00 : f32
    %469 = vector.broadcast %cst_72 : f32 to vector<2x128xf32>
    %470 = arith.addf %469, %468 : vector<2x128xf32>
    %471 = arith.divf %469, %470 : vector<2x128xf32>
    %472 = vector.extract_strided_slice %236 {offsets = [0, 128], sizes = [2, 128], strides = [1, 1]} : vector<2x384xf32> to vector<2x128xf32>
    %473 = vector.extract_strided_slice %463 {offsets = [0, 128], sizes = [2, 128], strides = [1, 1]} : vector<2x384xf32> to vector<2x128xf32>
    %474 = arith.addf %472, %473 : vector<2x128xf32>
    %475 = arith.negf %474 : vector<2x128xf32>
    %476 = math.exp %475 : vector<2x128xf32>
    %cst_73 = arith.constant 1.000000e+00 : f32
    %477 = vector.broadcast %cst_73 : f32 to vector<2x128xf32>
    %478 = arith.addf %477, %476 : vector<2x128xf32>
    %479 = arith.divf %477, %478 : vector<2x128xf32>
    %480 = vector.extract_strided_slice %236 {offsets = [0, 256], sizes = [2, 128], strides = [1, 1]} : vector<2x384xf32> to vector<2x128xf32>
    %481 = vector.extract_strided_slice %463 {offsets = [0, 256], sizes = [2, 128], strides = [1, 1]} : vector<2x384xf32> to vector<2x128xf32>
    %482 = arith.mulf %471, %481 : vector<2x128xf32>
    %483 = arith.addf %480, %482 : vector<2x128xf32>
    %484 = math.tanh %483 : vector<2x128xf32>
    %cst_74 = arith.constant 1.000000e+00 : f32
    %485 = vector.broadcast %cst_74 : f32 to vector<2x128xf32>
    %486 = arith.subf %485, %479 : vector<2x128xf32>
    %487 = arith.mulf %486, %484 : vector<2x128xf32>
    %488 = arith.mulf %479, %459 : vector<2x128xf32>
    %489 = arith.addf %487, %488 : vector<2x128xf32>
    %490 = arith.truncf %489 : vector<2x128xf32> to vector<2x128xbf16>
    %cst_75 = arith.constant dense<0.000000e+00> : vector<2x384xf32>
    %491 = tpu.matmul %490, %14, %cst_75 {dimension_numbers = #tpu.dot_dimension_numbers<[1], [0], [0], [1], [0, 0, 1, 1], [], []>} : vector<2x128xbf16>, vector<128x384xbf16>, vector<2x384xf32> -> vector<2x384xf32>
    %492 = vector.broadcast %17 : vector<1x384xf32> to vector<2x384xf32>
    %493 = arith.addf %491, %492 : vector<2x384xf32>
    %494 = vector.extract_strided_slice %272 {offsets = [0, 0], sizes = [2, 128], strides = [1, 1]} : vector<2x384xf32> to vector<2x128xf32>
    %495 = vector.extract_strided_slice %493 {offsets = [0, 0], sizes = [2, 128], strides = [1, 1]} : vector<2x384xf32> to vector<2x128xf32>
    %496 = arith.addf %494, %495 : vector<2x128xf32>
    %497 = arith.negf %496 : vector<2x128xf32>
    %498 = math.exp %497 : vector<2x128xf32>
    %cst_76 = arith.constant 1.000000e+00 : f32
    %499 = vector.broadcast %cst_76 : f32 to vector<2x128xf32>
    %500 = arith.addf %499, %498 : vector<2x128xf32>
    %501 = arith.divf %499, %500 : vector<2x128xf32>
    %502 = vector.extract_strided_slice %272 {offsets = [0, 128], sizes = [2, 128], strides = [1, 1]} : vector<2x384xf32> to vector<2x128xf32>
    %503 = vector.extract_strided_slice %493 {offsets = [0, 128], sizes = [2, 128], strides = [1, 1]} : vector<2x384xf32> to vector<2x128xf32>
    %504 = arith.addf %502, %503 : vector<2x128xf32>
    %505 = arith.negf %504 : vector<2x128xf32>
    %506 = math.exp %505 : vector<2x128xf32>
    %cst_77 = arith.constant 1.000000e+00 : f32
    %507 = vector.broadcast %cst_77 : f32 to vector<2x128xf32>
    %508 = arith.addf %507, %506 : vector<2x128xf32>
    %509 = arith.divf %507, %508 : vector<2x128xf32>
    %510 = vector.extract_strided_slice %272 {offsets = [0, 256], sizes = [2, 128], strides = [1, 1]} : vector<2x384xf32> to vector<2x128xf32>
    %511 = vector.extract_strided_slice %493 {offsets = [0, 256], sizes = [2, 128], strides = [1, 1]} : vector<2x384xf32> to vector<2x128xf32>
    %512 = arith.mulf %501, %511 : vector<2x128xf32>
    %513 = arith.addf %510, %512 : vector<2x128xf32>
    %514 = math.tanh %513 : vector<2x128xf32>
    %cst_78 = arith.constant 1.000000e+00 : f32
    %515 = vector.broadcast %cst_78 : f32 to vector<2x128xf32>
    %516 = arith.subf %515, %509 : vector<2x128xf32>
    %517 = arith.mulf %516, %514 : vector<2x128xf32>
    %518 = arith.mulf %509, %489 : vector<2x128xf32>
    %519 = arith.addf %517, %518 : vector<2x128xf32>
    %520 = arith.truncf %519 : vector<2x128xf32> to vector<2x128xbf16>
    %cst_79 = arith.constant dense<0.000000e+00> : vector<2x384xf32>
    %521 = tpu.matmul %520, %14, %cst_79 {dimension_numbers = #tpu.dot_dimension_numbers<[1], [0], [0], [1], [0, 0, 1, 1], [], []>} : vector<2x128xbf16>, vector<128x384xbf16>, vector<2x384xf32> -> vector<2x384xf32>
    %522 = vector.broadcast %17 : vector<1x384xf32> to vector<2x384xf32>
    %523 = arith.addf %521, %522 : vector<2x384xf32>
    %524 = vector.extract_strided_slice %308 {offsets = [0, 0], sizes = [2, 128], strides = [1, 1]} : vector<2x384xf32> to vector<2x128xf32>
    %525 = vector.extract_strided_slice %523 {offsets = [0, 0], sizes = [2, 128], strides = [1, 1]} : vector<2x384xf32> to vector<2x128xf32>
    %526 = arith.addf %524, %525 : vector<2x128xf32>
    %527 = arith.negf %526 : vector<2x128xf32>
    %528 = math.exp %527 : vector<2x128xf32>
    %cst_80 = arith.constant 1.000000e+00 : f32
    %529 = vector.broadcast %cst_80 : f32 to vector<2x128xf32>
    %530 = arith.addf %529, %528 : vector<2x128xf32>
    %531 = arith.divf %529, %530 : vector<2x128xf32>
    %532 = vector.extract_strided_slice %308 {offsets = [0, 128], sizes = [2, 128], strides = [1, 1]} : vector<2x384xf32> to vector<2x128xf32>
    %533 = vector.extract_strided_slice %523 {offsets = [0, 128], sizes = [2, 128], strides = [1, 1]} : vector<2x384xf32> to vector<2x128xf32>
    %534 = arith.addf %532, %533 : vector<2x128xf32>
    %535 = arith.negf %534 : vector<2x128xf32>
    %536 = math.exp %535 : vector<2x128xf32>
    %cst_81 = arith.constant 1.000000e+00 : f32
    %537 = vector.broadcast %cst_81 : f32 to vector<2x128xf32>
    %538 = arith.addf %537, %536 : vector<2x128xf32>
    %539 = arith.divf %537, %538 : vector<2x128xf32>
    %540 = vector.extract_strided_slice %308 {offsets = [0, 256], sizes = [2, 128], strides = [1, 1]} : vector<2x384xf32> to vector<2x128xf32>
    %541 = vector.extract_strided_slice %523 {offsets = [0, 256], sizes = [2, 128], strides = [1, 1]} : vector<2x384xf32> to vector<2x128xf32>
    %542 = arith.mulf %531, %541 : vector<2x128xf32>
    %543 = arith.addf %540, %542 : vector<2x128xf32>
    %544 = math.tanh %543 : vector<2x128xf32>
    %cst_82 = arith.constant 1.000000e+00 : f32
    %545 = vector.broadcast %cst_82 : f32 to vector<2x128xf32>
    %546 = arith.subf %545, %539 : vector<2x128xf32>
    %547 = arith.mulf %546, %544 : vector<2x128xf32>
    %548 = arith.mulf %539, %519 : vector<2x128xf32>
    %549 = arith.addf %547, %548 : vector<2x128xf32>
    %c0_83 = arith.constant 0 : index
    %c0_84 = arith.constant 0 : index
    %550 = vector.load %arg9[%c0_83, %c0_84] : memref<128x384xf32, #tpu.memory_space<vmem>>, vector<128x384xf32>
    %551 = arith.truncf %549 : vector<2x128xf32> to vector<2x128xbf16>
    %552 = arith.truncf %550 : vector<128x384xf32> to vector<128x384xbf16>
    %cst_85 = arith.constant dense<0.000000e+00> : vector<2x384xf32>
    %553 = tpu.matmul %551, %552, %cst_85 {dimension_numbers = #tpu.dot_dimension_numbers<[1], [0], [0], [1], [0, 0, 1, 1], [], []>} : vector<2x128xbf16>, vector<128x384xbf16>, vector<2x384xf32> -> vector<2x384xf32>
    %c0_86 = arith.constant 0 : index
    %c0_87 = arith.constant 0 : index
    %554 = vector.load %arg11[%c0_86, %c0_87] : memref<1x384xf32, #tpu.memory_space<vmem>>, vector<1x384xf32>
    %555 = vector.broadcast %554 : vector<1x384xf32> to vector<2x384xf32>
    %556 = arith.addf %553, %555 : vector<2x384xf32>
    %557 = vector.extract_strided_slice %20 {offsets = [0, 0], sizes = [2, 1], strides = [1, 1]} : vector<2x8xi32> to vector<2x1xi32>
    %c0_i32_88 = arith.constant 0 : i32
    %558 = vector.broadcast %c0_i32_88 : i32 to vector<2x1xi32>
    %559 = arith.cmpi eq, %557, %558 : vector<2x1xi32>
    %560 = arith.extui %559 : vector<2x1xi1> to vector<2x1xi32>
    %561 = arith.sitofp %560 : vector<2x1xi32> to vector<2x1xf32>
    %562 = vector.extract_strided_slice %12 {offsets = [0, 0], sizes = [1, 384], strides = [1, 1]} : vector<4x384xf32> to vector<1x384xf32>
    %563 = vector.broadcast %561 : vector<2x1xf32> to vector<2x384xf32>
    %564 = vector.broadcast %562 : vector<1x384xf32> to vector<2x384xf32>
    %565 = arith.mulf %563, %564 : vector<2x384xf32>
    %c1_i32_89 = arith.constant 1 : i32
    %566 = vector.broadcast %c1_i32_89 : i32 to vector<2x1xi32>
    %567 = arith.cmpi eq, %557, %566 : vector<2x1xi32>
    %568 = arith.extui %567 : vector<2x1xi1> to vector<2x1xi32>
    %569 = arith.sitofp %568 : vector<2x1xi32> to vector<2x1xf32>
    %570 = vector.extract_strided_slice %12 {offsets = [1, 0], sizes = [1, 384], strides = [1, 1]} : vector<4x384xf32> to vector<1x384xf32>
    %571 = vector.broadcast %569 : vector<2x1xf32> to vector<2x384xf32>
    %572 = vector.broadcast %570 : vector<1x384xf32> to vector<2x384xf32>
    %573 = arith.mulf %571, %572 : vector<2x384xf32>
    %574 = arith.addf %565, %573 : vector<2x384xf32>
    %c2_i32_90 = arith.constant 2 : i32
    %575 = vector.broadcast %c2_i32_90 : i32 to vector<2x1xi32>
    %576 = arith.cmpi eq, %557, %575 : vector<2x1xi32>
    %577 = arith.extui %576 : vector<2x1xi1> to vector<2x1xi32>
    %578 = arith.sitofp %577 : vector<2x1xi32> to vector<2x1xf32>
    %579 = vector.extract_strided_slice %12 {offsets = [2, 0], sizes = [1, 384], strides = [1, 1]} : vector<4x384xf32> to vector<1x384xf32>
    %580 = vector.broadcast %578 : vector<2x1xf32> to vector<2x384xf32>
    %581 = vector.broadcast %579 : vector<1x384xf32> to vector<2x384xf32>
    %582 = arith.mulf %580, %581 : vector<2x384xf32>
    %583 = arith.addf %574, %582 : vector<2x384xf32>
    %c3_i32_91 = arith.constant 3 : i32
    %584 = vector.broadcast %c3_i32_91 : i32 to vector<2x1xi32>
    %585 = arith.cmpi eq, %557, %584 : vector<2x1xi32>
    %586 = arith.extui %585 : vector<2x1xi1> to vector<2x1xi32>
    %587 = arith.sitofp %586 : vector<2x1xi32> to vector<2x1xf32>
    %588 = vector.extract_strided_slice %12 {offsets = [3, 0], sizes = [1, 384], strides = [1, 1]} : vector<4x384xf32> to vector<1x384xf32>
    %589 = vector.broadcast %587 : vector<2x1xf32> to vector<2x384xf32>
    %590 = vector.broadcast %588 : vector<1x384xf32> to vector<2x384xf32>
    %591 = arith.mulf %589, %590 : vector<2x384xf32>
    %592 = arith.addf %583, %591 : vector<2x384xf32>
    %593 = arith.addf %592, %556 : vector<2x384xf32>
    %594 = vector.extract_strided_slice %20 {offsets = [0, 1], sizes = [2, 1], strides = [1, 1]} : vector<2x8xi32> to vector<2x1xi32>
    %c0_i32_92 = arith.constant 0 : i32
    %595 = vector.broadcast %c0_i32_92 : i32 to vector<2x1xi32>
    %596 = arith.cmpi eq, %594, %595 : vector<2x1xi32>
    %597 = arith.extui %596 : vector<2x1xi1> to vector<2x1xi32>
    %598 = arith.sitofp %597 : vector<2x1xi32> to vector<2x1xf32>
    %599 = vector.extract_strided_slice %12 {offsets = [0, 0], sizes = [1, 384], strides = [1, 1]} : vector<4x384xf32> to vector<1x384xf32>
    %600 = vector.broadcast %598 : vector<2x1xf32> to vector<2x384xf32>
    %601 = vector.broadcast %599 : vector<1x384xf32> to vector<2x384xf32>
    %602 = arith.mulf %600, %601 : vector<2x384xf32>
    %c1_i32_93 = arith.constant 1 : i32
    %603 = vector.broadcast %c1_i32_93 : i32 to vector<2x1xi32>
    %604 = arith.cmpi eq, %594, %603 : vector<2x1xi32>
    %605 = arith.extui %604 : vector<2x1xi1> to vector<2x1xi32>
    %606 = arith.sitofp %605 : vector<2x1xi32> to vector<2x1xf32>
    %607 = vector.extract_strided_slice %12 {offsets = [1, 0], sizes = [1, 384], strides = [1, 1]} : vector<4x384xf32> to vector<1x384xf32>
    %608 = vector.broadcast %606 : vector<2x1xf32> to vector<2x384xf32>
    %609 = vector.broadcast %607 : vector<1x384xf32> to vector<2x384xf32>
    %610 = arith.mulf %608, %609 : vector<2x384xf32>
    %611 = arith.addf %602, %610 : vector<2x384xf32>
    %c2_i32_94 = arith.constant 2 : i32
    %612 = vector.broadcast %c2_i32_94 : i32 to vector<2x1xi32>
    %613 = arith.cmpi eq, %594, %612 : vector<2x1xi32>
    %614 = arith.extui %613 : vector<2x1xi1> to vector<2x1xi32>
    %615 = arith.sitofp %614 : vector<2x1xi32> to vector<2x1xf32>
    %616 = vector.extract_strided_slice %12 {offsets = [2, 0], sizes = [1, 384], strides = [1, 1]} : vector<4x384xf32> to vector<1x384xf32>
    %617 = vector.broadcast %615 : vector<2x1xf32> to vector<2x384xf32>
    %618 = vector.broadcast %616 : vector<1x384xf32> to vector<2x384xf32>
    %619 = arith.mulf %617, %618 : vector<2x384xf32>
    %620 = arith.addf %611, %619 : vector<2x384xf32>
    %c3_i32_95 = arith.constant 3 : i32
    %621 = vector.broadcast %c3_i32_95 : i32 to vector<2x1xi32>
    %622 = arith.cmpi eq, %594, %621 : vector<2x1xi32>
    %623 = arith.extui %622 : vector<2x1xi1> to vector<2x1xi32>
    %624 = arith.sitofp %623 : vector<2x1xi32> to vector<2x1xf32>
    %625 = vector.extract_strided_slice %12 {offsets = [3, 0], sizes = [1, 384], strides = [1, 1]} : vector<4x384xf32> to vector<1x384xf32>
    %626 = vector.broadcast %624 : vector<2x1xf32> to vector<2x384xf32>
    %627 = vector.broadcast %625 : vector<1x384xf32> to vector<2x384xf32>
    %628 = arith.mulf %626, %627 : vector<2x384xf32>
    %629 = arith.addf %620, %628 : vector<2x384xf32>
    %630 = arith.addf %629, %556 : vector<2x384xf32>
    %631 = vector.extract_strided_slice %20 {offsets = [0, 2], sizes = [2, 1], strides = [1, 1]} : vector<2x8xi32> to vector<2x1xi32>
    %c0_i32_96 = arith.constant 0 : i32
    %632 = vector.broadcast %c0_i32_96 : i32 to vector<2x1xi32>
    %633 = arith.cmpi eq, %631, %632 : vector<2x1xi32>
    %634 = arith.extui %633 : vector<2x1xi1> to vector<2x1xi32>
    %635 = arith.sitofp %634 : vector<2x1xi32> to vector<2x1xf32>
    %636 = vector.extract_strided_slice %12 {offsets = [0, 0], sizes = [1, 384], strides = [1, 1]} : vector<4x384xf32> to vector<1x384xf32>
    %637 = vector.broadcast %635 : vector<2x1xf32> to vector<2x384xf32>
    %638 = vector.broadcast %636 : vector<1x384xf32> to vector<2x384xf32>
    %639 = arith.mulf %637, %638 : vector<2x384xf32>
    %c1_i32_97 = arith.constant 1 : i32
    %640 = vector.broadcast %c1_i32_97 : i32 to vector<2x1xi32>
    %641 = arith.cmpi eq, %631, %640 : vector<2x1xi32>
    %642 = arith.extui %641 : vector<2x1xi1> to vector<2x1xi32>
    %643 = arith.sitofp %642 : vector<2x1xi32> to vector<2x1xf32>
    %644 = vector.extract_strided_slice %12 {offsets = [1, 0], sizes = [1, 384], strides = [1, 1]} : vector<4x384xf32> to vector<1x384xf32>
    %645 = vector.broadcast %643 : vector<2x1xf32> to vector<2x384xf32>
    %646 = vector.broadcast %644 : vector<1x384xf32> to vector<2x384xf32>
    %647 = arith.mulf %645, %646 : vector<2x384xf32>
    %648 = arith.addf %639, %647 : vector<2x384xf32>
    %c2_i32_98 = arith.constant 2 : i32
    %649 = vector.broadcast %c2_i32_98 : i32 to vector<2x1xi32>
    %650 = arith.cmpi eq, %631, %649 : vector<2x1xi32>
    %651 = arith.extui %650 : vector<2x1xi1> to vector<2x1xi32>
    %652 = arith.sitofp %651 : vector<2x1xi32> to vector<2x1xf32>
    %653 = vector.extract_strided_slice %12 {offsets = [2, 0], sizes = [1, 384], strides = [1, 1]} : vector<4x384xf32> to vector<1x384xf32>
    %654 = vector.broadcast %652 : vector<2x1xf32> to vector<2x384xf32>
    %655 = vector.broadcast %653 : vector<1x384xf32> to vector<2x384xf32>
    %656 = arith.mulf %654, %655 : vector<2x384xf32>
    %657 = arith.addf %648, %656 : vector<2x384xf32>
    %c3_i32_99 = arith.constant 3 : i32
    %658 = vector.broadcast %c3_i32_99 : i32 to vector<2x1xi32>
    %659 = arith.cmpi eq, %631, %658 : vector<2x1xi32>
    %660 = arith.extui %659 : vector<2x1xi1> to vector<2x1xi32>
    %661 = arith.sitofp %660 : vector<2x1xi32> to vector<2x1xf32>
    %662 = vector.extract_strided_slice %12 {offsets = [3, 0], sizes = [1, 384], strides = [1, 1]} : vector<4x384xf32> to vector<1x384xf32>
    %663 = vector.broadcast %661 : vector<2x1xf32> to vector<2x384xf32>
    %664 = vector.broadcast %662 : vector<1x384xf32> to vector<2x384xf32>
    %665 = arith.mulf %663, %664 : vector<2x384xf32>
    %666 = arith.addf %657, %665 : vector<2x384xf32>
    %667 = arith.addf %666, %556 : vector<2x384xf32>
    %668 = vector.extract_strided_slice %20 {offsets = [0, 3], sizes = [2, 1], strides = [1, 1]} : vector<2x8xi32> to vector<2x1xi32>
    %c0_i32_100 = arith.constant 0 : i32
    %669 = vector.broadcast %c0_i32_100 : i32 to vector<2x1xi32>
    %670 = arith.cmpi eq, %668, %669 : vector<2x1xi32>
    %671 = arith.extui %670 : vector<2x1xi1> to vector<2x1xi32>
    %672 = arith.sitofp %671 : vector<2x1xi32> to vector<2x1xf32>
    %673 = vector.extract_strided_slice %12 {offsets = [0, 0], sizes = [1, 384], strides = [1, 1]} : vector<4x384xf32> to vector<1x384xf32>
    %674 = vector.broadcast %672 : vector<2x1xf32> to vector<2x384xf32>
    %675 = vector.broadcast %673 : vector<1x384xf32> to vector<2x384xf32>
    %676 = arith.mulf %674, %675 : vector<2x384xf32>
    %c1_i32_101 = arith.constant 1 : i32
    %677 = vector.broadcast %c1_i32_101 : i32 to vector<2x1xi32>
    %678 = arith.cmpi eq, %668, %677 : vector<2x1xi32>
    %679 = arith.extui %678 : vector<2x1xi1> to vector<2x1xi32>
    %680 = arith.sitofp %679 : vector<2x1xi32> to vector<2x1xf32>
    %681 = vector.extract_strided_slice %12 {offsets = [1, 0], sizes = [1, 384], strides = [1, 1]} : vector<4x384xf32> to vector<1x384xf32>
    %682 = vector.broadcast %680 : vector<2x1xf32> to vector<2x384xf32>
    %683 = vector.broadcast %681 : vector<1x384xf32> to vector<2x384xf32>
    %684 = arith.mulf %682, %683 : vector<2x384xf32>
    %685 = arith.addf %676, %684 : vector<2x384xf32>
    %c2_i32_102 = arith.constant 2 : i32
    %686 = vector.broadcast %c2_i32_102 : i32 to vector<2x1xi32>
    %687 = arith.cmpi eq, %668, %686 : vector<2x1xi32>
    %688 = arith.extui %687 : vector<2x1xi1> to vector<2x1xi32>
    %689 = arith.sitofp %688 : vector<2x1xi32> to vector<2x1xf32>
    %690 = vector.extract_strided_slice %12 {offsets = [2, 0], sizes = [1, 384], strides = [1, 1]} : vector<4x384xf32> to vector<1x384xf32>
    %691 = vector.broadcast %689 : vector<2x1xf32> to vector<2x384xf32>
    %692 = vector.broadcast %690 : vector<1x384xf32> to vector<2x384xf32>
    %693 = arith.mulf %691, %692 : vector<2x384xf32>
    %694 = arith.addf %685, %693 : vector<2x384xf32>
    %c3_i32_103 = arith.constant 3 : i32
    %695 = vector.broadcast %c3_i32_103 : i32 to vector<2x1xi32>
    %696 = arith.cmpi eq, %668, %695 : vector<2x1xi32>
    %697 = arith.extui %696 : vector<2x1xi1> to vector<2x1xi32>
    %698 = arith.sitofp %697 : vector<2x1xi32> to vector<2x1xf32>
    %699 = vector.extract_strided_slice %12 {offsets = [3, 0], sizes = [1, 384], strides = [1, 1]} : vector<4x384xf32> to vector<1x384xf32>
    %700 = vector.broadcast %698 : vector<2x1xf32> to vector<2x384xf32>
    %701 = vector.broadcast %699 : vector<1x384xf32> to vector<2x384xf32>
    %702 = arith.mulf %700, %701 : vector<2x384xf32>
    %703 = arith.addf %694, %702 : vector<2x384xf32>
    %704 = arith.addf %703, %556 : vector<2x384xf32>
    %705 = vector.extract_strided_slice %20 {offsets = [0, 4], sizes = [2, 1], strides = [1, 1]} : vector<2x8xi32> to vector<2x1xi32>
    %c0_i32_104 = arith.constant 0 : i32
    %706 = vector.broadcast %c0_i32_104 : i32 to vector<2x1xi32>
    %707 = arith.cmpi eq, %705, %706 : vector<2x1xi32>
    %708 = arith.extui %707 : vector<2x1xi1> to vector<2x1xi32>
    %709 = arith.sitofp %708 : vector<2x1xi32> to vector<2x1xf32>
    %710 = vector.extract_strided_slice %12 {offsets = [0, 0], sizes = [1, 384], strides = [1, 1]} : vector<4x384xf32> to vector<1x384xf32>
    %711 = vector.broadcast %709 : vector<2x1xf32> to vector<2x384xf32>
    %712 = vector.broadcast %710 : vector<1x384xf32> to vector<2x384xf32>
    %713 = arith.mulf %711, %712 : vector<2x384xf32>
    %c1_i32_105 = arith.constant 1 : i32
    %714 = vector.broadcast %c1_i32_105 : i32 to vector<2x1xi32>
    %715 = arith.cmpi eq, %705, %714 : vector<2x1xi32>
    %716 = arith.extui %715 : vector<2x1xi1> to vector<2x1xi32>
    %717 = arith.sitofp %716 : vector<2x1xi32> to vector<2x1xf32>
    %718 = vector.extract_strided_slice %12 {offsets = [1, 0], sizes = [1, 384], strides = [1, 1]} : vector<4x384xf32> to vector<1x384xf32>
    %719 = vector.broadcast %717 : vector<2x1xf32> to vector<2x384xf32>
    %720 = vector.broadcast %718 : vector<1x384xf32> to vector<2x384xf32>
    %721 = arith.mulf %719, %720 : vector<2x384xf32>
    %722 = arith.addf %713, %721 : vector<2x384xf32>
    %c2_i32_106 = arith.constant 2 : i32
    %723 = vector.broadcast %c2_i32_106 : i32 to vector<2x1xi32>
    %724 = arith.cmpi eq, %705, %723 : vector<2x1xi32>
    %725 = arith.extui %724 : vector<2x1xi1> to vector<2x1xi32>
    %726 = arith.sitofp %725 : vector<2x1xi32> to vector<2x1xf32>
    %727 = vector.extract_strided_slice %12 {offsets = [2, 0], sizes = [1, 384], strides = [1, 1]} : vector<4x384xf32> to vector<1x384xf32>
    %728 = vector.broadcast %726 : vector<2x1xf32> to vector<2x384xf32>
    %729 = vector.broadcast %727 : vector<1x384xf32> to vector<2x384xf32>
    %730 = arith.mulf %728, %729 : vector<2x384xf32>
    %731 = arith.addf %722, %730 : vector<2x384xf32>
    %c3_i32_107 = arith.constant 3 : i32
    %732 = vector.broadcast %c3_i32_107 : i32 to vector<2x1xi32>
    %733 = arith.cmpi eq, %705, %732 : vector<2x1xi32>
    %734 = arith.extui %733 : vector<2x1xi1> to vector<2x1xi32>
    %735 = arith.sitofp %734 : vector<2x1xi32> to vector<2x1xf32>
    %736 = vector.extract_strided_slice %12 {offsets = [3, 0], sizes = [1, 384], strides = [1, 1]} : vector<4x384xf32> to vector<1x384xf32>
    %737 = vector.broadcast %735 : vector<2x1xf32> to vector<2x384xf32>
    %738 = vector.broadcast %736 : vector<1x384xf32> to vector<2x384xf32>
    %739 = arith.mulf %737, %738 : vector<2x384xf32>
    %740 = arith.addf %731, %739 : vector<2x384xf32>
    %741 = arith.addf %740, %556 : vector<2x384xf32>
    %742 = vector.extract_strided_slice %20 {offsets = [0, 5], sizes = [2, 1], strides = [1, 1]} : vector<2x8xi32> to vector<2x1xi32>
    %c0_i32_108 = arith.constant 0 : i32
    %743 = vector.broadcast %c0_i32_108 : i32 to vector<2x1xi32>
    %744 = arith.cmpi eq, %742, %743 : vector<2x1xi32>
    %745 = arith.extui %744 : vector<2x1xi1> to vector<2x1xi32>
    %746 = arith.sitofp %745 : vector<2x1xi32> to vector<2x1xf32>
    %747 = vector.extract_strided_slice %12 {offsets = [0, 0], sizes = [1, 384], strides = [1, 1]} : vector<4x384xf32> to vector<1x384xf32>
    %748 = vector.broadcast %746 : vector<2x1xf32> to vector<2x384xf32>
    %749 = vector.broadcast %747 : vector<1x384xf32> to vector<2x384xf32>
    %750 = arith.mulf %748, %749 : vector<2x384xf32>
    %c1_i32_109 = arith.constant 1 : i32
    %751 = vector.broadcast %c1_i32_109 : i32 to vector<2x1xi32>
    %752 = arith.cmpi eq, %742, %751 : vector<2x1xi32>
    %753 = arith.extui %752 : vector<2x1xi1> to vector<2x1xi32>
    %754 = arith.sitofp %753 : vector<2x1xi32> to vector<2x1xf32>
    %755 = vector.extract_strided_slice %12 {offsets = [1, 0], sizes = [1, 384], strides = [1, 1]} : vector<4x384xf32> to vector<1x384xf32>
    %756 = vector.broadcast %754 : vector<2x1xf32> to vector<2x384xf32>
    %757 = vector.broadcast %755 : vector<1x384xf32> to vector<2x384xf32>
    %758 = arith.mulf %756, %757 : vector<2x384xf32>
    %759 = arith.addf %750, %758 : vector<2x384xf32>
    %c2_i32_110 = arith.constant 2 : i32
    %760 = vector.broadcast %c2_i32_110 : i32 to vector<2x1xi32>
    %761 = arith.cmpi eq, %742, %760 : vector<2x1xi32>
    %762 = arith.extui %761 : vector<2x1xi1> to vector<2x1xi32>
    %763 = arith.sitofp %762 : vector<2x1xi32> to vector<2x1xf32>
    %764 = vector.extract_strided_slice %12 {offsets = [2, 0], sizes = [1, 384], strides = [1, 1]} : vector<4x384xf32> to vector<1x384xf32>
    %765 = vector.broadcast %763 : vector<2x1xf32> to vector<2x384xf32>
    %766 = vector.broadcast %764 : vector<1x384xf32> to vector<2x384xf32>
    %767 = arith.mulf %765, %766 : vector<2x384xf32>
    %768 = arith.addf %759, %767 : vector<2x384xf32>
    %c3_i32_111 = arith.constant 3 : i32
    %769 = vector.broadcast %c3_i32_111 : i32 to vector<2x1xi32>
    %770 = arith.cmpi eq, %742, %769 : vector<2x1xi32>
    %771 = arith.extui %770 : vector<2x1xi1> to vector<2x1xi32>
    %772 = arith.sitofp %771 : vector<2x1xi32> to vector<2x1xf32>
    %773 = vector.extract_strided_slice %12 {offsets = [3, 0], sizes = [1, 384], strides = [1, 1]} : vector<4x384xf32> to vector<1x384xf32>
    %774 = vector.broadcast %772 : vector<2x1xf32> to vector<2x384xf32>
    %775 = vector.broadcast %773 : vector<1x384xf32> to vector<2x384xf32>
    %776 = arith.mulf %774, %775 : vector<2x384xf32>
    %777 = arith.addf %768, %776 : vector<2x384xf32>
    %778 = arith.addf %777, %556 : vector<2x384xf32>
    %779 = vector.extract_strided_slice %20 {offsets = [0, 6], sizes = [2, 1], strides = [1, 1]} : vector<2x8xi32> to vector<2x1xi32>
    %c0_i32_112 = arith.constant 0 : i32
    %780 = vector.broadcast %c0_i32_112 : i32 to vector<2x1xi32>
    %781 = arith.cmpi eq, %779, %780 : vector<2x1xi32>
    %782 = arith.extui %781 : vector<2x1xi1> to vector<2x1xi32>
    %783 = arith.sitofp %782 : vector<2x1xi32> to vector<2x1xf32>
    %784 = vector.extract_strided_slice %12 {offsets = [0, 0], sizes = [1, 384], strides = [1, 1]} : vector<4x384xf32> to vector<1x384xf32>
    %785 = vector.broadcast %783 : vector<2x1xf32> to vector<2x384xf32>
    %786 = vector.broadcast %784 : vector<1x384xf32> to vector<2x384xf32>
    %787 = arith.mulf %785, %786 : vector<2x384xf32>
    %c1_i32_113 = arith.constant 1 : i32
    %788 = vector.broadcast %c1_i32_113 : i32 to vector<2x1xi32>
    %789 = arith.cmpi eq, %779, %788 : vector<2x1xi32>
    %790 = arith.extui %789 : vector<2x1xi1> to vector<2x1xi32>
    %791 = arith.sitofp %790 : vector<2x1xi32> to vector<2x1xf32>
    %792 = vector.extract_strided_slice %12 {offsets = [1, 0], sizes = [1, 384], strides = [1, 1]} : vector<4x384xf32> to vector<1x384xf32>
    %793 = vector.broadcast %791 : vector<2x1xf32> to vector<2x384xf32>
    %794 = vector.broadcast %792 : vector<1x384xf32> to vector<2x384xf32>
    %795 = arith.mulf %793, %794 : vector<2x384xf32>
    %796 = arith.addf %787, %795 : vector<2x384xf32>
    %c2_i32_114 = arith.constant 2 : i32
    %797 = vector.broadcast %c2_i32_114 : i32 to vector<2x1xi32>
    %798 = arith.cmpi eq, %779, %797 : vector<2x1xi32>
    %799 = arith.extui %798 : vector<2x1xi1> to vector<2x1xi32>
    %800 = arith.sitofp %799 : vector<2x1xi32> to vector<2x1xf32>
    %801 = vector.extract_strided_slice %12 {offsets = [2, 0], sizes = [1, 384], strides = [1, 1]} : vector<4x384xf32> to vector<1x384xf32>
    %802 = vector.broadcast %800 : vector<2x1xf32> to vector<2x384xf32>
    %803 = vector.broadcast %801 : vector<1x384xf32> to vector<2x384xf32>
    %804 = arith.mulf %802, %803 : vector<2x384xf32>
    %805 = arith.addf %796, %804 : vector<2x384xf32>
    %c3_i32_115 = arith.constant 3 : i32
    %806 = vector.broadcast %c3_i32_115 : i32 to vector<2x1xi32>
    %807 = arith.cmpi eq, %779, %806 : vector<2x1xi32>
    %808 = arith.extui %807 : vector<2x1xi1> to vector<2x1xi32>
    %809 = arith.sitofp %808 : vector<2x1xi32> to vector<2x1xf32>
    %810 = vector.extract_strided_slice %12 {offsets = [3, 0], sizes = [1, 384], strides = [1, 1]} : vector<4x384xf32> to vector<1x384xf32>
    %811 = vector.broadcast %809 : vector<2x1xf32> to vector<2x384xf32>
    %812 = vector.broadcast %810 : vector<1x384xf32> to vector<2x384xf32>
    %813 = arith.mulf %811, %812 : vector<2x384xf32>
    %814 = arith.addf %805, %813 : vector<2x384xf32>
    %815 = arith.addf %814, %556 : vector<2x384xf32>
    %cst_116 = arith.constant 0.000000e+00 : f32
    %816 = vector.broadcast %cst_116 : f32 to vector<16x128xf32>
    %c0_117 = arith.constant 0 : index
    %c0_118 = arith.constant 0 : index
    %817 = vector.load %arg16[%c0_117, %c0_118] : memref<16x128xf32, #tpu.memory_space<vmem>>, vector<16x128xf32>
    tpu.vector_store %arg16[%c0_117, %c0_118], %816 {strides = array<i32>} : memref<16x128xf32, #tpu.memory_space<vmem>>, vector<16x128xf32>,
    %818 = arith.truncf %549 : vector<2x128xf32> to vector<2x128xbf16>
    %cst_119 = arith.constant dense<0.000000e+00> : vector<2x384xf32>
    %819 = tpu.matmul %818, %16, %cst_119 {dimension_numbers = #tpu.dot_dimension_numbers<[1], [0], [0], [1], [0, 0, 1, 1], [], []>} : vector<2x128xbf16>, vector<128x384xbf16>, vector<2x384xf32> -> vector<2x384xf32>
    %820 = vector.broadcast %18 : vector<1x384xf32> to vector<2x384xf32>
    %821 = arith.addf %819, %820 : vector<2x384xf32>
    %822 = vector.extract_strided_slice %593 {offsets = [0, 0], sizes = [2, 128], strides = [1, 1]} : vector<2x384xf32> to vector<2x128xf32>
    %823 = vector.extract_strided_slice %821 {offsets = [0, 0], sizes = [2, 128], strides = [1, 1]} : vector<2x384xf32> to vector<2x128xf32>
    %824 = arith.addf %822, %823 : vector<2x128xf32>
    %825 = arith.negf %824 : vector<2x128xf32>
    %826 = math.exp %825 : vector<2x128xf32>
    %cst_120 = arith.constant 1.000000e+00 : f32
    %827 = vector.broadcast %cst_120 : f32 to vector<2x128xf32>
    %828 = arith.addf %827, %826 : vector<2x128xf32>
    %829 = arith.divf %827, %828 : vector<2x128xf32>
    %830 = vector.extract_strided_slice %593 {offsets = [0, 128], sizes = [2, 128], strides = [1, 1]} : vector<2x384xf32> to vector<2x128xf32>
    %831 = vector.extract_strided_slice %821 {offsets = [0, 128], sizes = [2, 128], strides = [1, 1]} : vector<2x384xf32> to vector<2x128xf32>
    %832 = arith.addf %830, %831 : vector<2x128xf32>
    %833 = arith.negf %832 : vector<2x128xf32>
    %834 = math.exp %833 : vector<2x128xf32>
    %cst_121 = arith.constant 1.000000e+00 : f32
    %835 = vector.broadcast %cst_121 : f32 to vector<2x128xf32>
    %836 = arith.addf %835, %834 : vector<2x128xf32>
    %837 = arith.divf %835, %836 : vector<2x128xf32>
    %838 = vector.extract_strided_slice %593 {offsets = [0, 256], sizes = [2, 128], strides = [1, 1]} : vector<2x384xf32> to vector<2x128xf32>
    %839 = vector.extract_strided_slice %821 {offsets = [0, 256], sizes = [2, 128], strides = [1, 1]} : vector<2x384xf32> to vector<2x128xf32>
    %840 = arith.mulf %829, %839 : vector<2x128xf32>
    %841 = arith.addf %838, %840 : vector<2x128xf32>
    %842 = math.tanh %841 : vector<2x128xf32>
    %cst_122 = arith.constant 1.000000e+00 : f32
    %843 = vector.broadcast %cst_122 : f32 to vector<2x128xf32>
    %844 = arith.subf %843, %837 : vector<2x128xf32>
    %845 = arith.mulf %844, %842 : vector<2x128xf32>
    %846 = arith.mulf %837, %549 : vector<2x128xf32>
    %847 = arith.addf %845, %846 : vector<2x128xf32>
    %848 = vector.extract_strided_slice %847 {offsets = [0, 0], sizes = [1, 128], strides = [1, 1]} : vector<2x128xf32> to vector<1x128xf32>
    %c0_123 = arith.constant 0 : index
    %c0_124 = arith.constant 0 : index
    %849 = vector.load %arg16[%c0_123, %c0_124] : memref<16x128xf32, #tpu.memory_space<vmem>>, vector<1x128xf32>
    tpu.vector_store %arg16[%c0_123, %c0_124], %848 {strides = array<i32>} : memref<16x128xf32, #tpu.memory_space<vmem>>, vector<1x128xf32>,
    %850 = vector.extract_strided_slice %847 {offsets = [1, 0], sizes = [1, 128], strides = [1, 1]} : vector<2x128xf32> to vector<1x128xf32>
    %c8 = arith.constant 8 : index
    %c0_125 = arith.constant 0 : index
    %851 = vector.load %arg16[%c8, %c0_125] : memref<16x128xf32, #tpu.memory_space<vmem>>, vector<1x128xf32>
    tpu.vector_store %arg16[%c8, %c0_125], %850 {strides = array<i32>} : memref<16x128xf32, #tpu.memory_space<vmem>>, vector<1x128xf32>,
    %852 = arith.truncf %847 : vector<2x128xf32> to vector<2x128xbf16>
    %cst_126 = arith.constant dense<0.000000e+00> : vector<2x384xf32>
    %853 = tpu.matmul %852, %16, %cst_126 {dimension_numbers = #tpu.dot_dimension_numbers<[1], [0], [0], [1], [0, 0, 1, 1], [], []>} : vector<2x128xbf16>, vector<128x384xbf16>, vector<2x384xf32> -> vector<2x384xf32>
    %854 = vector.broadcast %18 : vector<1x384xf32> to vector<2x384xf32>
    %855 = arith.addf %853, %854 : vector<2x384xf32>
    %856 = vector.extract_strided_slice %630 {offsets = [0, 0], sizes = [2, 128], strides = [1, 1]} : vector<2x384xf32> to vector<2x128xf32>
    %857 = vector.extract_strided_slice %855 {offsets = [0, 0], sizes = [2, 128], strides = [1, 1]} : vector<2x384xf32> to vector<2x128xf32>
    %858 = arith.addf %856, %857 : vector<2x128xf32>
    %859 = arith.negf %858 : vector<2x128xf32>
    %860 = math.exp %859 : vector<2x128xf32>
    %cst_127 = arith.constant 1.000000e+00 : f32
    %861 = vector.broadcast %cst_127 : f32 to vector<2x128xf32>
    %862 = arith.addf %861, %860 : vector<2x128xf32>
    %863 = arith.divf %861, %862 : vector<2x128xf32>
    %864 = vector.extract_strided_slice %630 {offsets = [0, 128], sizes = [2, 128], strides = [1, 1]} : vector<2x384xf32> to vector<2x128xf32>
    %865 = vector.extract_strided_slice %855 {offsets = [0, 128], sizes = [2, 128], strides = [1, 1]} : vector<2x384xf32> to vector<2x128xf32>
    %866 = arith.addf %864, %865 : vector<2x128xf32>
    %867 = arith.negf %866 : vector<2x128xf32>
    %868 = math.exp %867 : vector<2x128xf32>
    %cst_128 = arith.constant 1.000000e+00 : f32
    %869 = vector.broadcast %cst_128 : f32 to vector<2x128xf32>
    %870 = arith.addf %869, %868 : vector<2x128xf32>
    %871 = arith.divf %869, %870 : vector<2x128xf32>
    %872 = vector.extract_strided_slice %630 {offsets = [0, 256], sizes = [2, 128], strides = [1, 1]} : vector<2x384xf32> to vector<2x128xf32>
    %873 = vector.extract_strided_slice %855 {offsets = [0, 256], sizes = [2, 128], strides = [1, 1]} : vector<2x384xf32> to vector<2x128xf32>
    %874 = arith.mulf %863, %873 : vector<2x128xf32>
    %875 = arith.addf %872, %874 : vector<2x128xf32>
    %876 = math.tanh %875 : vector<2x128xf32>
    %cst_129 = arith.constant 1.000000e+00 : f32
    %877 = vector.broadcast %cst_129 : f32 to vector<2x128xf32>
    %878 = arith.subf %877, %871 : vector<2x128xf32>
    %879 = arith.mulf %878, %876 : vector<2x128xf32>
    %880 = arith.mulf %871, %847 : vector<2x128xf32>
    %881 = arith.addf %879, %880 : vector<2x128xf32>
    %882 = vector.extract_strided_slice %881 {offsets = [0, 0], sizes = [1, 128], strides = [1, 1]} : vector<2x128xf32> to vector<1x128xf32>
    %c1 = arith.constant 1 : index
    %c0_130 = arith.constant 0 : index
    %883 = vector.load %arg16[%c1, %c0_130] : memref<16x128xf32, #tpu.memory_space<vmem>>, vector<1x128xf32>
    tpu.vector_store %arg16[%c1, %c0_130], %882 {strides = array<i32>} : memref<16x128xf32, #tpu.memory_space<vmem>>, vector<1x128xf32>,
    %884 = vector.extract_strided_slice %881 {offsets = [1, 0], sizes = [1, 128], strides = [1, 1]} : vector<2x128xf32> to vector<1x128xf32>
    %c9 = arith.constant 9 : index
    %c0_131 = arith.constant 0 : index
    %885 = vector.load %arg16[%c9, %c0_131] : memref<16x128xf32, #tpu.memory_space<vmem>>, vector<1x128xf32>
    tpu.vector_store %arg16[%c9, %c0_131], %884 {strides = array<i32>} : memref<16x128xf32, #tpu.memory_space<vmem>>, vector<1x128xf32>,
    %886 = arith.truncf %881 : vector<2x128xf32> to vector<2x128xbf16>
    %cst_132 = arith.constant dense<0.000000e+00> : vector<2x384xf32>
    %887 = tpu.matmul %886, %16, %cst_132 {dimension_numbers = #tpu.dot_dimension_numbers<[1], [0], [0], [1], [0, 0, 1, 1], [], []>} : vector<2x128xbf16>, vector<128x384xbf16>, vector<2x384xf32> -> vector<2x384xf32>
    %888 = vector.broadcast %18 : vector<1x384xf32> to vector<2x384xf32>
    %889 = arith.addf %887, %888 : vector<2x384xf32>
    %890 = vector.extract_strided_slice %667 {offsets = [0, 0], sizes = [2, 128], strides = [1, 1]} : vector<2x384xf32> to vector<2x128xf32>
    %891 = vector.extract_strided_slice %889 {offsets = [0, 0], sizes = [2, 128], strides = [1, 1]} : vector<2x384xf32> to vector<2x128xf32>
    %892 = arith.addf %890, %891 : vector<2x128xf32>
    %893 = arith.negf %892 : vector<2x128xf32>
    %894 = math.exp %893 : vector<2x128xf32>
    %cst_133 = arith.constant 1.000000e+00 : f32
    %895 = vector.broadcast %cst_133 : f32 to vector<2x128xf32>
    %896 = arith.addf %895, %894 : vector<2x128xf32>
    %897 = arith.divf %895, %896 : vector<2x128xf32>
    %898 = vector.extract_strided_slice %667 {offsets = [0, 128], sizes = [2, 128], strides = [1, 1]} : vector<2x384xf32> to vector<2x128xf32>
    %899 = vector.extract_strided_slice %889 {offsets = [0, 128], sizes = [2, 128], strides = [1, 1]} : vector<2x384xf32> to vector<2x128xf32>
    %900 = arith.addf %898, %899 : vector<2x128xf32>
    %901 = arith.negf %900 : vector<2x128xf32>
    %902 = math.exp %901 : vector<2x128xf32>
    %cst_134 = arith.constant 1.000000e+00 : f32
    %903 = vector.broadcast %cst_134 : f32 to vector<2x128xf32>
    %904 = arith.addf %903, %902 : vector<2x128xf32>
    %905 = arith.divf %903, %904 : vector<2x128xf32>
    %906 = vector.extract_strided_slice %667 {offsets = [0, 256], sizes = [2, 128], strides = [1, 1]} : vector<2x384xf32> to vector<2x128xf32>
    %907 = vector.extract_strided_slice %889 {offsets = [0, 256], sizes = [2, 128], strides = [1, 1]} : vector<2x384xf32> to vector<2x128xf32>
    %908 = arith.mulf %897, %907 : vector<2x128xf32>
    %909 = arith.addf %906, %908 : vector<2x128xf32>
    %910 = math.tanh %909 : vector<2x128xf32>
    %cst_135 = arith.constant 1.000000e+00 : f32
    %911 = vector.broadcast %cst_135 : f32 to vector<2x128xf32>
    %912 = arith.subf %911, %905 : vector<2x128xf32>
    %913 = arith.mulf %912, %910 : vector<2x128xf32>
    %914 = arith.mulf %905, %881 : vector<2x128xf32>
    %915 = arith.addf %913, %914 : vector<2x128xf32>
    %916 = vector.extract_strided_slice %915 {offsets = [0, 0], sizes = [1, 128], strides = [1, 1]} : vector<2x128xf32> to vector<1x128xf32>
    %c2 = arith.constant 2 : index
    %c0_136 = arith.constant 0 : index
    %917 = vector.load %arg16[%c2, %c0_136] : memref<16x128xf32, #tpu.memory_space<vmem>>, vector<1x128xf32>
    tpu.vector_store %arg16[%c2, %c0_136], %916 {strides = array<i32>} : memref<16x128xf32, #tpu.memory_space<vmem>>, vector<1x128xf32>,
    %918 = vector.extract_strided_slice %915 {offsets = [1, 0], sizes = [1, 128], strides = [1, 1]} : vector<2x128xf32> to vector<1x128xf32>
    %c10 = arith.constant 10 : index
    %c0_137 = arith.constant 0 : index
    %919 = vector.load %arg16[%c10, %c0_137] : memref<16x128xf32, #tpu.memory_space<vmem>>, vector<1x128xf32>
    tpu.vector_store %arg16[%c10, %c0_137], %918 {strides = array<i32>} : memref<16x128xf32, #tpu.memory_space<vmem>>, vector<1x128xf32>,
    %920 = arith.truncf %915 : vector<2x128xf32> to vector<2x128xbf16>
    %cst_138 = arith.constant dense<0.000000e+00> : vector<2x384xf32>
    %921 = tpu.matmul %920, %16, %cst_138 {dimension_numbers = #tpu.dot_dimension_numbers<[1], [0], [0], [1], [0, 0, 1, 1], [], []>} : vector<2x128xbf16>, vector<128x384xbf16>, vector<2x384xf32> -> vector<2x384xf32>
    %922 = vector.broadcast %18 : vector<1x384xf32> to vector<2x384xf32>
    %923 = arith.addf %921, %922 : vector<2x384xf32>
    %924 = vector.extract_strided_slice %704 {offsets = [0, 0], sizes = [2, 128], strides = [1, 1]} : vector<2x384xf32> to vector<2x128xf32>
    %925 = vector.extract_strided_slice %923 {offsets = [0, 0], sizes = [2, 128], strides = [1, 1]} : vector<2x384xf32> to vector<2x128xf32>
    %926 = arith.addf %924, %925 : vector<2x128xf32>
    %927 = arith.negf %926 : vector<2x128xf32>
    %928 = math.exp %927 : vector<2x128xf32>
    %cst_139 = arith.constant 1.000000e+00 : f32
    %929 = vector.broadcast %cst_139 : f32 to vector<2x128xf32>
    %930 = arith.addf %929, %928 : vector<2x128xf32>
    %931 = arith.divf %929, %930 : vector<2x128xf32>
    %932 = vector.extract_strided_slice %704 {offsets = [0, 128], sizes = [2, 128], strides = [1, 1]} : vector<2x384xf32> to vector<2x128xf32>
    %933 = vector.extract_strided_slice %923 {offsets = [0, 128], sizes = [2, 128], strides = [1, 1]} : vector<2x384xf32> to vector<2x128xf32>
    %934 = arith.addf %932, %933 : vector<2x128xf32>
    %935 = arith.negf %934 : vector<2x128xf32>
    %936 = math.exp %935 : vector<2x128xf32>
    %cst_140 = arith.constant 1.000000e+00 : f32
    %937 = vector.broadcast %cst_140 : f32 to vector<2x128xf32>
    %938 = arith.addf %937, %936 : vector<2x128xf32>
    %939 = arith.divf %937, %938 : vector<2x128xf32>
    %940 = vector.extract_strided_slice %704 {offsets = [0, 256], sizes = [2, 128], strides = [1, 1]} : vector<2x384xf32> to vector<2x128xf32>
    %941 = vector.extract_strided_slice %923 {offsets = [0, 256], sizes = [2, 128], strides = [1, 1]} : vector<2x384xf32> to vector<2x128xf32>
    %942 = arith.mulf %931, %941 : vector<2x128xf32>
    %943 = arith.addf %940, %942 : vector<2x128xf32>
    %944 = math.tanh %943 : vector<2x128xf32>
    %cst_141 = arith.constant 1.000000e+00 : f32
    %945 = vector.broadcast %cst_141 : f32 to vector<2x128xf32>
    %946 = arith.subf %945, %939 : vector<2x128xf32>
    %947 = arith.mulf %946, %944 : vector<2x128xf32>
    %948 = arith.mulf %939, %915 : vector<2x128xf32>
    %949 = arith.addf %947, %948 : vector<2x128xf32>
    %950 = vector.extract_strided_slice %949 {offsets = [0, 0], sizes = [1, 128], strides = [1, 1]} : vector<2x128xf32> to vector<1x128xf32>
    %c3 = arith.constant 3 : index
    %c0_142 = arith.constant 0 : index
    %951 = vector.load %arg16[%c3, %c0_142] : memref<16x128xf32, #tpu.memory_space<vmem>>, vector<1x128xf32>
    tpu.vector_store %arg16[%c3, %c0_142], %950 {strides = array<i32>} : memref<16x128xf32, #tpu.memory_space<vmem>>, vector<1x128xf32>,
    %952 = vector.extract_strided_slice %949 {offsets = [1, 0], sizes = [1, 128], strides = [1, 1]} : vector<2x128xf32> to vector<1x128xf32>
    %c11 = arith.constant 11 : index
    %c0_143 = arith.constant 0 : index
    %953 = vector.load %arg16[%c11, %c0_143] : memref<16x128xf32, #tpu.memory_space<vmem>>, vector<1x128xf32>
    tpu.vector_store %arg16[%c11, %c0_143], %952 {strides = array<i32>} : memref<16x128xf32, #tpu.memory_space<vmem>>, vector<1x128xf32>,
    %954 = arith.truncf %949 : vector<2x128xf32> to vector<2x128xbf16>
    %cst_144 = arith.constant dense<0.000000e+00> : vector<2x384xf32>
    %955 = tpu.matmul %954, %16, %cst_144 {dimension_numbers = #tpu.dot_dimension_numbers<[1], [0], [0], [1], [0, 0, 1, 1], [], []>} : vector<2x128xbf16>, vector<128x384xbf16>, vector<2x384xf32> -> vector<2x384xf32>
    %956 = vector.broadcast %18 : vector<1x384xf32> to vector<2x384xf32>
    %957 = arith.addf %955, %956 : vector<2x384xf32>
    %958 = vector.extract_strided_slice %741 {offsets = [0, 0], sizes = [2, 128], strides = [1, 1]} : vector<2x384xf32> to vector<2x128xf32>
    %959 = vector.extract_strided_slice %957 {offsets = [0, 0], sizes = [2, 128], strides = [1, 1]} : vector<2x384xf32> to vector<2x128xf32>
    %960 = arith.addf %958, %959 : vector<2x128xf32>
    %961 = arith.negf %960 : vector<2x128xf32>
    %962 = math.exp %961 : vector<2x128xf32>
    %cst_145 = arith.constant 1.000000e+00 : f32
    %963 = vector.broadcast %cst_145 : f32 to vector<2x128xf32>
    %964 = arith.addf %963, %962 : vector<2x128xf32>
    %965 = arith.divf %963, %964 : vector<2x128xf32>
    %966 = vector.extract_strided_slice %741 {offsets = [0, 128], sizes = [2, 128], strides = [1, 1]} : vector<2x384xf32> to vector<2x128xf32>
    %967 = vector.extract_strided_slice %957 {offsets = [0, 128], sizes = [2, 128], strides = [1, 1]} : vector<2x384xf32> to vector<2x128xf32>
    %968 = arith.addf %966, %967 : vector<2x128xf32>
    %969 = arith.negf %968 : vector<2x128xf32>
    %970 = math.exp %969 : vector<2x128xf32>
    %cst_146 = arith.constant 1.000000e+00 : f32
    %971 = vector.broadcast %cst_146 : f32 to vector<2x128xf32>
    %972 = arith.addf %971, %970 : vector<2x128xf32>
    %973 = arith.divf %971, %972 : vector<2x128xf32>
    %974 = vector.extract_strided_slice %741 {offsets = [0, 256], sizes = [2, 128], strides = [1, 1]} : vector<2x384xf32> to vector<2x128xf32>
    %975 = vector.extract_strided_slice %957 {offsets = [0, 256], sizes = [2, 128], strides = [1, 1]} : vector<2x384xf32> to vector<2x128xf32>
    %976 = arith.mulf %965, %975 : vector<2x128xf32>
    %977 = arith.addf %974, %976 : vector<2x128xf32>
    %978 = math.tanh %977 : vector<2x128xf32>
    %cst_147 = arith.constant 1.000000e+00 : f32
    %979 = vector.broadcast %cst_147 : f32 to vector<2x128xf32>
    %980 = arith.subf %979, %973 : vector<2x128xf32>
    %981 = arith.mulf %980, %978 : vector<2x128xf32>
    %982 = arith.mulf %973, %949 : vector<2x128xf32>
    %983 = arith.addf %981, %982 : vector<2x128xf32>
    %984 = vector.extract_strided_slice %983 {offsets = [0, 0], sizes = [1, 128], strides = [1, 1]} : vector<2x128xf32> to vector<1x128xf32>
    %c4 = arith.constant 4 : index
    %c0_148 = arith.constant 0 : index
    %985 = vector.load %arg16[%c4, %c0_148] : memref<16x128xf32, #tpu.memory_space<vmem>>, vector<1x128xf32>
    tpu.vector_store %arg16[%c4, %c0_148], %984 {strides = array<i32>} : memref<16x128xf32, #tpu.memory_space<vmem>>, vector<1x128xf32>,
    %986 = vector.extract_strided_slice %983 {offsets = [1, 0], sizes = [1, 128], strides = [1, 1]} : vector<2x128xf32> to vector<1x128xf32>
    %c12 = arith.constant 12 : index
    %c0_149 = arith.constant 0 : index
    %987 = vector.load %arg16[%c12, %c0_149] : memref<16x128xf32, #tpu.memory_space<vmem>>, vector<1x128xf32>
    tpu.vector_store %arg16[%c12, %c0_149], %986 {strides = array<i32>} : memref<16x128xf32, #tpu.memory_space<vmem>>, vector<1x128xf32>,
    %988 = arith.truncf %983 : vector<2x128xf32> to vector<2x128xbf16>
    %cst_150 = arith.constant dense<0.000000e+00> : vector<2x384xf32>
    %989 = tpu.matmul %988, %16, %cst_150 {dimension_numbers = #tpu.dot_dimension_numbers<[1], [0], [0], [1], [0, 0, 1, 1], [], []>} : vector<2x128xbf16>, vector<128x384xbf16>, vector<2x384xf32> -> vector<2x384xf32>
    %990 = vector.broadcast %18 : vector<1x384xf32> to vector<2x384xf32>
    %991 = arith.addf %989, %990 : vector<2x384xf32>
    %992 = vector.extract_strided_slice %778 {offsets = [0, 0], sizes = [2, 128], strides = [1, 1]} : vector<2x384xf32> to vector<2x128xf32>
    %993 = vector.extract_strided_slice %991 {offsets = [0, 0], sizes = [2, 128], strides = [1, 1]} : vector<2x384xf32> to vector<2x128xf32>
    %994 = arith.addf %992, %993 : vector<2x128xf32>
    %995 = arith.negf %994 : vector<2x128xf32>
    %996 = math.exp %995 : vector<2x128xf32>
    %cst_151 = arith.constant 1.000000e+00 : f32
    %997 = vector.broadcast %cst_151 : f32 to vector<2x128xf32>
    %998 = arith.addf %997, %996 : vector<2x128xf32>
    %999 = arith.divf %997, %998 : vector<2x128xf32>
    %1000 = vector.extract_strided_slice %778 {offsets = [0, 128], sizes = [2, 128], strides = [1, 1]} : vector<2x384xf32> to vector<2x128xf32>
    %1001 = vector.extract_strided_slice %991 {offsets = [0, 128], sizes = [2, 128], strides = [1, 1]} : vector<2x384xf32> to vector<2x128xf32>
    %1002 = arith.addf %1000, %1001 : vector<2x128xf32>
    %1003 = arith.negf %1002 : vector<2x128xf32>
    %1004 = math.exp %1003 : vector<2x128xf32>
    %cst_152 = arith.constant 1.000000e+00 : f32
    %1005 = vector.broadcast %cst_152 : f32 to vector<2x128xf32>
    %1006 = arith.addf %1005, %1004 : vector<2x128xf32>
    %1007 = arith.divf %1005, %1006 : vector<2x128xf32>
    %1008 = vector.extract_strided_slice %778 {offsets = [0, 256], sizes = [2, 128], strides = [1, 1]} : vector<2x384xf32> to vector<2x128xf32>
    %1009 = vector.extract_strided_slice %991 {offsets = [0, 256], sizes = [2, 128], strides = [1, 1]} : vector<2x384xf32> to vector<2x128xf32>
    %1010 = arith.mulf %999, %1009 : vector<2x128xf32>
    %1011 = arith.addf %1008, %1010 : vector<2x128xf32>
    %1012 = math.tanh %1011 : vector<2x128xf32>
    %cst_153 = arith.constant 1.000000e+00 : f32
    %1013 = vector.broadcast %cst_153 : f32 to vector<2x128xf32>
    %1014 = arith.subf %1013, %1007 : vector<2x128xf32>
    %1015 = arith.mulf %1014, %1012 : vector<2x128xf32>
    %1016 = arith.mulf %1007, %983 : vector<2x128xf32>
    %1017 = arith.addf %1015, %1016 : vector<2x128xf32>
    %1018 = vector.extract_strided_slice %1017 {offsets = [0, 0], sizes = [1, 128], strides = [1, 1]} : vector<2x128xf32> to vector<1x128xf32>
    %c5 = arith.constant 5 : index
    %c0_154 = arith.constant 0 : index
    %1019 = vector.load %arg16[%c5, %c0_154] : memref<16x128xf32, #tpu.memory_space<vmem>>, vector<1x128xf32>
    tpu.vector_store %arg16[%c5, %c0_154], %1018 {strides = array<i32>} : memref<16x128xf32, #tpu.memory_space<vmem>>, vector<1x128xf32>,
    %1020 = vector.extract_strided_slice %1017 {offsets = [1, 0], sizes = [1, 128], strides = [1, 1]} : vector<2x128xf32> to vector<1x128xf32>
    %c13 = arith.constant 13 : index
    %c0_155 = arith.constant 0 : index
    %1021 = vector.load %arg16[%c13, %c0_155] : memref<16x128xf32, #tpu.memory_space<vmem>>, vector<1x128xf32>
    tpu.vector_store %arg16[%c13, %c0_155], %1020 {strides = array<i32>} : memref<16x128xf32, #tpu.memory_space<vmem>>, vector<1x128xf32>,
    %1022 = arith.truncf %1017 : vector<2x128xf32> to vector<2x128xbf16>
    %cst_156 = arith.constant dense<0.000000e+00> : vector<2x384xf32>
    %1023 = tpu.matmul %1022, %16, %cst_156 {dimension_numbers = #tpu.dot_dimension_numbers<[1], [0], [0], [1], [0, 0, 1, 1], [], []>} : vector<2x128xbf16>, vector<128x384xbf16>, vector<2x384xf32> -> vector<2x384xf32>
    %1024 = vector.broadcast %18 : vector<1x384xf32> to vector<2x384xf32>
    %1025 = arith.addf %1023, %1024 : vector<2x384xf32>
    %1026 = vector.extract_strided_slice %815 {offsets = [0, 0], sizes = [2, 128], strides = [1, 1]} : vector<2x384xf32> to vector<2x128xf32>
    %1027 = vector.extract_strided_slice %1025 {offsets = [0, 0], sizes = [2, 128], strides = [1, 1]} : vector<2x384xf32> to vector<2x128xf32>
    %1028 = arith.addf %1026, %1027 : vector<2x128xf32>
    %1029 = arith.negf %1028 : vector<2x128xf32>
    %1030 = math.exp %1029 : vector<2x128xf32>
    %cst_157 = arith.constant 1.000000e+00 : f32
    %1031 = vector.broadcast %cst_157 : f32 to vector<2x128xf32>
    %1032 = arith.addf %1031, %1030 : vector<2x128xf32>
    %1033 = arith.divf %1031, %1032 : vector<2x128xf32>
    %1034 = vector.extract_strided_slice %815 {offsets = [0, 128], sizes = [2, 128], strides = [1, 1]} : vector<2x384xf32> to vector<2x128xf32>
    %1035 = vector.extract_strided_slice %1025 {offsets = [0, 128], sizes = [2, 128], strides = [1, 1]} : vector<2x384xf32> to vector<2x128xf32>
    %1036 = arith.addf %1034, %1035 : vector<2x128xf32>
    %1037 = arith.negf %1036 : vector<2x128xf32>
    %1038 = math.exp %1037 : vector<2x128xf32>
    %cst_158 = arith.constant 1.000000e+00 : f32
    %1039 = vector.broadcast %cst_158 : f32 to vector<2x128xf32>
    %1040 = arith.addf %1039, %1038 : vector<2x128xf32>
    %1041 = arith.divf %1039, %1040 : vector<2x128xf32>
    %1042 = vector.extract_strided_slice %815 {offsets = [0, 256], sizes = [2, 128], strides = [1, 1]} : vector<2x384xf32> to vector<2x128xf32>
    %1043 = vector.extract_strided_slice %1025 {offsets = [0, 256], sizes = [2, 128], strides = [1, 1]} : vector<2x384xf32> to vector<2x128xf32>
    %1044 = arith.mulf %1033, %1043 : vector<2x128xf32>
    %1045 = arith.addf %1042, %1044 : vector<2x128xf32>
    %1046 = math.tanh %1045 : vector<2x128xf32>
    %cst_159 = arith.constant 1.000000e+00 : f32
    %1047 = vector.broadcast %cst_159 : f32 to vector<2x128xf32>
    %1048 = arith.subf %1047, %1041 : vector<2x128xf32>
    %1049 = arith.mulf %1048, %1046 : vector<2x128xf32>
    %1050 = arith.mulf %1041, %1017 : vector<2x128xf32>
    %1051 = arith.addf %1049, %1050 : vector<2x128xf32>
    %1052 = vector.extract_strided_slice %1051 {offsets = [0, 0], sizes = [1, 128], strides = [1, 1]} : vector<2x128xf32> to vector<1x128xf32>
    %c6 = arith.constant 6 : index
    %c0_160 = arith.constant 0 : index
    %1053 = vector.load %arg16[%c6, %c0_160] : memref<16x128xf32, #tpu.memory_space<vmem>>, vector<1x128xf32>
    tpu.vector_store %arg16[%c6, %c0_160], %1052 {strides = array<i32>} : memref<16x128xf32, #tpu.memory_space<vmem>>, vector<1x128xf32>,
    %1054 = vector.extract_strided_slice %1051 {offsets = [1, 0], sizes = [1, 128], strides = [1, 1]} : vector<2x128xf32> to vector<1x128xf32>
    %c14 = arith.constant 14 : index
    %c0_161 = arith.constant 0 : index
    %1055 = vector.load %arg16[%c14, %c0_161] : memref<16x128xf32, #tpu.memory_space<vmem>>, vector<1x128xf32>
    tpu.vector_store %arg16[%c14, %c0_161], %1054 {strides = array<i32>} : memref<16x128xf32, #tpu.memory_space<vmem>>, vector<1x128xf32>,
    %c0_162 = arith.constant 0 : index
    %c0_163 = arith.constant 0 : index
    %1056 = vector.load %arg16[%c0_162, %c0_163] : memref<16x128xf32, #tpu.memory_space<vmem>>, vector<16x128xf32>
    %c0_164 = arith.constant 0 : index
    %c0_165 = arith.constant 0 : index
    %1057 = vector.load %arg13[%c0_164, %c0_165] : memref<128x4xf32, #tpu.memory_space<vmem>>, vector<128x4xf32>
    %1058 = arith.truncf %1056 : vector<16x128xf32> to vector<16x128xbf16>
    %1059 = arith.truncf %1057 : vector<128x4xf32> to vector<128x4xbf16>
    %cst_166 = arith.constant dense<0.000000e+00> : vector<16x4xf32>
    %1060 = tpu.matmul %1058, %1059, %cst_166 {dimension_numbers = #tpu.dot_dimension_numbers<[1], [0], [0], [1], [0, 0, 1, 1], [], []>} : vector<16x128xbf16>, vector<128x4xbf16>, vector<16x4xf32> -> vector<16x4xf32>
    %c0_167 = arith.constant 0 : index
    %c0_168 = arith.constant 0 : index
    %1061 = vector.load %arg14[%c0_167, %c0_168] : memref<1x4xf32, #tpu.memory_space<vmem>>, vector<1x4xf32>
    %1062 = vector.broadcast %1061 : vector<1x4xf32> to vector<16x4xf32>
    %1063 = arith.addf %1060, %1062 : vector<16x4xf32>
    %1064 = vector.shape_cast %1063 : vector<16x4xf32> to vector<2x8x4xf32>
    %cst_169 = arith.constant 0.000000e+00 : f32
    %1065 = vector.broadcast %cst_169 : f32 to vector<2x1x4xf32>
    %c0_170 = arith.constant 0 : index
    %c0_171 = arith.constant 0 : index
    %c0_172 = arith.constant 0 : index
    %1066 = vector.load %arg15[%c0_170, %c0_171, %c0_172] : memref<2x8x4xf32, #tpu.memory_space<vmem>>, vector<2x1x4xf32>
    tpu.vector_store %arg15[%c0_170, %c0_171, %c0_172], %1065 {strides = array<i32>} : memref<2x8x4xf32, #tpu.memory_space<vmem>>, vector<2x1x4xf32>,
    %1067 = vector.extract_strided_slice %1064 {offsets = [0, 0, 0], sizes = [2, 7, 4], strides = [1, 1, 1]} : vector<2x8x4xf32> to vector<2x7x4xf32>
    %c0_173 = arith.constant 0 : index
    %c1_174 = arith.constant 1 : index
    %c0_175 = arith.constant 0 : index
    %1068 = vector.load %arg15[%c0_173, %c1_174, %c0_175] : memref<2x8x4xf32, #tpu.memory_space<vmem>>, vector<2x7x4xf32>
    tpu.vector_store %arg15[%c0_173, %c1_174, %c0_175], %1067 {strides = array<i32>} : memref<2x8x4xf32, #tpu.memory_space<vmem>>, vector<2x7x4xf32>,
    return
  }
}

</mosaic_0001>

<llo_original>
// kernel: seq2seq_forward.1
$region0: #{seq2seq_forward.1}
  #allocation0 [shape = 'u32[]', space=smem, size = 0x4, offset = 0x4, fixed_abs, tag = 'smem constant byte address 0x4 - core index']
  #allocation1 [shape = 'u32[144,128]{1,0:T(1,128)}', space=vmem, size = 0x12000, scoped, tag = 'internal scratch']
  #allocation2 [shape = 'f32[16,128]{1,0:T(8,128)}', space=vmem, size = 0x2000, scoped, tag = 'scratch operand']
  %s0 = inlined_call_operand.vmem [shape: s32[2,8], index: 0, kind: input, shape index: {}]
  %s1 = inlined_call_operand.vmem [shape: s32[2,8], index: 1, kind: input, shape index: {}]
  %s2 = inlined_call_operand.vmem [shape: f32[4,64], index: 2, kind: input, shape index: {}]
  %s3 = inlined_call_operand.hbm [shape: f32[64,384], index: 3, kind: input, shape index: {}]
  %s4 = inlined_call_operand.hbm [shape: f32[128,384], index: 4, kind: input, shape index: {}]
  %s5 = inlined_call_operand.vmem [shape: f32[1,384], index: 5, kind: input, shape index: {}]
  %s6 = inlined_call_operand.vmem [shape: f32[1,384], index: 6, kind: input, shape index: {}]
  %s7 = inlined_call_operand.vmem [shape: f32[4,64], index: 7, kind: input, shape index: {}]
  %s8 = inlined_call_operand.hbm [shape: f32[64,384], index: 8, kind: input, shape index: {}]
  %s9 = inlined_call_operand.hbm [shape: f32[128,384], index: 9, kind: input, shape index: {}]
  %s10 = inlined_call_operand.hbm [shape: f32[128,384], index: 10, kind: input, shape index: {}]
  %s11 = inlined_call_operand.vmem [shape: f32[1,384], index: 11, kind: input, shape index: {}]
  %s12 = inlined_call_operand.vmem [shape: f32[1,384], index: 12, kind: input, shape index: {}]
  %s13 = inlined_call_operand.vmem [shape: f32[128,4], index: 13, kind: input, shape index: {}]
  %s14 = inlined_call_operand.vmem [shape: f32[1,4], index: 14, kind: input, shape index: {}]
  %s15 = inlined_call_operand.vmem [shape: f32[2,8,4], index: 15, kind: output, shape index: {}]
  %s16 = sld [smem:[#allocation0]]
  $region90: #{seq2seq_forward.1} parent=0
    _
  %s18 = ssub.s32 1, %s16
  %s19 = scalar_select 0, %s18, %s16
  $region1: #{seq2seq_forward.1} parent=0
    #allocation3 [shape = 'u8[98304]{0}', space=vmem, size = 0x18000, scoped, tag = 'input window, operand 3, single buffered']
    #allocation4 [shape = 's32[1]{0}', space=sflag, size = 0x4, scoped, tag = 'scoped memory for seq2seq_forward.1']
    #allocation5 [shape = 'u8[196608]{0}', space=vmem, size = 0x30000, scoped, tag = 'input window, operand 4, single buffered']
    #allocation6 [shape = 's32[1]{0}', space=sflag, size = 0x4, scoped, tag = 'scoped memory for seq2seq_forward.1']
    #allocation7 [shape = 'u8[98304]{0}', space=vmem, size = 0x18000, scoped, tag = 'input window, operand 8, single buffered']
    #allocation8 [shape = 'u8[196608]{0}', space=vmem, size = 0x30000, scoped, tag = 'input window, operand 9, single buffered']
    #allocation9 [shape = 's32[1]{0}', space=sflag, size = 0x4, scoped, tag = 'scoped memory for seq2seq_forward.1']
    #allocation10 [shape = 'u8[196608]{0}', space=vmem, size = 0x30000, scoped, tag = 'input window, operand 10, single buffered']
    %20 = vsyncpa [#allocation4], 0
    %21 = vsyncpa [#allocation6], 0
    %22 = vsyncpa [#allocation9], 0
    // Predicated region
    $region2: #{seq2seq_forward.1} parent=1 // pred_check
      _
    $region3: #{seq2seq_forward.1} parent=1 // pred_check_branch
      %24 = sbr.rel (0) target = $region5
    $region4: #{seq2seq_forward.1} parent=1 // pred_region
      _
    $region5: #{seq2seq_forward.1} parent=1 // pred_fallthru
      _
    // Predicated region
    $region6: #{seq2seq_forward.1} parent=1 // pred_check
      _
    $region7: #{seq2seq_forward.1} parent=1 // pred_check_branch
      %26 = sbr.rel (0) target = $region9
    $region8: #{seq2seq_forward.1} parent=1 // pred_region
      _
    $region9: #{seq2seq_forward.1} parent=1 // pred_fallthru
      _
    // Predicated region
    $region10: #{seq2seq_forward.1} parent=1 // pred_check
      _
    $region11: #{seq2seq_forward.1} parent=1 // pred_check_branch
      %28 = sbr.rel (0) target = $region13
    $region12: #{seq2seq_forward.1} parent=1 // pred_region
      _
    $region13: #{seq2seq_forward.1} parent=1 // pred_fallthru
      _
    // Predicated region
    $region14: #{seq2seq_forward.1} parent=1 // pred_check
      _
    $region15: #{seq2seq_forward.1} parent=1 // pred_check_branch
      %30 = sbr.rel (0) target = $region17
    $region16: #{seq2seq_forward.1} parent=1 // pred_region
      %s32 = ssub.s32 3072, 3072
      %33 = vsyncadd [#allocation4], %s32
      %s34 = sshll.u32 [#allocation3], 4
      %s35 = int_to_ptr.vmem [resolvable:$true] %s34
      %40 = dma.hbm_to_vmem [thread:$0]  %s3, 3072, %s35, [#allocation4], 384, 384, 24
    $region17: #{seq2seq_forward.1} parent=1 // pred_fallthru
      _
    // Predicated region
    $region18: #{seq2seq_forward.1} parent=1 // pred_check
      _
    $region19: #{seq2seq_forward.1} parent=1 // pred_check_branch
      %42 = sbr.rel (0) target = $region21
    $region20: #{seq2seq_forward.1} parent=1 // pred_region
      %s44 = ssub.s32 6144, 6144
      %45 = vsyncadd [#allocation6], %s44
      %s46 = sshll.u32 [#allocation5], 4
      %s47 = int_to_ptr.vmem [resolvable:$true] %s46
      %52 = dma.hbm_to_vmem [thread:$0]  %s4, 6144, %s47, [#allocation6], 384, 384, 24
    $region21: #{seq2seq_forward.1} parent=1 // pred_fallthru
      _
    // Predicated region
    $region22: #{seq2seq_forward.1} parent=1 // pred_check
      _
    $region23: #{seq2seq_forward.1} parent=1 // pred_check_branch
      %54 = sbr.rel (0) target = $region25
    $region24: #{seq2seq_forward.1} parent=1 // pred_region
      _
    $region25: #{seq2seq_forward.1} parent=1 // pred_fallthru
      _
    // Predicated region
    $region26: #{seq2seq_forward.1} parent=1 // pred_check
      _
    $region27: #{seq2seq_forward.1} parent=1 // pred_check_branch
      %56 = sbr.rel (0) target = $region29
    $region28: #{seq2seq_forward.1} parent=1 // pred_region
      _
    $region29: #{seq2seq_forward.1} parent=1 // pred_fallthru
      _
    // Predicated region
    $region30: #{seq2seq_forward.1} parent=1 // pred_check
      _
    $region31: #{seq2seq_forward.1} parent=1 // pred_check_branch
      %58 = sbr.rel (0) target = $region33
    $region32: #{seq2seq_forward.1} parent=1 // pred_region
      _
    $region33: #{seq2seq_forward.1} parent=1 // pred_fallthru
      _
    // Predicated region
    $region34: #{seq2seq_forward.1} parent=1 // pred_check
      _
    $region35: #{seq2seq_forward.1} parent=1 // pred_check_branch
      %60 = sbr.rel (0) target = $region37
    $region36: #{seq2seq_forward.1} parent=1 // pred_region
      %s62 = ssub.s32 3072, 3072
      %63 = vsyncadd [#allocation6], %s62
      %s64 = sshll.u32 [#allocation7], 4
      %s65 = int_to_ptr.vmem [resolvable:$true] %s64
      %70 = dma.hbm_to_vmem [thread:$0]  %s8, 3072, %s65, [#allocation6], 384, 384, 24
    $region37: #{seq2seq_forward.1} parent=1 // pred_fallthru
      _
    // Predicated region
    $region38: #{seq2seq_forward.1} parent=1 // pred_check
      _
    $region39: #{seq2seq_forward.1} parent=1 // pred_check_branch
      %72 = sbr.rel (0) target = $region41
    $region40: #{seq2seq_forward.1} parent=1 // pred_region
      %s74 = ssub.s32 6144, 6144
      %75 = vsyncadd [#allocation9], %s74
      %s76 = sshll.u32 [#allocation8], 4
      %s77 = int_to_ptr.vmem [resolvable:$true] %s76
      %82 = dma.hbm_to_vmem [thread:$0]  %s9, 6144, %s77, [#allocation9], 384, 384, 24
    $region41: #{seq2seq_forward.1} parent=1 // pred_fallthru
      _
    // Predicated region
    $region42: #{seq2seq_forward.1} parent=1 // pred_check
      _
    $region43: #{seq2seq_forward.1} parent=1 // pred_check_branch
      %84 = sbr.rel (0) target = $region45
    $region44: #{seq2seq_forward.1} parent=1 // pred_region
      %s86 = ssub.s32 6144, 6144
      %87 = vsyncadd [#allocation9], %s86
      %s88 = sshll.u32 [#allocation10], 4
      %s89 = int_to_ptr.vmem [resolvable:$true] %s88
      %94 = dma.hbm_to_vmem [thread:$0]  %s10, 6144, %s89, [#allocation9], 384, 384, 24
    $region45: #{seq2seq_forward.1} parent=1 // pred_fallthru
      _
    // Predicated region
    $region46: #{seq2seq_forward.1} parent=1 // pred_check
      _
    $region47: #{seq2seq_forward.1} parent=1 // pred_check_branch
      %96 = sbr.rel (0) target = $region49
    $region48: #{seq2seq_forward.1} parent=1 // pred_region
      _
    $region49: #{seq2seq_forward.1} parent=1 // pred_fallthru
      _
    // Predicated region
    $region50: #{seq2seq_forward.1} parent=1 // pred_check
      _
    $region51: #{seq2seq_forward.1} parent=1 // pred_check_branch
      %98 = sbr.rel (0) target = $region53
    $region52: #{seq2seq_forward.1} parent=1 // pred_region
      _
    $region53: #{seq2seq_forward.1} parent=1 // pred_fallthru
      _
    // Predicated region
    $region54: #{seq2seq_forward.1} parent=1 // pred_check
      _
    $region55: #{seq2seq_forward.1} parent=1 // pred_check_branch
      %100 = sbr.rel (0) target = $region57
    $region56: #{seq2seq_forward.1} parent=1 // pred_region
      _
    $region57: #{seq2seq_forward.1} parent=1 // pred_fallthru
      _
    // Predicated region
    $region58: #{seq2seq_forward.1} parent=1 // pred_check
      _
    $region59: #{seq2seq_forward.1} parent=1 // pred_check_branch
      %102 = sbr.rel (0) target = $region61
    $region60: #{seq2seq_forward.1} parent=1 // pred_region
      _
    $region61: #{seq2seq_forward.1} parent=1 // pred_fallthru
      _
    // Predicated region
    $region62: #{seq2seq_forward.1} parent=1 // pred_check
      _
    $region63: #{seq2seq_forward.1} parent=1 // pred_check_branch
      %104 = sbr.rel (0) target = $region65
    $region64: #{seq2seq_forward.1} parent=1 // pred_region
      %105 = dma.done [#allocation4], 3072
    $region65: #{seq2seq_forward.1} parent=1 // pred_fallthru
      _
    // Predicated region
    $region66: #{seq2seq_forward.1} parent=1 // pred_check
      _
    $region67: #{seq2seq_forward.1} parent=1 // pred_check_branch
      %107 = sbr.rel (0) target = $region69
    $region68: #{seq2seq_forward.1} parent=1 // pred_region
      %108 = dma.done [#allocation6], 6144
    $region69: #{seq2seq_forward.1} parent=1 // pred_fallthru
      _
    // Predicated region
    $region70: #{seq2seq_forward.1} parent=1 // pred_check
      _
    $region71: #{seq2seq_forward.1} parent=1 // pred_check_branch
      %110 = sbr.rel (0) target = $region73
    $region72: #{seq2seq_forward.1} parent=1 // pred_region
      %111 = dma.done [#allocation6], 3072
    $region73: #{seq2seq_forward.1} parent=1 // pred_fallthru
      _
    // Predicated region
    $region74: #{seq2seq_forward.1} parent=1 // pred_check
      _
    $region75: #{seq2seq_forward.1} parent=1 // pred_check_branch
      %113 = sbr.rel (0) target = $region77
    $region76: #{seq2seq_forward.1} parent=1 // pred_region
      %114 = dma.done [#allocation9], 6144
    $region77: #{seq2seq_forward.1} parent=1 // pred_fallthru
      _
    // Predicated region
    $region78: #{seq2seq_forward.1} parent=1 // pred_check
      _
    $region79: #{seq2seq_forward.1} parent=1 // pred_check_branch
      %116 = sbr.rel (0) target = $region81
    $region80: #{seq2seq_forward.1} parent=1 // pred_region
      %117 = dma.done [#allocation9], 6144
    $region81: #{seq2seq_forward.1} parent=1 // pred_fallthru
      _
    %v119 = vld [vmem:[%s2] sm:$0xf]
    %v120 = vld [vmem:[#allocation3] sm:$0xff]
    %v121 = vld [vmem:[#allocation3 + $0x8] sm:$0xff]
    %v122 = vld [vmem:[#allocation3 + $0x10] sm:$0xff]
    %v123 = vld [vmem:[#allocation3 + $0x18] sm:$0xff]
    %v124 = vld [vmem:[#allocation3 + $0x20] sm:$0xff]
    %v125 = vld [vmem:[#allocation3 + $0x28] sm:$0xff]
    %v126 = vld [vmem:[#allocation3 + $0x30] sm:$0xff]
    %v127 = vld [vmem:[#allocation3 + $0x38] sm:$0xff]
    %v128 = vld [vmem:[#allocation3 + $0x40] sm:$0xff]
    %v129 = vld [vmem:[#allocation3 + $0x48] sm:$0xff]
    %v130 = vld [vmem:[#allocation3 + $0x50] sm:$0xff]
    %v131 = vld [vmem:[#allocation3 + $0x58] sm:$0xff]
    %v132 = vld [vmem:[#allocation3 + $0x60] sm:$0xff]
    %v133 = vld [vmem:[#allocation3 + $0x68] sm:$0xff]
    %v134 = vld [vmem:[#allocation3 + $0x70] sm:$0xff]
    %v135 = vld [vmem:[#allocation3 + $0x78] sm:$0xff]
    %v136 = vld [vmem:[#allocation3 + $0x80] sm:$0xff]
    %v137 = vld [vmem:[#allocation3 + $0x88] sm:$0xff]
    %v138 = vld [vmem:[#allocation3 + $0x90] sm:$0xff]
    %v139 = vld [vmem:[#allocation3 + $0x98] sm:$0xff]
    %v140 = vld [vmem:[#allocation3 + $0xa0] sm:$0xff]
    %v141 = vld [vmem:[#allocation3 + $0xa8] sm:$0xff]
    %v142 = vld [vmem:[#allocation3 + $0xb0] sm:$0xff]
    %v143 = vld [vmem:[#allocation3 + $0xb8] sm:$0xff]
    %v144 = vpack.c.bf16 %v119, %v119
    %v145 = vpack.c.bf16 %v123, %v120
    %v146 = vpack.c.bf16 %v124, %v121
    %v147 = vpack.c.bf16 %v125, %v122
    %v148 = vpack.c.bf16 %v129, %v126
    %v149 = vpack.c.bf16 %v130, %v127
    %v150 = vpack.c.bf16 %v131, %v128
    %v151 = vpack.c.bf16 %v135, %v132
    %v152 = vpack.c.bf16 %v136, %v133
    %v153 = vpack.c.bf16 %v137, %v134
    %v154 = vpack.c.bf16 %v141, %v138
    %v155 = vpack.c.bf16 %v142, %v139
    %v156 = vpack.c.bf16 %v143, %v140
    %v157 = vld [vmem:[%s5] sm:$0x7]
    %v159 = vlaneseq
    %v160 = vshrl.u32 %v159, 7
    %v161 = vsub.s32 0, %v160
    %v162 = vrot.slane %v157, %v161
    %v163 = vlaneseq
    %v164 = vshrl.u32 %v163, 7
    %v165 = vsub.s32 1, %v164
    %v166 = vrot.slane %v157, %v165
    %v167 = vlaneseq
    %v168 = vshrl.u32 %v167, 7
    %v169 = vsub.s32 2, %v168
    %v170 = vrot.slane %v157, %v169
    %vm174 = vcmask 523264
    %v176 = vsel %vm174, %v144, 0
    %178 = vmatprep.subr.bf16.mxu0 0
    %179 = vmatpush1.bf16.msra.mxu0 0
    %180 = vmatprep.subr.bf16.mxu0 0
    %181 = vmatpush1.bf16.msra.mxu0 0
    %182 = vmatprep.subr.bf16.mxu0 0
    %183 = vmatpush1.bf16.msra.mxu0 0
    %184 = vmatprep.subr.bf16.mxu0 0
    %185 = vmatpush1.bf16.msra.mxu0 0
    %186 = vmatprep.subr.bf16.mxu0 %v155
    %187 = vmatpush1.bf16.msra.mxu0 %v154
    %188 = vmatprep.subr.bf16.mxu0 %v152
    %189 = vmatpush1.bf16.msra.mxu0 %v151
    %190 = vmatprep.subr.bf16.mxu0 %v149
    %191 = vmatpush1.bf16.msra.mxu0 %v148
    %192 = vmatprep.subr.bf16.mxu0 %v146
    %193 = vmatpush1.bf16.msra.mxu0 %v145
    %194 = vmatprep.subr.bf16.mxu0 0
    %195 = vmatpush2.bf16.msra.mxu0 0
    %196 = vmatprep.subr.bf16.mxu0 0
    %197 = vmatpush2.bf16.msra.mxu0 0
    %198 = vmatprep.subr.bf16.mxu0 0
    %199 = vmatpush2.bf16.msra.mxu0 0
    %200 = vmatprep.subr.bf16.mxu0 0
    %201 = vmatpush2.bf16.msra.mxu0 0
    %202 = vmatprep.subr.bf16.mxu0 0
    %203 = vmatpush2.bf16.msra.mxu0 0
    %204 = vmatprep.subr.bf16.mxu0 0
    %205 = vmatpush2.bf16.msra.mxu0 0
    %206 = vmatprep.subr.bf16.mxu0 0
    %207 = vmatpush2.bf16.msra.mxu0 0
    %208 = vmatprep.subr.bf16.mxu0 0
    %209 = vmatpush2.bf16.msra.mxu0 0
    %210 = vmatprep.mubr.bf16.mxu0 0
    %211 = vmatmul.mubr.bf16.gmra.mxu0 %v176
    %v212 = vpop.f32.mrf.mxu0
    %v213 = vadd.f32 %v162, %v212
    %v214 = vpop.f32.mrf.mxu0
    %v215 = vadd.f32 %v166, %v214
    %v216 = vpop.f32.mrf.mxu0
    %v217 = vpop.f32.mrf.mxu0
    %218 = vdwg.mxu0
    %219 = vmatprep.subr.bf16.mxu0 0
    %220 = vmatpush1.bf16.msra.mxu0 0
    %221 = vmatprep.subr.bf16.mxu0 0
    %222 = vmatpush1.bf16.msra.mxu0 0
    %223 = vmatprep.subr.bf16.mxu0 0
    %224 = vmatpush1.bf16.msra.mxu0 0
    %225 = vmatprep.subr.bf16.mxu0 0
    %226 = vmatpush1.bf16.msra.mxu0 0
    %227 = vmatprep.subr.bf16.mxu0 0
    %228 = vmatpush1.bf16.msra.mxu0 %v156
    %229 = vmatprep.subr.bf16.mxu0 0
    %230 = vmatpush1.bf16.msra.mxu0 %v153
    %231 = vmatprep.subr.bf16.mxu0 0
    %232 = vmatpush1.bf16.msra.mxu0 %v150
    %233 = vmatprep.subr.bf16.mxu0 0
    %234 = vmatpush1.bf16.msra.mxu0 %v147
    %235 = vmatprep.subr.bf16.mxu0 0
    %236 = vmatpush2.bf16.msra.mxu0 0
    %237 = vmatprep.subr.bf16.mxu0 0
    %238 = vmatpush2.bf16.msra.mxu0 0
    %239 = vmatprep.subr.bf16.mxu0 0
    %240 = vmatpush2.bf16.msra.mxu0 0
    %241 = vmatprep.subr.bf16.mxu0 0
    %242 = vmatpush2.bf16.msra.mxu0 0
    %243 = vmatprep.subr.bf16.mxu0 0
    %244 = vmatpush2.bf16.msra.mxu0 0
    %245 = vmatprep.subr.bf16.mxu0 0
    %246 = vmatpush2.bf16.msra.mxu0 0
    %247 = vmatprep.subr.bf16.mxu0 0
    %248 = vmatpush2.bf16.msra.mxu0 0
    %249 = vmatprep.subr.bf16.mxu0 0
    %250 = vmatpush2.bf16.msra.mxu0 0
    %251 = vmatprep.mubr.bf16.mxu0 0
    %252 = vmatmul.mubr.bf16.gmra.mxu0 %v176
    %v253 = vpop.f32.mrf.mxu0
    %v254 = vadd.f32 %v170, %v253
    %v255 = vpop.f32.mrf.mxu0
    %v256 = vpop.f32.mrf.mxu0
    %v257 = vpop.f32.mrf.mxu0
    %258 = vdwg.mxu0
    %v259 = vld [vmem:[%s7] sm:$0xf]
    %v260 = vld [vmem:[#allocation7] sm:$0xff]
    %v261 = vld [vmem:[#allocation7 + $0x8] sm:$0xff]
    %v262 = vld [vmem:[#allocation7 + $0x10] sm:$0xff]
    %v263 = vld [vmem:[#allocation7 + $0x18] sm:$0xff]
    %v264 = vld [vmem:[#allocation7 + $0x20] sm:$0xff]
    %v265 = vld [vmem:[#allocation7 + $0x28] sm:$0xff]
    %v266 = vld [vmem:[#allocation7 + $0x30] sm:$0xff]
    %v267 = vld [vmem:[#allocation7 + $0x38] sm:$0xff]
    %v268 = vld [vmem:[#allocation7 + $0x40] sm:$0xff]
    %v269 = vld [vmem:[#allocation7 + $0x48] sm:$0xff]
    %v270 = vld [vmem:[#allocation7 + $0x50] sm:$0xff]
    %v271 = vld [vmem:[#allocation7 + $0x58] sm:$0xff]
    %v272 = vld [vmem:[#allocation7 + $0x60] sm:$0xff]
    %v273 = vld [vmem:[#allocation7 + $0x68] sm:$0xff]
    %v274 = vld [vmem:[#allocation7 + $0x70] sm:$0xff]
    %v275 = vld [vmem:[#allocation7 + $0x78] sm:$0xff]
    %v276 = vld [vmem:[#allocation7 + $0x80] sm:$0xff]
    %v277 = vld [vmem:[#allocation7 + $0x88] sm:$0xff]
    %v278 = vld [vmem:[#allocation7 + $0x90] sm:$0xff]
    %v279 = vld [vmem:[#allocation7 + $0x98] sm:$0xff]
    %v280 = vld [vmem:[#allocation7 + $0xa0] sm:$0xff]
    %v281 = vld [vmem:[#allocation7 + $0xa8] sm:$0xff]
    %v282 = vld [vmem:[#allocation7 + $0xb0] sm:$0xff]
    %v283 = vld [vmem:[#allocation7 + $0xb8] sm:$0xff]
    %v284 = vpack.c.bf16 %v259, %v259
    %v285 = vpack.c.bf16 %v263, %v260
    %v286 = vpack.c.bf16 %v264, %v261
    %v287 = vpack.c.bf16 %v265, %v262
    %v288 = vpack.c.bf16 %v269, %v266
    %v289 = vpack.c.bf16 %v270, %v267
    %v290 = vpack.c.bf16 %v271, %v268
    %v291 = vpack.c.bf16 %v275, %v272
    %v292 = vpack.c.bf16 %v276, %v273
    %v293 = vpack.c.bf16 %v277, %v274
    %v294 = vpack.c.bf16 %v281, %v278
    %v295 = vpack.c.bf16 %v282, %v279
    %v296 = vpack.c.bf16 %v283, %v280
    %v298 = vsel %vm174, %v284, 0
    %300 = vmatprep.subr.bf16.mxu0 0
    %301 = vmatpush1.bf16.msra.mxu0 0
    %302 = vmatprep.subr.bf16.mxu0 0
    %303 = vmatpush1.bf16.msra.mxu0 0
    %304 = vmatprep.subr.bf16.mxu0 0
    %305 = vmatpush1.bf16.msra.mxu0 0
    %306 = vmatprep.subr.bf16.mxu0 0
    %307 = vmatpush1.bf16.msra.mxu0 0
    %308 = vmatprep.subr.bf16.mxu0 %v295
    %309 = vmatpush1.bf16.msra.mxu0 %v294
    %310 = vmatprep.subr.bf16.mxu0 %v292
    %311 = vmatpush1.bf16.msra.mxu0 %v291
    %312 = vmatprep.subr.bf16.mxu0 %v289
    %313 = vmatpush1.bf16.msra.mxu0 %v288
    %314 = vmatprep.subr.bf16.mxu0 %v286
    %315 = vmatpush1.bf16.msra.mxu0 %v285
    %316 = vmatprep.subr.bf16.mxu0 0
    %317 = vmatpush2.bf16.msra.mxu0 0
    %318 = vmatprep.subr.bf16.mxu0 0
    %319 = vmatpush2.bf16.msra.mxu0 0
    %320 = vmatprep.subr.bf16.mxu0 0
    %321 = vmatpush2.bf16.msra.mxu0 0
    %322 = vmatprep.subr.bf16.mxu0 0
    %323 = vmatpush2.bf16.msra.mxu0 0
    %324 = vmatprep.subr.bf16.mxu0 0
    %325 = vmatpush2.bf16.msra.mxu0 0
    %326 = vmatprep.subr.bf16.mxu0 0
    %327 = vmatpush2.bf16.msra.mxu0 0
    %328 = vmatprep.subr.bf16.mxu0 0
    %329 = vmatpush2.bf16.msra.mxu0 0
    %330 = vmatprep.subr.bf16.mxu0 0
    %331 = vmatpush2.bf16.msra.mxu0 0
    %332 = vmatprep.mubr.bf16.mxu0 0
    %333 = vmatmul.mubr.bf16.gmra.mxu0 %v298
    %v334 = vpop.f32.mrf.mxu0
    %v335 = vadd.f32 0.0, %v334
    %v336 = vpop.f32.mrf.mxu0
    %v337 = vadd.f32 0.0, %v336
    %v338 = vpop.f32.mrf.mxu0
    %v339 = vpop.f32.mrf.mxu0
    %340 = vdwg.mxu0
    %341 = vmatprep.subr.bf16.mxu0 0
    %342 = vmatpush1.bf16.msra.mxu0 0
    %343 = vmatprep.subr.bf16.mxu0 0
    %344 = vmatpush1.bf16.msra.mxu0 0
    %345 = vmatprep.subr.bf16.mxu0 0
    %346 = vmatpush1.bf16.msra.mxu0 0
    %347 = vmatprep.subr.bf16.mxu0 0
    %348 = vmatpush1.bf16.msra.mxu0 0
    %349 = vmatprep.subr.bf16.mxu0 0
    %350 = vmatpush1.bf16.msra.mxu0 %v296
    %351 = vmatprep.subr.bf16.mxu0 0
    %352 = vmatpush1.bf16.msra.mxu0 %v293
    %353 = vmatprep.subr.bf16.mxu0 0
    %354 = vmatpush1.bf16.msra.mxu0 %v290
    %355 = vmatprep.subr.bf16.mxu0 0
    %356 = vmatpush1.bf16.msra.mxu0 %v287
    %357 = vmatprep.subr.bf16.mxu0 0
    %358 = vmatpush2.bf16.msra.mxu0 0
    %359 = vmatprep.subr.bf16.mxu0 0
    %360 = vmatpush2.bf16.msra.mxu0 0
    %361 = vmatprep.subr.bf16.mxu0 0
    %362 = vmatpush2.bf16.msra.mxu0 0
    %363 = vmatprep.subr.bf16.mxu0 0
    %364 = vmatpush2.bf16.msra.mxu0 0
    %365 = vmatprep.subr.bf16.mxu0 0
    %366 = vmatpush2.bf16.msra.mxu0 0
    %367 = vmatprep.subr.bf16.mxu0 0
    %368 = vmatpush2.bf16.msra.mxu0 0
    %369 = vmatprep.subr.bf16.mxu0 0
    %370 = vmatpush2.bf16.msra.mxu0 0
    %371 = vmatprep.subr.bf16.mxu0 0
    %372 = vmatpush2.bf16.msra.mxu0 0
    %373 = vmatprep.mubr.bf16.mxu0 0
    %374 = vmatmul.mubr.bf16.gmra.mxu0 %v298
    %v375 = vpop.f32.mrf.mxu0
    %v376 = vadd.f32 0.0, %v375
    %v377 = vpop.f32.mrf.mxu0
    %v378 = vpop.f32.mrf.mxu0
    %v379 = vpop.f32.mrf.mxu0
    %380 = vdwg.mxu0
    %v381 = vld [vmem:[#allocation5] sm:$0xff]
    %v382 = vld [vmem:[#allocation5 + $0x8] sm:$0xff]
    %v383 = vld [vmem:[#allocation5 + $0x10] sm:$0xff]
    %v384 = vld [vmem:[#allocation5 + $0x18] sm:$0xff]
    %v385 = vld [vmem:[#allocation5 + $0x20] sm:$0xff]
    %v386 = vld [vmem:[#allocation5 + $0x28] sm:$0xff]
    %v387 = vld [vmem:[#allocation5 + $0x30] sm:$0xff]
    %v388 = vld [vmem:[#allocation5 + $0x38] sm:$0xff]
    %v389 = vld [vmem:[#allocation5 + $0x40] sm:$0xff]
    %v390 = vld [vmem:[#allocation5 + $0x48] sm:$0xff]
    %v391 = vld [vmem:[#allocation5 + $0x50] sm:$0xff]
    %v392 = vld [vmem:[#allocation5 + $0x58] sm:$0xff]
    %v393 = vld [vmem:[#allocation5 + $0x60] sm:$0xff]
    %v394 = vld [vmem:[#allocation5 + $0x68] sm:$0xff]
    %v395 = vld [vmem:[#allocation5 + $0x70] sm:$0xff]
    %v396 = vld [vmem:[#allocation5 + $0x78] sm:$0xff]
    %v397 = vld [vmem:[#allocation5 + $0x80] sm:$0xff]
    %v398 = vld [vmem:[#allocation5 + $0x88] sm:$0xff]
    %v399 = vld [vmem:[#allocation5 + $0x90] sm:$0xff]
    %v400 = vld [vmem:[#allocation5 + $0x98] sm:$0xff]
    %v401 = vld [vmem:[#allocation5 + $0xa0] sm:$0xff]
    %v402 = vld [vmem:[#allocation5 + $0xa8] sm:$0xff]
    %v403 = vld [vmem:[#allocation5 + $0xb0] sm:$0xff]
    %v404 = vld [vmem:[#allocation5 + $0xb8] sm:$0xff]
    %v405 = vld [vmem:[#allocation5 + $0xc0] sm:$0xff]
    %v406 = vld [vmem:[#allocation5 + $0xc8] sm:$0xff]
    %v407 = vld [vmem:[#allocation5 + $0xd0] sm:$0xff]
    %v408 = vld [vmem:[#allocation5 + $0xd8] sm:$0xff]
    %v409 = vld [vmem:[#allocation5 + $0xe0] sm:$0xff]
    %v410 = vld [vmem:[#allocation5 + $0xe8] sm:$0xff]
    %v411 = vld [vmem:[#allocation5 + $0xf0] sm:$0xff]
    %v412 = vld [vmem:[#allocation5 + $0xf8] sm:$0xff]
    %v413 = vld [vmem:[#allocation5 + $0x100] sm:$0xff]
    %v414 = vld [vmem:[#allocation5 + $0x108] sm:$0xff]
    %v415 = vld [vmem:[#allocation5 + $0x110] sm:$0xff]
    %v416 = vld [vmem:[#allocation5 + $0x118] sm:$0xff]
    %v417 = vld [vmem:[#allocation5 + $0x120] sm:$0xff]
    %v418 = vld [vmem:[#allocation5 + $0x128] sm:$0xff]
    %v419 = vld [vmem:[#allocation5 + $0x130] sm:$0xff]
    %v420 = vld [vmem:[#allocation5 + $0x138] sm:$0xff]
    %v421 = vld [vmem:[#allocation5 + $0x140] sm:$0xff]
    %v422 = vld [vmem:[#allocation5 + $0x148] sm:$0xff]
    %v423 = vld [vmem:[#allocation5 + $0x150] sm:$0xff]
    %v424 = vld [vmem:[#allocation5 + $0x158] sm:$0xff]
    %v425 = vld [vmem:[#allocation5 + $0x160] sm:$0xff]
    %v426 = vld [vmem:[#allocation5 + $0x168] sm:$0xff]
    %v427 = vld [vmem:[#allocation5 + $0x170] sm:$0xff]
    %v428 = vld [vmem:[#allocation5 + $0x178] sm:$0xff]
    %v429 = vpack.c.bf16 %v384, %v381
    %v430 = vpack.c.bf16 %v385, %v382
    %v431 = vpack.c.bf16 %v386, %v383
    %v432 = vpack.c.bf16 %v390, %v387
    %v433 = vpack.c.bf16 %v391, %v388
    %v434 = vpack.c.bf16 %v392, %v389
    %v435 = vpack.c.bf16 %v396, %v393
    %v436 = vpack.c.bf16 %v397, %v394
    %v437 = vpack.c.bf16 %v398, %v395
    %v438 = vpack.c.bf16 %v402, %v399
    %v439 = vpack.c.bf16 %v403, %v400
    %v440 = vpack.c.bf16 %v404, %v401
    %v441 = vpack.c.bf16 %v408, %v405
    %v442 = vpack.c.bf16 %v409, %v406
    %v443 = vpack.c.bf16 %v410, %v407
    %v444 = vpack.c.bf16 %v414, %v411
    %v445 = vpack.c.bf16 %v415, %v412
    %v446 = vpack.c.bf16 %v416, %v413
    %v447 = vpack.c.bf16 %v420, %v417
    %v448 = vpack.c.bf16 %v421, %v418
    %v449 = vpack.c.bf16 %v422, %v419
    %v450 = vpack.c.bf16 %v426, %v423
    %v451 = vpack.c.bf16 %v427, %v424
    %v452 = vpack.c.bf16 %v428, %v425
    %v453 = vld [vmem:[#allocation10] sm:$0xff]
    %v454 = vld [vmem:[#allocation10 + $0x8] sm:$0xff]
    %v455 = vld [vmem:[#allocation10 + $0x10] sm:$0xff]
    %v456 = vld [vmem:[#allocation10 + $0x18] sm:$0xff]
    %v457 = vld [vmem:[#allocation10 + $0x20] sm:$0xff]
    %v458 = vld [vmem:[#allocation10 + $0x28] sm:$0xff]
    %v459 = vld [vmem:[#allocation10 + $0x30] sm:$0xff]
    %v460 = vld [vmem:[#allocation10 + $0x38] sm:$0xff]
    %v461 = vld [vmem:[#allocation10 + $0x40] sm:$0xff]
    %v462 = vld [vmem:[#allocation10 + $0x48] sm:$0xff]
    %v463 = vld [vmem:[#allocation10 + $0x50] sm:$0xff]
    %v464 = vld [vmem:[#allocation10 + $0x58] sm:$0xff]
    %v465 = vld [vmem:[#allocation10 + $0x60] sm:$0xff]
    %v466 = vld [vmem:[#allocation10 + $0x68] sm:$0xff]
    %v467 = vld [vmem:[#allocation10 + $0x70] sm:$0xff]
    %v468 = vld [vmem:[#allocation10 + $0x78] sm:$0xff]
    %v469 = vld [vmem:[#allocation10 + $0x80] sm:$0xff]
    %v470 = vld [vmem:[#allocation10 + $0x88] sm:$0xff]
    %v471 = vld [vmem:[#allocation10 + $0x90] sm:$0xff]
    %v472 = vld [vmem:[#allocation10 + $0x98] sm:$0xff]
    %v473 = vld [vmem:[#allocation10 + $0xa0] sm:$0xff]
    %v474 = vld [vmem:[#allocation10 + $0xa8] sm:$0xff]
    %v475 = vld [vmem:[#allocation10 + $0xb0] sm:$0xff]
    %v476 = vld [vmem:[#allocation10 + $0xb8] sm:$0xff]
    %v477 = vld [vmem:[#allocation10 + $0xc0] sm:$0xff]
    %v478 = vld [vmem:[#allocation10 + $0xc8] sm:$0xff]
    %v479 = vld [vmem:[#allocation10 + $0xd0] sm:$0xff]
    %v480 = vld [vmem:[#allocation10 + $0xd8] sm:$0xff]
    %v481 = vld [vmem:[#allocation10 + $0xe0] sm:$0xff]
    %v482 = vld [vmem:[#allocation10 + $0xe8] sm:$0xff]
    %v483 = vld [vmem:[#allocation10 + $0xf0] sm:$0xff]
    %v484 = vld [vmem:[#allocation10 + $0xf8] sm:$0xff]
    %v485 = vld [vmem:[#allocation10 + $0x100] sm:$0xff]
    %v486 = vld [vmem:[#allocation10 + $0x108] sm:$0xff]
    %v487 = vld [vmem:[#allocation10 + $0x110] sm:$0xff]
    %v488 = vld [vmem:[#allocation10 + $0x118] sm:$0xff]
    %v489 = vld [vmem:[#allocation10 + $0x120] sm:$0xff]
    %v490 = vld [vmem:[#allocation10 + $0x128] sm:$0xff]
    %v491 = vld [vmem:[#allocation10 + $0x130] sm:$0xff]
    %v492 = vld [vmem:[#allocation10 + $0x138] sm:$0xff]
    %v493 = vld [vmem:[#allocation10 + $0x140] sm:$0xff]
    %v494 = vld [vmem:[#allocation10 + $0x148] sm:$0xff]
    %v495 = vld [vmem:[#allocation10 + $0x150] sm:$0xff]
    %v496 = vld [vmem:[#allocation10 + $0x158] sm:$0xff]
    %v497 = vld [vmem:[#allocation10 + $0x160] sm:$0xff]
    %v498 = vld [vmem:[#allocation10 + $0x168] sm:$0xff]
    %v499 = vld [vmem:[#allocation10 + $0x170] sm:$0xff]
    %v500 = vld [vmem:[#allocation10 + $0x178] sm:$0xff]
    %v501 = vpack.c.bf16 %v456, %v453
    %v502 = vpack.c.bf16 %v457, %v454
    %v503 = vpack.c.bf16 %v458, %v455
    %v504 = vpack.c.bf16 %v462, %v459
    %v505 = vpack.c.bf16 %v463, %v460
    %v506 = vpack.c.bf16 %v464, %v461
    %v507 = vpack.c.bf16 %v468, %v465
    %v508 = vpack.c.bf16 %v469, %v466
    %v509 = vpack.c.bf16 %v470, %v467
    %v510 = vpack.c.bf16 %v474, %v471
    %v511 = vpack.c.bf16 %v475, %v472
    %v512 = vpack.c.bf16 %v476, %v473
    %v513 = vpack.c.bf16 %v480, %v477
    %v514 = vpack.c.bf16 %v481, %v478
    %v515 = vpack.c.bf16 %v482, %v479
    %v516 = vpack.c.bf16 %v486, %v483
    %v517 = vpack.c.bf16 %v487, %v484
    %v518 = vpack.c.bf16 %v488, %v485
    %v519 = vpack.c.bf16 %v492, %v489
    %v520 = vpack.c.bf16 %v493, %v490
    %v521 = vpack.c.bf16 %v494, %v491
    %v522 = vpack.c.bf16 %v498, %v495
    %v523 = vpack.c.bf16 %v499, %v496
    %v524 = vpack.c.bf16 %v500, %v497
    %v525 = vld [vmem:[%s6] sm:$0x7]
    %v526 = vld [vmem:[%s12] sm:$0x7]
    %v527 = vld [vmem:[%s0] sm:$0x3]
    %v528 = vld [vmem:[%s1] sm:$0x3]
    %vm529 = vcmp.eq.s32.totalorder %v527, 0
    %v530 = vsel %vm529, 1, 0
    %v531 = vcvt.s32.f32 %v530
    %533 = vset.pattern.permute.xlu0 0
    %534 = vperm.xlu0 %533, %v531
    %v535 = vpop.permute.xlu0 %534
    %v537 = vlaneseq
    %v538 = vshrl.u32 %v537, 7
    %v539 = vsub.s32 0, %v538
    %v540 = vrot.slane %v213, %v539
    %v541 = vlaneseq
    %v542 = vshrl.u32 %v541, 7
    %v543 = vsub.s32 0, %v542
    %v544 = vrot.slane %v215, %v543
    %v545 = vlaneseq
    %v546 = vshrl.u32 %v545, 7
    %v547 = vsub.s32 0, %v546
    %v548 = vrot.slane %v254, %v547
    %v549 = vmul.f32 %v535, %v540
    %v550 = vmul.f32 %v535, %v544
    %v551 = vmul.f32 %v535, %v548
    %vm552 = vcmp.eq.s32.totalorder %v527, 1
    %v553 = vsel %vm552, 1, 0
    %v554 = vcvt.s32.f32 %v553
    %556 = vset.pattern.permute.xlu0 0
    %557 = vperm.xlu0 %556, %v554
    %v558 = vpop.permute.xlu0 %557
    %v560 = vlaneseq
    %v561 = vshrl.u32 %v560, 7
    %v562 = vsub.s32 1, %v561
    %v563 = vrot.slane %v213, %v562
    %v564 = vlaneseq
    %v565 = vshrl.u32 %v564, 7
    %v566 = vsub.s32 1, %v565
    %v567 = vrot.slane %v215, %v566
    %v568 = vlaneseq
    %v569 = vshrl.u32 %v568, 7
    %v570 = vsub.s32 1, %v569
    %v571 = vrot.slane %v254, %v570
    %v572 = vmul.f32 %v558, %v563
    %v573 = vmul.f32 %v558, %v567
    %v574 = vmul.f32 %v558, %v571
    %v575 = vadd.f32 %v549, %v572
    %v576 = vadd.f32 %v550, %v573
    %v577 = vadd.f32 %v551, %v574
    %vm578 = vcmp.eq.s32.totalorder %v527, 2
    %v579 = vsel %vm578, 1, 0
    %v580 = vcvt.s32.f32 %v579
    %582 = vset.pattern.permute.xlu0 0
    %583 = vperm.xlu0 %582, %v580
    %v584 = vpop.permute.xlu0 %583
    %v586 = vlaneseq
    %v587 = vshrl.u32 %v586, 7
    %v588 = vsub.s32 2, %v587
    %v589 = vrot.slane %v213, %v588
    %v590 = vlaneseq
    %v591 = vshrl.u32 %v590, 7
    %v592 = vsub.s32 2, %v591
    %v593 = vrot.slane %v215, %v592
    %v594 = vlaneseq
    %v595 = vshrl.u32 %v594, 7
    %v596 = vsub.s32 2, %v595
    %v597 = vrot.slane %v254, %v596
    %v598 = vmul.f32 %v584, %v589
    %v599 = vmul.f32 %v584, %v593
    %v600 = vmul.f32 %v584, %v597
    %v601 = vadd.f32 %v575, %v598
    %v602 = vadd.f32 %v576, %v599
    %v603 = vadd.f32 %v577, %v600
    %vm604 = vcmp.eq.s32.totalorder %v527, 3
    %v605 = vsel %vm604, 1, 0
    %v606 = vcvt.s32.f32 %v605
    %608 = vset.pattern.permute.xlu0 0
    %609 = vperm.xlu0 %608, %v606
    %v610 = vpop.permute.xlu0 %609
    %v612 = vlaneseq
    %v613 = vshrl.u32 %v612, 7
    %v614 = vsub.s32 3, %v613
    %v615 = vrot.slane %v213, %v614
    %v616 = vlaneseq
    %v617 = vshrl.u32 %v616, 7
    %v618 = vsub.s32 3, %v617
    %v619 = vrot.slane %v215, %v618
    %v620 = vlaneseq
    %v621 = vshrl.u32 %v620, 7
    %v622 = vsub.s32 3, %v621
    %v623 = vrot.slane %v254, %v622
    %v624 = vmul.f32 %v610, %v615
    %v625 = vmul.f32 %v610, %v619
    %v626 = vmul.f32 %v610, %v623
    %v627 = vadd.f32 %v601, %v624
    %v628 = vadd.f32 %v602, %v625
    %v629 = vadd.f32 %v603, %v626
    %630 = vset.pattern.permute.xlu0 1
    %631 = vperm.xlu0 %630, %v531
    %v632 = vpop.permute.xlu0 %631
    %v634 = vmul.f32 %v632, %v540
    %v635 = vmul.f32 %v632, %v544
    %v636 = vmul.f32 %v632, %v548
    %637 = vset.pattern.permute.xlu0 1
    %638 = vperm.xlu0 %637, %v554
    %v639 = vpop.permute.xlu0 %638
    %v641 = vmul.f32 %v639, %v563
    %v642 = vmul.f32 %v639, %v567
    %v643 = vmul.f32 %v639, %v571
    %v644 = vadd.f32 %v634, %v641
    %v645 = vadd.f32 %v635, %v642
    %v646 = vadd.f32 %v636, %v643
    %647 = vset.pattern.permute.xlu0 1
    %648 = vperm.xlu0 %647, %v580
    %v649 = vpop.permute.xlu0 %648
    %v651 = vmul.f32 %v649, %v589
    %v652 = vmul.f32 %v649, %v593
    %v653 = vmul.f32 %v649, %v597
    %v654 = vadd.f32 %v644, %v651
    %v655 = vadd.f32 %v645, %v652
    %v656 = vadd.f32 %v646, %v653
    %657 = vset.pattern.permute.xlu0 1
    %658 = vperm.xlu0 %657, %v606
    %v659 = vpop.permute.xlu0 %658
    %v661 = vmul.f32 %v659, %v615
    %v662 = vmul.f32 %v659, %v619
    %v663 = vmul.f32 %v659, %v623
    %v664 = vadd.f32 %v654, %v661
    %v665 = vadd.f32 %v655, %v662
    %v666 = vadd.f32 %v656, %v663
    %667 = vset.pattern.permute.xlu0 2
    %668 = vperm.xlu0 %667, %v531
    %v669 = vpop.permute.xlu0 %668
    %v671 = vmul.f32 %v669, %v540
    %v672 = vmul.f32 %v669, %v544
    %v673 = vmul.f32 %v669, %v548
    %674 = vset.pattern.permute.xlu0 2
    %675 = vperm.xlu0 %674, %v554
    %v676 = vpop.permute.xlu0 %675
    %v678 = vmul.f32 %v676, %v563
    %v679 = vmul.f32 %v676, %v567
    %v680 = vmul.f32 %v676, %v571
    %v681 = vadd.f32 %v671, %v678
    %v682 = vadd.f32 %v672, %v679
    %v683 = vadd.f32 %v673, %v680
    %684 = vset.pattern.permute.xlu0 2
    %685 = vperm.xlu0 %684, %v580
    %v686 = vpop.permute.xlu0 %685
    %v688 = vmul.f32 %v686, %v589
    %v689 = vmul.f32 %v686, %v593
    %v690 = vmul.f32 %v686, %v597
    %v691 = vadd.f32 %v681, %v688
    %v692 = vadd.f32 %v682, %v689
    %v693 = vadd.f32 %v683, %v690
    %694 = vset.pattern.permute.xlu0 2
    %695 = vperm.xlu0 %694, %v606
    %v696 = vpop.permute.xlu0 %695
    %v698 = vmul.f32 %v696, %v615
    %v699 = vmul.f32 %v696, %v619
    %v700 = vmul.f32 %v696, %v623
    %v701 = vadd.f32 %v691, %v698
    %v702 = vadd.f32 %v692, %v699
    %v703 = vadd.f32 %v693, %v700
    %704 = vset.pattern.permute.xlu0 3
    %705 = vperm.xlu0 %704, %v531
    %v706 = vpop.permute.xlu0 %705
    %v708 = vmul.f32 %v706, %v540
    %v709 = vmul.f32 %v706, %v544
    %v710 = vmul.f32 %v706, %v548
    %711 = vset.pattern.permute.xlu0 3
    %712 = vperm.xlu0 %711, %v554
    %v713 = vpop.permute.xlu0 %712
    %v715 = vmul.f32 %v713, %v563
    %v716 = vmul.f32 %v713, %v567
    %v717 = vmul.f32 %v713, %v571
    %v718 = vadd.f32 %v708, %v715
    %v719 = vadd.f32 %v709, %v716
    %v720 = vadd.f32 %v710, %v717
    %721 = vset.pattern.permute.xlu0 3
    %722 = vperm.xlu0 %721, %v580
    %v723 = vpop.permute.xlu0 %722
    %v725 = vmul.f32 %v723, %v589
    %v726 = vmul.f32 %v723, %v593
    %v727 = vmul.f32 %v723, %v597
    %v728 = vadd.f32 %v718, %v725
    %v729 = vadd.f32 %v719, %v726
    %v730 = vadd.f32 %v720, %v727
    %731 = vset.pattern.permute.xlu0 3
    %732 = vperm.xlu0 %731, %v606
    %v733 = vpop.permute.xlu0 %732
    %v735 = vmul.f32 %v733, %v615
    %v736 = vmul.f32 %v733, %v619
    %v737 = vmul.f32 %v733, %v623
    %v738 = vadd.f32 %v728, %v735
    %v739 = vadd.f32 %v729, %v736
    %v740 = vadd.f32 %v730, %v737
    %741 = vset.pattern.permute.xlu0 4
    %742 = vperm.xlu0 %741, %v531
    %v743 = vpop.permute.xlu0 %742
    %v745 = vmul.f32 %v743, %v540
    %v746 = vmul.f32 %v743, %v544
    %v747 = vmul.f32 %v743, %v548
    %748 = vset.pattern.permute.xlu0 4
    %749 = vperm.xlu0 %748, %v554
    %v750 = vpop.permute.xlu0 %749
    %v752 = vmul.f32 %v750, %v563
    %v753 = vmul.f32 %v750, %v567
    %v754 = vmul.f32 %v750, %v571
    %v755 = vadd.f32 %v745, %v752
    %v756 = vadd.f32 %v746, %v753
    %v757 = vadd.f32 %v747, %v754
    %758 = vset.pattern.permute.xlu0 4
    %759 = vperm.xlu0 %758, %v580
    %v760 = vpop.permute.xlu0 %759
    %v762 = vmul.f32 %v760, %v589
    %v763 = vmul.f32 %v760, %v593
    %v764 = vmul.f32 %v760, %v597
    %v765 = vadd.f32 %v755, %v762
    %v766 = vadd.f32 %v756, %v763
    %v767 = vadd.f32 %v757, %v764
    %768 = vset.pattern.permute.xlu0 4
    %769 = vperm.xlu0 %768, %v606
    %v770 = vpop.permute.xlu0 %769
    %v772 = vmul.f32 %v770, %v615
    %v773 = vmul.f32 %v770, %v619
    %v774 = vmul.f32 %v770, %v623
    %v775 = vadd.f32 %v765, %v772
    %v776 = vadd.f32 %v766, %v773
    %v777 = vadd.f32 %v767, %v774
    %778 = vset.pattern.permute.xlu0 5
    %779 = vperm.xlu0 %778, %v531
    %v780 = vpop.permute.xlu0 %779
    %v782 = vmul.f32 %v780, %v540
    %v783 = vmul.f32 %v780, %v544
    %v784 = vmul.f32 %v780, %v548
    %785 = vset.pattern.permute.xlu0 5
    %786 = vperm.xlu0 %785, %v554
    %v787 = vpop.permute.xlu0 %786
    %v789 = vmul.f32 %v787, %v563
    %v790 = vmul.f32 %v787, %v567
    %v791 = vmul.f32 %v787, %v571
    %v792 = vadd.f32 %v782, %v789
    %v793 = vadd.f32 %v783, %v790
    %v794 = vadd.f32 %v784, %v791
    %795 = vset.pattern.permute.xlu0 5
    %796 = vperm.xlu0 %795, %v580
    %v797 = vpop.permute.xlu0 %796
    %v799 = vmul.f32 %v797, %v589
    %v800 = vmul.f32 %v797, %v593
    %v801 = vmul.f32 %v797, %v597
    %v802 = vadd.f32 %v792, %v799
    %v803 = vadd.f32 %v793, %v800
    %v804 = vadd.f32 %v794, %v801
    %805 = vset.pattern.permute.xlu0 5
    %806 = vperm.xlu0 %805, %v606
    %v807 = vpop.permute.xlu0 %806
    %v809 = vmul.f32 %v807, %v615
    %v810 = vmul.f32 %v807, %v619
    %v811 = vmul.f32 %v807, %v623
    %v812 = vadd.f32 %v802, %v809
    %v813 = vadd.f32 %v803, %v810
    %v814 = vadd.f32 %v804, %v811
    %815 = vset.pattern.permute.xlu0 6
    %816 = vperm.xlu0 %815, %v531
    %v817 = vpop.permute.xlu0 %816
    %v819 = vmul.f32 %v817, %v540
    %v820 = vmul.f32 %v817, %v544
    %v821 = vmul.f32 %v817, %v548
    %822 = vset.pattern.permute.xlu0 6
    %823 = vperm.xlu0 %822, %v554
    %v824 = vpop.permute.xlu0 %823
    %v826 = vmul.f32 %v824, %v563
    %v827 = vmul.f32 %v824, %v567
    %v828 = vmul.f32 %v824, %v571
    %v829 = vadd.f32 %v819, %v826
    %v830 = vadd.f32 %v820, %v827
    %v831 = vadd.f32 %v821, %v828
    %832 = vset.pattern.permute.xlu0 6
    %833 = vperm.xlu0 %832, %v580
    %v834 = vpop.permute.xlu0 %833
    %v836 = vmul.f32 %v834, %v589
    %v837 = vmul.f32 %v834, %v593
    %v838 = vmul.f32 %v834, %v597
    %v839 = vadd.f32 %v829, %v836
    %v840 = vadd.f32 %v830, %v837
    %v841 = vadd.f32 %v831, %v838
    %842 = vset.pattern.permute.xlu0 6
    %843 = vperm.xlu0 %842, %v606
    %v844 = vpop.permute.xlu0 %843
    %v846 = vmul.f32 %v844, %v615
    %v847 = vmul.f32 %v844, %v619
    %v848 = vmul.f32 %v844, %v623
    %v849 = vadd.f32 %v839, %v846
    %v850 = vadd.f32 %v840, %v847
    %v851 = vadd.f32 %v841, %v848
    %852 = vset.pattern.permute.xlu0 7
    %853 = vperm.xlu0 %852, %v531
    %v854 = vpop.permute.xlu0 %853
    %v856 = vmul.f32 %v854, %v540
    %v857 = vmul.f32 %v854, %v544
    %v858 = vmul.f32 %v854, %v548
    %859 = vset.pattern.permute.xlu0 7
    %860 = vperm.xlu0 %859, %v554
    %v861 = vpop.permute.xlu0 %860
    %v863 = vmul.f32 %v861, %v563
    %v864 = vmul.f32 %v861, %v567
    %v865 = vmul.f32 %v861, %v571
    %v866 = vadd.f32 %v856, %v863
    %v867 = vadd.f32 %v857, %v864
    %v868 = vadd.f32 %v858, %v865
    %869 = vset.pattern.permute.xlu0 7
    %870 = vperm.xlu0 %869, %v580
    %v871 = vpop.permute.xlu0 %870
    %v873 = vmul.f32 %v871, %v589
    %v874 = vmul.f32 %v871, %v593
    %v875 = vmul.f32 %v871, %v597
    %v876 = vadd.f32 %v866, %v873
    %v877 = vadd.f32 %v867, %v874
    %v878 = vadd.f32 %v868, %v875
    %879 = vset.pattern.permute.xlu0 7
    %880 = vperm.xlu0 %879, %v606
    %v881 = vpop.permute.xlu0 %880
    %v883 = vmul.f32 %v881, %v615
    %v884 = vmul.f32 %v881, %v619
    %v885 = vmul.f32 %v881, %v623
    %v886 = vadd.f32 %v876, %v883
    %v887 = vadd.f32 %v877, %v884
    %v888 = vadd.f32 %v878, %v885
    %v890 = vlaneseq
    %v891 = vshrl.u32 %v890, 7
    %v892 = vsub.s32 0, %v891
    %v893 = vrot.slane %v525, %v892
    %v894 = vlaneseq
    %v895 = vshrl.u32 %v894, 7
    %v896 = vsub.s32 1, %v895
    %v897 = vrot.slane %v525, %v896
    %v898 = vlaneseq
    %v899 = vshrl.u32 %v898, 7
    %v900 = vsub.s32 2, %v899
    %v901 = vrot.slane %v525, %v900
    %905 = vmatprep.subr.bf16.mxu0 %v451
    %906 = vmatpush1.bf16.msra.mxu0 %v450
    %907 = vmatprep.subr.bf16.mxu0 %v448
    %908 = vmatpush1.bf16.msra.mxu0 %v447
    %909 = vmatprep.subr.bf16.mxu0 %v445
    %910 = vmatpush1.bf16.msra.mxu0 %v444
    %911 = vmatprep.subr.bf16.mxu0 %v442
    %912 = vmatpush1.bf16.msra.mxu0 %v441
    %913 = vmatprep.subr.bf16.mxu0 %v439
    %914 = vmatpush1.bf16.msra.mxu0 %v438
    %915 = vmatprep.subr.bf16.mxu0 %v436
    %916 = vmatpush1.bf16.msra.mxu0 %v435
    %917 = vmatprep.subr.bf16.mxu0 %v433
    %918 = vmatpush1.bf16.msra.mxu0 %v432
    %919 = vmatprep.subr.bf16.mxu0 %v430
    %920 = vmatpush1.bf16.msra.mxu0 %v429
    %921 = vmatprep.subr.bf16.mxu0 0
    %922 = vmatpush2.bf16.msra.mxu0 0
    %923 = vmatprep.subr.bf16.mxu0 0
    %924 = vmatpush2.bf16.msra.mxu0 0
    %925 = vmatprep.subr.bf16.mxu0 0
    %926 = vmatpush2.bf16.msra.mxu0 0
    %927 = vmatprep.subr.bf16.mxu0 0
    %928 = vmatpush2.bf16.msra.mxu0 0
    %929 = vmatprep.subr.bf16.mxu0 0
    %930 = vmatpush2.bf16.msra.mxu0 0
    %931 = vmatprep.subr.bf16.mxu0 0
    %932 = vmatpush2.bf16.msra.mxu0 0
    %933 = vmatprep.subr.bf16.mxu0 0
    %934 = vmatpush2.bf16.msra.mxu0 0
    %935 = vmatprep.subr.bf16.mxu0 0
    %936 = vmatpush2.bf16.msra.mxu0 0
    %937 = vmatprep.mubr.bf16.mxu0 0
    %938 = vmatmul.mubr.bf16.gmra.mxu0 0
    %v939 = vpop.f32.mrf.mxu0
    %v940 = vadd.f32 %v893, %v939
    %v941 = vpop.f32.mrf.mxu0
    %v942 = vadd.f32 %v897, %v941
    %v943 = vpop.f32.mrf.mxu0
    %v944 = vpop.f32.mrf.mxu0
    %945 = vdwg.mxu0
    %946 = vmatprep.subr.bf16.mxu0 0
    %947 = vmatpush1.bf16.msra.mxu0 %v452
    %948 = vmatprep.subr.bf16.mxu0 0
    %949 = vmatpush1.bf16.msra.mxu0 %v449
    %950 = vmatprep.subr.bf16.mxu0 0
    %951 = vmatpush1.bf16.msra.mxu0 %v446
    %952 = vmatprep.subr.bf16.mxu0 0
    %953 = vmatpush1.bf16.msra.mxu0 %v443
    %954 = vmatprep.subr.bf16.mxu0 0
    %955 = vmatpush1.bf16.msra.mxu0 %v440
    %956 = vmatprep.subr.bf16.mxu0 0
    %957 = vmatpush1.bf16.msra.mxu0 %v437
    %958 = vmatprep.subr.bf16.mxu0 0
    %959 = vmatpush1.bf16.msra.mxu0 %v434
    %960 = vmatprep.subr.bf16.mxu0 0
    %961 = vmatpush1.bf16.msra.mxu0 %v431
    %962 = vmatprep.subr.bf16.mxu0 0
    %963 = vmatpush2.bf16.msra.mxu0 0
    %964 = vmatprep.subr.bf16.mxu0 0
    %965 = vmatpush2.bf16.msra.mxu0 0
    %966 = vmatprep.subr.bf16.mxu0 0
    %967 = vmatpush2.bf16.msra.mxu0 0
    %968 = vmatprep.subr.bf16.mxu0 0
    %969 = vmatpush2.bf16.msra.mxu0 0
    %970 = vmatprep.subr.bf16.mxu0 0
    %971 = vmatpush2.bf16.msra.mxu0 0
    %972 = vmatprep.subr.bf16.mxu0 0
    %973 = vmatpush2.bf16.msra.mxu0 0
    %974 = vmatprep.subr.bf16.mxu0 0
    %975 = vmatpush2.bf16.msra.mxu0 0
    %976 = vmatprep.subr.bf16.mxu0 0
    %977 = vmatpush2.bf16.msra.mxu0 0
    %978 = vmatprep.mubr.bf16.mxu0 0
    %979 = vmatmul.mubr.bf16.gmra.mxu0 0
    %v980 = vpop.f32.mrf.mxu0
    %v981 = vadd.f32 %v901, %v980
    %v982 = vpop.f32.mrf.mxu0
    %v983 = vpop.f32.mrf.mxu0
    %v984 = vpop.f32.mrf.mxu0
    %985 = vdwg.mxu0
    %v986 = vadd.f32 %v627, %v940
    %v987 = vxor.u32 %v986, 2147483648
    %v988 = vmul.f32 %v987, 1.442695
    %v989 = vpow.pop %v988
    %v990 = vadd.f32 %v989, 1.0
    %v991 = vrcp.pop %v990
    %v992 = vmul.f32 1.0, %v991
    %v993 = vadd.f32 %v628, %v942
    %v994 = vxor.u32 %v993, 2147483648
    %v995 = vmul.f32 %v994, 1.442695
    %v996 = vpow.pop %v995
    %v997 = vadd.f32 %v996, 1.0
    %v998 = vrcp.pop %v997
    %v999 = vmul.f32 1.0, %v998
    %v1000 = vmul.f32 %v992, %v981
    %v1001 = vadd.f32 %v629, %v1000
    %v1002 = vtanh.pop %v1001
    %v1003 = vsub.f32 1.0, %v999
    %v1004 = vmul.f32 %v1003, %v1002
    %v1005 = vmul.f32 %v999, 0.0
    %v1006 = vadd.f32 %v1004, %v1005
    %v1007 = vpack.c.bf16 %v1006, %v1006
    %1008 = vmatprep.subr.bf16.mxu0 %v451
    %1009 = vmatpush1.bf16.msra.mxu0 %v450
    %1010 = vmatprep.subr.bf16.mxu0 %v448
    %1011 = vmatpush1.bf16.msra.mxu0 %v447
    %1012 = vmatprep.subr.bf16.mxu0 %v445
    %1013 = vmatpush1.bf16.msra.mxu0 %v444
    %1014 = vmatprep.subr.bf16.mxu0 %v442
    %1015 = vmatpush1.bf16.msra.mxu0 %v441
    %1016 = vmatprep.subr.bf16.mxu0 %v439
    %1017 = vmatpush1.bf16.msra.mxu0 %v438
    %1018 = vmatprep.subr.bf16.mxu0 %v436
    %1019 = vmatpush1.bf16.msra.mxu0 %v435
    %1020 = vmatprep.subr.bf16.mxu0 %v433
    %1021 = vmatpush1.bf16.msra.mxu0 %v432
    %1022 = vmatprep.subr.bf16.mxu0 %v430
    %1023 = vmatpush1.bf16.msra.mxu0 %v429
    %1024 = vmatprep.subr.bf16.mxu0 0
    %1025 = vmatpush2.bf16.msra.mxu0 0
    %1026 = vmatprep.subr.bf16.mxu0 0
    %1027 = vmatpush2.bf16.msra.mxu0 0
    %1028 = vmatprep.subr.bf16.mxu0 0
    %1029 = vmatpush2.bf16.msra.mxu0 0
    %1030 = vmatprep.subr.bf16.mxu0 0
    %1031 = vmatpush2.bf16.msra.mxu0 0
    %1032 = vmatprep.subr.bf16.mxu0 0
    %1033 = vmatpush2.bf16.msra.mxu0 0
    %1034 = vmatprep.subr.bf16.mxu0 0
    %1035 = vmatpush2.bf16.msra.mxu0 0
    %1036 = vmatprep.subr.bf16.mxu0 0
    %1037 = vmatpush2.bf16.msra.mxu0 0
    %1038 = vmatprep.subr.bf16.mxu0 0
    %1039 = vmatpush2.bf16.msra.mxu0 0
    %1040 = vmatprep.mubr.bf16.mxu0 0
    %1041 = vmatmul.mubr.bf16.gmra.mxu0 %v1007
    %v1042 = vpop.f32.mrf.mxu0
    %v1043 = vadd.f32 %v893, %v1042
    %v1044 = vpop.f32.mrf.mxu0
    %v1045 = vadd.f32 %v897, %v1044
    %v1046 = vpop.f32.mrf.mxu0
    %v1047 = vpop.f32.mrf.mxu0
    %1048 = vdwg.mxu0
    %1049 = vmatprep.subr.bf16.mxu0 0
    %1050 = vmatpush1.bf16.msra.mxu0 %v452
    %1051 = vmatprep.subr.bf16.mxu0 0
    %1052 = vmatpush1.bf16.msra.mxu0 %v449
    %1053 = vmatprep.subr.bf16.mxu0 0
    %1054 = vmatpush1.bf16.msra.mxu0 %v446
    %1055 = vmatprep.subr.bf16.mxu0 0
    %1056 = vmatpush1.bf16.msra.mxu0 %v443
    %1057 = vmatprep.subr.bf16.mxu0 0
    %1058 = vmatpush1.bf16.msra.mxu0 %v440
    %1059 = vmatprep.subr.bf16.mxu0 0
    %1060 = vmatpush1.bf16.msra.mxu0 %v437
    %1061 = vmatprep.subr.bf16.mxu0 0
    %1062 = vmatpush1.bf16.msra.mxu0 %v434
    %1063 = vmatprep.subr.bf16.mxu0 0
    %1064 = vmatpush1.bf16.msra.mxu0 %v431
    %1065 = vmatprep.subr.bf16.mxu0 0
    %1066 = vmatpush2.bf16.msra.mxu0 0
    %1067 = vmatprep.subr.bf16.mxu0 0
    %1068 = vmatpush2.bf16.msra.mxu0 0
    %1069 = vmatprep.subr.bf16.mxu0 0
    %1070 = vmatpush2.bf16.msra.mxu0 0
    %1071 = vmatprep.subr.bf16.mxu0 0
    %1072 = vmatpush2.bf16.msra.mxu0 0
    %1073 = vmatprep.subr.bf16.mxu0 0
    %1074 = vmatpush2.bf16.msra.mxu0 0
    %1075 = vmatprep.subr.bf16.mxu0 0
    %1076 = vmatpush2.bf16.msra.mxu0 0
    %1077 = vmatprep.subr.bf16.mxu0 0
    %1078 = vmatpush2.bf16.msra.mxu0 0
    %1079 = vmatprep.subr.bf16.mxu0 0
    %1080 = vmatpush2.bf16.msra.mxu0 0
    %1081 = vmatprep.mubr.bf16.mxu0 0
    %1082 = vmatmul.mubr.bf16.gmra.mxu0 %v1007
    %v1083 = vpop.f32.mrf.mxu0
    %v1084 = vadd.f32 %v901, %v1083
    %v1085 = vpop.f32.mrf.mxu0
    %v1086 = vpop.f32.mrf.mxu0
    %v1087 = vpop.f32.mrf.mxu0
    %1088 = vdwg.mxu0
    %v1089 = vadd.f32 %v664, %v1043
    %v1090 = vxor.u32 %v1089, 2147483648
    %v1091 = vmul.f32 %v1090, 1.442695
    %v1092 = vpow.pop %v1091
    %v1093 = vadd.f32 %v1092, 1.0
    %v1094 = vrcp.pop %v1093
    %v1095 = vmul.f32 1.0, %v1094
    %v1096 = vadd.f32 %v665, %v1045
    %v1097 = vxor.u32 %v1096, 2147483648
    %v1098 = vmul.f32 %v1097, 1.442695
    %v1099 = vpow.pop %v1098
    %v1100 = vadd.f32 %v1099, 1.0
    %v1101 = vrcp.pop %v1100
    %v1102 = vmul.f32 1.0, %v1101
    %v1103 = vmul.f32 %v1095, %v1084
    %v1104 = vadd.f32 %v666, %v1103
    %v1105 = vtanh.pop %v1104
    %v1106 = vsub.f32 1.0, %v1102
    %v1107 = vmul.f32 %v1106, %v1105
    %v1108 = vmul.f32 %v1102, %v1006
    %v1109 = vadd.f32 %v1107, %v1108
    %v1110 = vpack.c.bf16 %v1109, %v1109
    %1111 = vmatprep.subr.bf16.mxu0 %v451
    %1112 = vmatpush1.bf16.msra.mxu0 %v450
    %1113 = vmatprep.subr.bf16.mxu0 %v448
    %1114 = vmatpush1.bf16.msra.mxu0 %v447
    %1115 = vmatprep.subr.bf16.mxu0 %v445
    %1116 = vmatpush1.bf16.msra.mxu0 %v444
    %1117 = vmatprep.subr.bf16.mxu0 %v442
    %1118 = vmatpush1.bf16.msra.mxu0 %v441
    %1119 = vmatprep.subr.bf16.mxu0 %v439
    %1120 = vmatpush1.bf16.msra.mxu0 %v438
    %1121 = vmatprep.subr.bf16.mxu0 %v436
    %1122 = vmatpush1.bf16.msra.mxu0 %v435
    %1123 = vmatprep.subr.bf16.mxu0 %v433
    %1124 = vmatpush1.bf16.msra.mxu0 %v432
    %1125 = vmatprep.subr.bf16.mxu0 %v430
    %1126 = vmatpush1.bf16.msra.mxu0 %v429
    %1127 = vmatprep.subr.bf16.mxu0 0
    %1128 = vmatpush2.bf16.msra.mxu0 0
    %1129 = vmatprep.subr.bf16.mxu0 0
    %1130 = vmatpush2.bf16.msra.mxu0 0
    %1131 = vmatprep.subr.bf16.mxu0 0
    %1132 = vmatpush2.bf16.msra.mxu0 0
    %1133 = vmatprep.subr.bf16.mxu0 0
    %1134 = vmatpush2.bf16.msra.mxu0 0
    %1135 = vmatprep.subr.bf16.mxu0 0
    %1136 = vmatpush2.bf16.msra.mxu0 0
    %1137 = vmatprep.subr.bf16.mxu0 0
    %1138 = vmatpush2.bf16.msra.mxu0 0
    %1139 = vmatprep.subr.bf16.mxu0 0
    %1140 = vmatpush2.bf16.msra.mxu0 0
    %1141 = vmatprep.subr.bf16.mxu0 0
    %1142 = vmatpush2.bf16.msra.mxu0 0
    %1143 = vmatprep.mubr.bf16.mxu0 0
    %1144 = vmatmul.mubr.bf16.gmra.mxu0 %v1110
    %v1145 = vpop.f32.mrf.mxu0
    %v1146 = vadd.f32 %v893, %v1145
    %v1147 = vpop.f32.mrf.mxu0
    %v1148 = vadd.f32 %v897, %v1147
    %v1149 = vpop.f32.mrf.mxu0
    %v1150 = vpop.f32.mrf.mxu0
    %1151 = vdwg.mxu0
    %1152 = vmatprep.subr.bf16.mxu0 0
    %1153 = vmatpush1.bf16.msra.mxu0 %v452
    %1154 = vmatprep.subr.bf16.mxu0 0
    %1155 = vmatpush1.bf16.msra.mxu0 %v449
    %1156 = vmatprep.subr.bf16.mxu0 0
    %1157 = vmatpush1.bf16.msra.mxu0 %v446
    %1158 = vmatprep.subr.bf16.mxu0 0
    %1159 = vmatpush1.bf16.msra.mxu0 %v443
    %1160 = vmatprep.subr.bf16.mxu0 0
    %1161 = vmatpush1.bf16.msra.mxu0 %v440
    %1162 = vmatprep.subr.bf16.mxu0 0
    %1163 = vmatpush1.bf16.msra.mxu0 %v437
    %1164 = vmatprep.subr.bf16.mxu0 0
    %1165 = vmatpush1.bf16.msra.mxu0 %v434
    %1166 = vmatprep.subr.bf16.mxu0 0
    %1167 = vmatpush1.bf16.msra.mxu0 %v431
    %1168 = vmatprep.subr.bf16.mxu0 0
    %1169 = vmatpush2.bf16.msra.mxu0 0
    %1170 = vmatprep.subr.bf16.mxu0 0
    %1171 = vmatpush2.bf16.msra.mxu0 0
    %1172 = vmatprep.subr.bf16.mxu0 0
    %1173 = vmatpush2.bf16.msra.mxu0 0
    %1174 = vmatprep.subr.bf16.mxu0 0
    %1175 = vmatpush2.bf16.msra.mxu0 0
    %1176 = vmatprep.subr.bf16.mxu0 0
    %1177 = vmatpush2.bf16.msra.mxu0 0
    %1178 = vmatprep.subr.bf16.mxu0 0
    %1179 = vmatpush2.bf16.msra.mxu0 0
    %1180 = vmatprep.subr.bf16.mxu0 0
    %1181 = vmatpush2.bf16.msra.mxu0 0
    %1182 = vmatprep.subr.bf16.mxu0 0
    %1183 = vmatpush2.bf16.msra.mxu0 0
    %1184 = vmatprep.mubr.bf16.mxu0 0
    %1185 = vmatmul.mubr.bf16.gmra.mxu0 %v1110
    %v1186 = vpop.f32.mrf.mxu0
    %v1187 = vadd.f32 %v901, %v1186
    %v1188 = vpop.f32.mrf.mxu0
    %v1189 = vpop.f32.mrf.mxu0
    %v1190 = vpop.f32.mrf.mxu0
    %1191 = vdwg.mxu0
    %v1192 = vadd.f32 %v701, %v1146
    %v1193 = vxor.u32 %v1192, 2147483648
    %v1194 = vmul.f32 %v1193, 1.442695
    %v1195 = vpow.pop %v1194
    %v1196 = vadd.f32 %v1195, 1.0
    %v1197 = vrcp.pop %v1196
    %v1198 = vmul.f32 1.0, %v1197
    %v1199 = vadd.f32 %v702, %v1148
    %v1200 = vxor.u32 %v1199, 2147483648
    %v1201 = vmul.f32 %v1200, 1.442695
    %v1202 = vpow.pop %v1201
    %v1203 = vadd.f32 %v1202, 1.0
    %v1204 = vrcp.pop %v1203
    %v1205 = vmul.f32 1.0, %v1204
    %v1206 = vmul.f32 %v1198, %v1187
    %v1207 = vadd.f32 %v703, %v1206
    %v1208 = vtanh.pop %v1207
    %v1209 = vsub.f32 1.0, %v1205
    %v1210 = vmul.f32 %v1209, %v1208
    %v1211 = vmul.f32 %v1205, %v1109
    %v1212 = vadd.f32 %v1210, %v1211
    %v1213 = vpack.c.bf16 %v1212, %v1212
    %1214 = vmatprep.subr.bf16.mxu0 %v451
    %1215 = vmatpush1.bf16.msra.mxu0 %v450
    %1216 = vmatprep.subr.bf16.mxu0 %v448
    %1217 = vmatpush1.bf16.msra.mxu0 %v447
    %1218 = vmatprep.subr.bf16.mxu0 %v445
    %1219 = vmatpush1.bf16.msra.mxu0 %v444
    %1220 = vmatprep.subr.bf16.mxu0 %v442
    %1221 = vmatpush1.bf16.msra.mxu0 %v441
    %1222 = vmatprep.subr.bf16.mxu0 %v439
    %1223 = vmatpush1.bf16.msra.mxu0 %v438
    %1224 = vmatprep.subr.bf16.mxu0 %v436
    %1225 = vmatpush1.bf16.msra.mxu0 %v435
    %1226 = vmatprep.subr.bf16.mxu0 %v433
    %1227 = vmatpush1.bf16.msra.mxu0 %v432
    %1228 = vmatprep.subr.bf16.mxu0 %v430
    %1229 = vmatpush1.bf16.msra.mxu0 %v429
    %1230 = vmatprep.subr.bf16.mxu0 0
    %1231 = vmatpush2.bf16.msra.mxu0 0
    %1232 = vmatprep.subr.bf16.mxu0 0
    %1233 = vmatpush2.bf16.msra.mxu0 0
    %1234 = vmatprep.subr.bf16.mxu0 0
    %1235 = vmatpush2.bf16.msra.mxu0 0
    %1236 = vmatprep.subr.bf16.mxu0 0
    %1237 = vmatpush2.bf16.msra.mxu0 0
    %1238 = vmatprep.subr.bf16.mxu0 0
    %1239 = vmatpush2.bf16.msra.mxu0 0
    %1240 = vmatprep.subr.bf16.mxu0 0
    %1241 = vmatpush2.bf16.msra.mxu0 0
    %1242 = vmatprep.subr.bf16.mxu0 0
    %1243 = vmatpush2.bf16.msra.mxu0 0
    %1244 = vmatprep.subr.bf16.mxu0 0
    %1245 = vmatpush2.bf16.msra.mxu0 0
    %1246 = vmatprep.mubr.bf16.mxu0 0
    %1247 = vmatmul.mubr.bf16.gmra.mxu0 %v1213
    %v1248 = vpop.f32.mrf.mxu0
    %v1249 = vadd.f32 %v893, %v1248
    %v1250 = vpop.f32.mrf.mxu0
    %v1251 = vadd.f32 %v897, %v1250
    %v1252 = vpop.f32.mrf.mxu0
    %v1253 = vpop.f32.mrf.mxu0
    %1254 = vdwg.mxu0
    %1255 = vmatprep.subr.bf16.mxu0 0
    %1256 = vmatpush1.bf16.msra.mxu0 %v452
    %1257 = vmatprep.subr.bf16.mxu0 0
    %1258 = vmatpush1.bf16.msra.mxu0 %v449
    %1259 = vmatprep.subr.bf16.mxu0 0
    %1260 = vmatpush1.bf16.msra.mxu0 %v446
    %1261 = vmatprep.subr.bf16.mxu0 0
    %1262 = vmatpush1.bf16.msra.mxu0 %v443
    %1263 = vmatprep.subr.bf16.mxu0 0
    %1264 = vmatpush1.bf16.msra.mxu0 %v440
    %1265 = vmatprep.subr.bf16.mxu0 0
    %1266 = vmatpush1.bf16.msra.mxu0 %v437
    %1267 = vmatprep.subr.bf16.mxu0 0
    %1268 = vmatpush1.bf16.msra.mxu0 %v434
    %1269 = vmatprep.subr.bf16.mxu0 0
    %1270 = vmatpush1.bf16.msra.mxu0 %v431
    %1271 = vmatprep.subr.bf16.mxu0 0
    %1272 = vmatpush2.bf16.msra.mxu0 0
    %1273 = vmatprep.subr.bf16.mxu0 0
    %1274 = vmatpush2.bf16.msra.mxu0 0
    %1275 = vmatprep.subr.bf16.mxu0 0
    %1276 = vmatpush2.bf16.msra.mxu0 0
    %1277 = vmatprep.subr.bf16.mxu0 0
    %1278 = vmatpush2.bf16.msra.mxu0 0
    %1279 = vmatprep.subr.bf16.mxu0 0
    %1280 = vmatpush2.bf16.msra.mxu0 0
    %1281 = vmatprep.subr.bf16.mxu0 0
    %1282 = vmatpush2.bf16.msra.mxu0 0
    %1283 = vmatprep.subr.bf16.mxu0 0
    %1284 = vmatpush2.bf16.msra.mxu0 0
    %1285 = vmatprep.subr.bf16.mxu0 0
    %1286 = vmatpush2.bf16.msra.mxu0 0
    %1287 = vmatprep.mubr.bf16.mxu0 0
    %1288 = vmatmul.mubr.bf16.gmra.mxu0 %v1213
    %v1289 = vpop.f32.mrf.mxu0
    %v1290 = vadd.f32 %v901, %v1289
    %v1291 = vpop.f32.mrf.mxu0
    %v1292 = vpop.f32.mrf.mxu0
    %v1293 = vpop.f32.mrf.mxu0
    %1294 = vdwg.mxu0
    %v1295 = vadd.f32 %v738, %v1249
    %v1296 = vxor.u32 %v1295, 2147483648
    %v1297 = vmul.f32 %v1296, 1.442695
    %v1298 = vpow.pop %v1297
    %v1299 = vadd.f32 %v1298, 1.0
    %v1300 = vrcp.pop %v1299
    %v1301 = vmul.f32 1.0, %v1300
    %v1302 = vadd.f32 %v739, %v1251
    %v1303 = vxor.u32 %v1302, 2147483648
    %v1304 = vmul.f32 %v1303, 1.442695
    %v1305 = vpow.pop %v1304
    %v1306 = vadd.f32 %v1305, 1.0
    %v1307 = vrcp.pop %v1306
    %v1308 = vmul.f32 1.0, %v1307
    %v1309 = vmul.f32 %v1301, %v1290
    %v1310 = vadd.f32 %v740, %v1309
    %v1311 = vtanh.pop %v1310
    %v1312 = vsub.f32 1.0, %v1308
    %v1313 = vmul.f32 %v1312, %v1311
    %v1314 = vmul.f32 %v1308, %v1212
    %v1315 = vadd.f32 %v1313, %v1314
    %v1316 = vpack.c.bf16 %v1315, %v1315
    %1317 = vmatprep.subr.bf16.mxu0 %v451
    %1318 = vmatpush1.bf16.msra.mxu0 %v450
    %1319 = vmatprep.subr.bf16.mxu0 %v448
    %1320 = vmatpush1.bf16.msra.mxu0 %v447
    %1321 = vmatprep.subr.bf16.mxu0 %v445
    %1322 = vmatpush1.bf16.msra.mxu0 %v444
    %1323 = vmatprep.subr.bf16.mxu0 %v442
    %1324 = vmatpush1.bf16.msra.mxu0 %v441
    %1325 = vmatprep.subr.bf16.mxu0 %v439
    %1326 = vmatpush1.bf16.msra.mxu0 %v438
    %1327 = vmatprep.subr.bf16.mxu0 %v436
    %1328 = vmatpush1.bf16.msra.mxu0 %v435
    %1329 = vmatprep.subr.bf16.mxu0 %v433
    %1330 = vmatpush1.bf16.msra.mxu0 %v432
    %1331 = vmatprep.subr.bf16.mxu0 %v430
    %1332 = vmatpush1.bf16.msra.mxu0 %v429
    %1333 = vmatprep.subr.bf16.mxu0 0
    %1334 = vmatpush2.bf16.msra.mxu0 0
    %1335 = vmatprep.subr.bf16.mxu0 0
    %1336 = vmatpush2.bf16.msra.mxu0 0
    %1337 = vmatprep.subr.bf16.mxu0 0
    %1338 = vmatpush2.bf16.msra.mxu0 0
    %1339 = vmatprep.subr.bf16.mxu0 0
    %1340 = vmatpush2.bf16.msra.mxu0 0
    %1341 = vmatprep.subr.bf16.mxu0 0
    %1342 = vmatpush2.bf16.msra.mxu0 0
    %1343 = vmatprep.subr.bf16.mxu0 0
    %1344 = vmatpush2.bf16.msra.mxu0 0
    %1345 = vmatprep.subr.bf16.mxu0 0
    %1346 = vmatpush2.bf16.msra.mxu0 0
    %1347 = vmatprep.subr.bf16.mxu0 0
    %1348 = vmatpush2.bf16.msra.mxu0 0
    %1349 = vmatprep.mubr.bf16.mxu0 0
    %1350 = vmatmul.mubr.bf16.gmra.mxu0 %v1316
    %v1351 = vpop.f32.mrf.mxu0
    %v1352 = vadd.f32 %v893, %v1351
    %v1353 = vpop.f32.mrf.mxu0
    %v1354 = vadd.f32 %v897, %v1353
    %v1355 = vpop.f32.mrf.mxu0
    %v1356 = vpop.f32.mrf.mxu0
    %1357 = vdwg.mxu0
    %1358 = vmatprep.subr.bf16.mxu0 0
    %1359 = vmatpush1.bf16.msra.mxu0 %v452
    %1360 = vmatprep.subr.bf16.mxu0 0
    %1361 = vmatpush1.bf16.msra.mxu0 %v449
    %1362 = vmatprep.subr.bf16.mxu0 0
    %1363 = vmatpush1.bf16.msra.mxu0 %v446
    %1364 = vmatprep.subr.bf16.mxu0 0
    %1365 = vmatpush1.bf16.msra.mxu0 %v443
    %1366 = vmatprep.subr.bf16.mxu0 0
    %1367 = vmatpush1.bf16.msra.mxu0 %v440
    %1368 = vmatprep.subr.bf16.mxu0 0
    %1369 = vmatpush1.bf16.msra.mxu0 %v437
    %1370 = vmatprep.subr.bf16.mxu0 0
    %1371 = vmatpush1.bf16.msra.mxu0 %v434
    %1372 = vmatprep.subr.bf16.mxu0 0
    %1373 = vmatpush1.bf16.msra.mxu0 %v431
    %1374 = vmatprep.subr.bf16.mxu0 0
    %1375 = vmatpush2.bf16.msra.mxu0 0
    %1376 = vmatprep.subr.bf16.mxu0 0
    %1377 = vmatpush2.bf16.msra.mxu0 0
    %1378 = vmatprep.subr.bf16.mxu0 0
    %1379 = vmatpush2.bf16.msra.mxu0 0
    %1380 = vmatprep.subr.bf16.mxu0 0
    %1381 = vmatpush2.bf16.msra.mxu0 0
    %1382 = vmatprep.subr.bf16.mxu0 0
    %1383 = vmatpush2.bf16.msra.mxu0 0
    %1384 = vmatprep.subr.bf16.mxu0 0
    %1385 = vmatpush2.bf16.msra.mxu0 0
    %1386 = vmatprep.subr.bf16.mxu0 0
    %1387 = vmatpush2.bf16.msra.mxu0 0
    %1388 = vmatprep.subr.bf16.mxu0 0
    %1389 = vmatpush2.bf16.msra.mxu0 0
    %1390 = vmatprep.mubr.bf16.mxu0 0
    %1391 = vmatmul.mubr.bf16.gmra.mxu0 %v1316
    %v1392 = vpop.f32.mrf.mxu0
    %v1393 = vadd.f32 %v901, %v1392
    %v1394 = vpop.f32.mrf.mxu0
    %v1395 = vpop.f32.mrf.mxu0
    %v1396 = vpop.f32.mrf.mxu0
    %1397 = vdwg.mxu0
    %v1398 = vadd.f32 %v775, %v1352
    %v1399 = vxor.u32 %v1398, 2147483648
    %v1400 = vmul.f32 %v1399, 1.442695
    %v1401 = vpow.pop %v1400
    %v1402 = vadd.f32 %v1401, 1.0
    %v1403 = vrcp.pop %v1402
    %v1404 = vmul.f32 1.0, %v1403
    %v1405 = vadd.f32 %v776, %v1354
    %v1406 = vxor.u32 %v1405, 2147483648
    %v1407 = vmul.f32 %v1406, 1.442695
    %v1408 = vpow.pop %v1407
    %v1409 = vadd.f32 %v1408, 1.0
    %v1410 = vrcp.pop %v1409
    %v1411 = vmul.f32 1.0, %v1410
    %v1412 = vmul.f32 %v1404, %v1393
    %v1413 = vadd.f32 %v777, %v1412
    %v1414 = vtanh.pop %v1413
    %v1415 = vsub.f32 1.0, %v1411
    %v1416 = vmul.f32 %v1415, %v1414
    %v1417 = vmul.f32 %v1411, %v1315
    %v1418 = vadd.f32 %v1416, %v1417
    %v1419 = vpack.c.bf16 %v1418, %v1418
    %1420 = vmatprep.subr.bf16.mxu0 %v451
    %1421 = vmatpush1.bf16.msra.mxu0 %v450
    %1422 = vmatprep.subr.bf16.mxu0 %v448
    %1423 = vmatpush1.bf16.msra.mxu0 %v447
    %1424 = vmatprep.subr.bf16.mxu0 %v445
    %1425 = vmatpush1.bf16.msra.mxu0 %v444
    %1426 = vmatprep.subr.bf16.mxu0 %v442
    %1427 = vmatpush1.bf16.msra.mxu0 %v441
    %1428 = vmatprep.subr.bf16.mxu0 %v439
    %1429 = vmatpush1.bf16.msra.mxu0 %v438
    %1430 = vmatprep.subr.bf16.mxu0 %v436
    %1431 = vmatpush1.bf16.msra.mxu0 %v435
    %1432 = vmatprep.subr.bf16.mxu0 %v433
    %1433 = vmatpush1.bf16.msra.mxu0 %v432
    %1434 = vmatprep.subr.bf16.mxu0 %v430
    %1435 = vmatpush1.bf16.msra.mxu0 %v429
    %1436 = vmatprep.subr.bf16.mxu0 0
    %1437 = vmatpush2.bf16.msra.mxu0 0
    %1438 = vmatprep.subr.bf16.mxu0 0
    %1439 = vmatpush2.bf16.msra.mxu0 0
    %1440 = vmatprep.subr.bf16.mxu0 0
    %1441 = vmatpush2.bf16.msra.mxu0 0
    %1442 = vmatprep.subr.bf16.mxu0 0
    %1443 = vmatpush2.bf16.msra.mxu0 0
    %1444 = vmatprep.subr.bf16.mxu0 0
    %1445 = vmatpush2.bf16.msra.mxu0 0
    %1446 = vmatprep.subr.bf16.mxu0 0
    %1447 = vmatpush2.bf16.msra.mxu0 0
    %1448 = vmatprep.subr.bf16.mxu0 0
    %1449 = vmatpush2.bf16.msra.mxu0 0
    %1450 = vmatprep.subr.bf16.mxu0 0
    %1451 = vmatpush2.bf16.msra.mxu0 0
    %1452 = vmatprep.mubr.bf16.mxu0 0
    %1453 = vmatmul.mubr.bf16.gmra.mxu0 %v1419
    %v1454 = vpop.f32.mrf.mxu0
    %v1455 = vadd.f32 %v893, %v1454
    %v1456 = vpop.f32.mrf.mxu0
    %v1457 = vadd.f32 %v897, %v1456
    %v1458 = vpop.f32.mrf.mxu0
    %v1459 = vpop.f32.mrf.mxu0
    %1460 = vdwg.mxu0
    %1461 = vmatprep.subr.bf16.mxu0 0
    %1462 = vmatpush1.bf16.msra.mxu0 %v452
    %1463 = vmatprep.subr.bf16.mxu0 0
    %1464 = vmatpush1.bf16.msra.mxu0 %v449
    %1465 = vmatprep.subr.bf16.mxu0 0
    %1466 = vmatpush1.bf16.msra.mxu0 %v446
    %1467 = vmatprep.subr.bf16.mxu0 0
    %1468 = vmatpush1.bf16.msra.mxu0 %v443
    %1469 = vmatprep.subr.bf16.mxu0 0
    %1470 = vmatpush1.bf16.msra.mxu0 %v440
    %1471 = vmatprep.subr.bf16.mxu0 0
    %1472 = vmatpush1.bf16.msra.mxu0 %v437
    %1473 = vmatprep.subr.bf16.mxu0 0
    %1474 = vmatpush1.bf16.msra.mxu0 %v434
    %1475 = vmatprep.subr.bf16.mxu0 0
    %1476 = vmatpush1.bf16.msra.mxu0 %v431
    %1477 = vmatprep.subr.bf16.mxu0 0
    %1478 = vmatpush2.bf16.msra.mxu0 0
    %1479 = vmatprep.subr.bf16.mxu0 0
    %1480 = vmatpush2.bf16.msra.mxu0 0
    %1481 = vmatprep.subr.bf16.mxu0 0
    %1482 = vmatpush2.bf16.msra.mxu0 0
    %1483 = vmatprep.subr.bf16.mxu0 0
    %1484 = vmatpush2.bf16.msra.mxu0 0
    %1485 = vmatprep.subr.bf16.mxu0 0
    %1486 = vmatpush2.bf16.msra.mxu0 0
    %1487 = vmatprep.subr.bf16.mxu0 0
    %1488 = vmatpush2.bf16.msra.mxu0 0
    %1489 = vmatprep.subr.bf16.mxu0 0
    %1490 = vmatpush2.bf16.msra.mxu0 0
    %1491 = vmatprep.subr.bf16.mxu0 0
    %1492 = vmatpush2.bf16.msra.mxu0 0
    %1493 = vmatprep.mubr.bf16.mxu0 0
    %1494 = vmatmul.mubr.bf16.gmra.mxu0 %v1419
    %v1495 = vpop.f32.mrf.mxu0
    %v1496 = vadd.f32 %v901, %v1495
    %v1497 = vpop.f32.mrf.mxu0
    %v1498 = vpop.f32.mrf.mxu0
    %v1499 = vpop.f32.mrf.mxu0
    %1500 = vdwg.mxu0
    %v1501 = vadd.f32 %v812, %v1455
    %v1502 = vxor.u32 %v1501, 2147483648
    %v1503 = vmul.f32 %v1502, 1.442695
    %v1504 = vpow.pop %v1503
    %v1505 = vadd.f32 %v1504, 1.0
    %v1506 = vrcp.pop %v1505
    %v1507 = vmul.f32 1.0, %v1506
    %v1508 = vadd.f32 %v813, %v1457
    %v1509 = vxor.u32 %v1508, 2147483648
    %v1510 = vmul.f32 %v1509, 1.442695
    %v1511 = vpow.pop %v1510
    %v1512 = vadd.f32 %v1511, 1.0
    %v1513 = vrcp.pop %v1512
    %v1514 = vmul.f32 1.0, %v1513
    %v1515 = vmul.f32 %v1507, %v1496
    %v1516 = vadd.f32 %v814, %v1515
    %v1517 = vtanh.pop %v1516
    %v1518 = vsub.f32 1.0, %v1514
    %v1519 = vmul.f32 %v1518, %v1517
    %v1520 = vmul.f32 %v1514, %v1418
    %v1521 = vadd.f32 %v1519, %v1520
    %v1522 = vpack.c.bf16 %v1521, %v1521
    %1523 = vmatprep.subr.bf16.mxu0 %v451
    %1524 = vmatpush1.bf16.msra.mxu0 %v450
    %1525 = vmatprep.subr.bf16.mxu0 %v448
    %1526 = vmatpush1.bf16.msra.mxu0 %v447
    %1527 = vmatprep.subr.bf16.mxu0 %v445
    %1528 = vmatpush1.bf16.msra.mxu0 %v444
    %1529 = vmatprep.subr.bf16.mxu0 %v442
    %1530 = vmatpush1.bf16.msra.mxu0 %v441
    %1531 = vmatprep.subr.bf16.mxu0 %v439
    %1532 = vmatpush1.bf16.msra.mxu0 %v438
    %1533 = vmatprep.subr.bf16.mxu0 %v436
    %1534 = vmatpush1.bf16.msra.mxu0 %v435
    %1535 = vmatprep.subr.bf16.mxu0 %v433
    %1536 = vmatpush1.bf16.msra.mxu0 %v432
    %1537 = vmatprep.subr.bf16.mxu0 %v430
    %1538 = vmatpush1.bf16.msra.mxu0 %v429
    %1539 = vmatprep.subr.bf16.mxu0 0
    %1540 = vmatpush2.bf16.msra.mxu0 0
    %1541 = vmatprep.subr.bf16.mxu0 0
    %1542 = vmatpush2.bf16.msra.mxu0 0
    %1543 = vmatprep.subr.bf16.mxu0 0
    %1544 = vmatpush2.bf16.msra.mxu0 0
    %1545 = vmatprep.subr.bf16.mxu0 0
    %1546 = vmatpush2.bf16.msra.mxu0 0
    %1547 = vmatprep.subr.bf16.mxu0 0
    %1548 = vmatpush2.bf16.msra.mxu0 0
    %1549 = vmatprep.subr.bf16.mxu0 0
    %1550 = vmatpush2.bf16.msra.mxu0 0
    %1551 = vmatprep.subr.bf16.mxu0 0
    %1552 = vmatpush2.bf16.msra.mxu0 0
    %1553 = vmatprep.subr.bf16.mxu0 0
    %1554 = vmatpush2.bf16.msra.mxu0 0
    %1555 = vmatprep.mubr.bf16.mxu0 0
    %1556 = vmatmul.mubr.bf16.gmra.mxu0 %v1522
    %v1557 = vpop.f32.mrf.mxu0
    %v1558 = vadd.f32 %v893, %v1557
    %v1559 = vpop.f32.mrf.mxu0
    %v1560 = vadd.f32 %v897, %v1559
    %v1561 = vpop.f32.mrf.mxu0
    %v1562 = vpop.f32.mrf.mxu0
    %1563 = vdwg.mxu0
    %1564 = vmatprep.subr.bf16.mxu0 0
    %1565 = vmatpush1.bf16.msra.mxu0 %v452
    %1566 = vmatprep.subr.bf16.mxu0 0
    %1567 = vmatpush1.bf16.msra.mxu0 %v449
    %1568 = vmatprep.subr.bf16.mxu0 0
    %1569 = vmatpush1.bf16.msra.mxu0 %v446
    %1570 = vmatprep.subr.bf16.mxu0 0
    %1571 = vmatpush1.bf16.msra.mxu0 %v443
    %1572 = vmatprep.subr.bf16.mxu0 0
    %1573 = vmatpush1.bf16.msra.mxu0 %v440
    %1574 = vmatprep.subr.bf16.mxu0 0
    %1575 = vmatpush1.bf16.msra.mxu0 %v437
    %1576 = vmatprep.subr.bf16.mxu0 0
    %1577 = vmatpush1.bf16.msra.mxu0 %v434
    %1578 = vmatprep.subr.bf16.mxu0 0
    %1579 = vmatpush1.bf16.msra.mxu0 %v431
    %1580 = vmatprep.subr.bf16.mxu0 0
    %1581 = vmatpush2.bf16.msra.mxu0 0
    %1582 = vmatprep.subr.bf16.mxu0 0
    %1583 = vmatpush2.bf16.msra.mxu0 0
    %1584 = vmatprep.subr.bf16.mxu0 0
    %1585 = vmatpush2.bf16.msra.mxu0 0
    %1586 = vmatprep.subr.bf16.mxu0 0
    %1587 = vmatpush2.bf16.msra.mxu0 0
    %1588 = vmatprep.subr.bf16.mxu0 0
    %1589 = vmatpush2.bf16.msra.mxu0 0
    %1590 = vmatprep.subr.bf16.mxu0 0
    %1591 = vmatpush2.bf16.msra.mxu0 0
    %1592 = vmatprep.subr.bf16.mxu0 0
    %1593 = vmatpush2.bf16.msra.mxu0 0
    %1594 = vmatprep.subr.bf16.mxu0 0
    %1595 = vmatpush2.bf16.msra.mxu0 0
    %1596 = vmatprep.mubr.bf16.mxu0 0
    %1597 = vmatmul.mubr.bf16.gmra.mxu0 %v1522
    %v1598 = vpop.f32.mrf.mxu0
    %v1599 = vadd.f32 %v901, %v1598
    %v1600 = vpop.f32.mrf.mxu0
    %v1601 = vpop.f32.mrf.mxu0
    %v1602 = vpop.f32.mrf.mxu0
    %1603 = vdwg.mxu0
    %v1604 = vadd.f32 %v849, %v1558
    %v1605 = vxor.u32 %v1604, 2147483648
    %v1606 = vmul.f32 %v1605, 1.442695
    %v1607 = vpow.pop %v1606
    %v1608 = vadd.f32 %v1607, 1.0
    %v1609 = vrcp.pop %v1608
    %v1610 = vmul.f32 1.0, %v1609
    %v1611 = vadd.f32 %v850, %v1560
    %v1612 = vxor.u32 %v1611, 2147483648
    %v1613 = vmul.f32 %v1612, 1.442695
    %v1614 = vpow.pop %v1613
    %v1615 = vadd.f32 %v1614, 1.0
    %v1616 = vrcp.pop %v1615
    %v1617 = vmul.f32 1.0, %v1616
    %v1618 = vmul.f32 %v1610, %v1599
    %v1619 = vadd.f32 %v851, %v1618
    %v1620 = vtanh.pop %v1619
    %v1621 = vsub.f32 1.0, %v1617
    %v1622 = vmul.f32 %v1621, %v1620
    %v1623 = vmul.f32 %v1617, %v1521
    %v1624 = vadd.f32 %v1622, %v1623
    %v1625 = vpack.c.bf16 %v1624, %v1624
    %1626 = vmatprep.subr.bf16.mxu0 %v451
    %1627 = vmatpush1.bf16.msra.mxu0 %v450
    %1628 = vmatprep.subr.bf16.mxu0 %v448
    %1629 = vmatpush1.bf16.msra.mxu0 %v447
    %1630 = vmatprep.subr.bf16.mxu0 %v445
    %1631 = vmatpush1.bf16.msra.mxu0 %v444
    %1632 = vmatprep.subr.bf16.mxu0 %v442
    %1633 = vmatpush1.bf16.msra.mxu0 %v441
    %1634 = vmatprep.subr.bf16.mxu0 %v439
    %1635 = vmatpush1.bf16.msra.mxu0 %v438
    %1636 = vmatprep.subr.bf16.mxu0 %v436
    %1637 = vmatpush1.bf16.msra.mxu0 %v435
    %1638 = vmatprep.subr.bf16.mxu0 %v433
    %1639 = vmatpush1.bf16.msra.mxu0 %v432
    %1640 = vmatprep.subr.bf16.mxu0 %v430
    %1641 = vmatpush1.bf16.msra.mxu0 %v429
    %1642 = vmatprep.subr.bf16.mxu0 0
    %1643 = vmatpush2.bf16.msra.mxu0 0
    %1644 = vmatprep.subr.bf16.mxu0 0
    %1645 = vmatpush2.bf16.msra.mxu0 0
    %1646 = vmatprep.subr.bf16.mxu0 0
    %1647 = vmatpush2.bf16.msra.mxu0 0
    %1648 = vmatprep.subr.bf16.mxu0 0
    %1649 = vmatpush2.bf16.msra.mxu0 0
    %1650 = vmatprep.subr.bf16.mxu0 0
    %1651 = vmatpush2.bf16.msra.mxu0 0
    %1652 = vmatprep.subr.bf16.mxu0 0
    %1653 = vmatpush2.bf16.msra.mxu0 0
    %1654 = vmatprep.subr.bf16.mxu0 0
    %1655 = vmatpush2.bf16.msra.mxu0 0
    %1656 = vmatprep.subr.bf16.mxu0 0
    %1657 = vmatpush2.bf16.msra.mxu0 0
    %1658 = vmatprep.mubr.bf16.mxu0 0
    %1659 = vmatmul.mubr.bf16.gmra.mxu0 %v1625
    %v1660 = vpop.f32.mrf.mxu0
    %v1661 = vadd.f32 %v893, %v1660
    %v1662 = vpop.f32.mrf.mxu0
    %v1663 = vadd.f32 %v897, %v1662
    %v1664 = vpop.f32.mrf.mxu0
    %v1665 = vpop.f32.mrf.mxu0
    %1666 = vdwg.mxu0
    %1667 = vmatprep.subr.bf16.mxu0 0
    %1668 = vmatpush1.bf16.msra.mxu0 %v452
    %1669 = vmatprep.subr.bf16.mxu0 0
    %1670 = vmatpush1.bf16.msra.mxu0 %v449
    %1671 = vmatprep.subr.bf16.mxu0 0
    %1672 = vmatpush1.bf16.msra.mxu0 %v446
    %1673 = vmatprep.subr.bf16.mxu0 0
    %1674 = vmatpush1.bf16.msra.mxu0 %v443
    %1675 = vmatprep.subr.bf16.mxu0 0
    %1676 = vmatpush1.bf16.msra.mxu0 %v440
    %1677 = vmatprep.subr.bf16.mxu0 0
    %1678 = vmatpush1.bf16.msra.mxu0 %v437
    %1679 = vmatprep.subr.bf16.mxu0 0
    %1680 = vmatpush1.bf16.msra.mxu0 %v434
    %1681 = vmatprep.subr.bf16.mxu0 0
    %1682 = vmatpush1.bf16.msra.mxu0 %v431
    %1683 = vmatprep.subr.bf16.mxu0 0
    %1684 = vmatpush2.bf16.msra.mxu0 0
    %1685 = vmatprep.subr.bf16.mxu0 0
    %1686 = vmatpush2.bf16.msra.mxu0 0
    %1687 = vmatprep.subr.bf16.mxu0 0
    %1688 = vmatpush2.bf16.msra.mxu0 0
    %1689 = vmatprep.subr.bf16.mxu0 0
    %1690 = vmatpush2.bf16.msra.mxu0 0
    %1691 = vmatprep.subr.bf16.mxu0 0
    %1692 = vmatpush2.bf16.msra.mxu0 0
    %1693 = vmatprep.subr.bf16.mxu0 0
    %1694 = vmatpush2.bf16.msra.mxu0 0
    %1695 = vmatprep.subr.bf16.mxu0 0
    %1696 = vmatpush2.bf16.msra.mxu0 0
    %1697 = vmatprep.subr.bf16.mxu0 0
    %1698 = vmatpush2.bf16.msra.mxu0 0
    %1699 = vmatprep.mubr.bf16.mxu0 0
    %1700 = vmatmul.mubr.bf16.gmra.mxu0 %v1625
    %v1701 = vpop.f32.mrf.mxu0
    %v1702 = vadd.f32 %v901, %v1701
    %v1703 = vpop.f32.mrf.mxu0
    %v1704 = vpop.f32.mrf.mxu0
    %v1705 = vpop.f32.mrf.mxu0
    %1706 = vdwg.mxu0
    %v1707 = vadd.f32 %v886, %v1661
    %v1708 = vxor.u32 %v1707, 2147483648
    %v1709 = vmul.f32 %v1708, 1.442695
    %v1710 = vpow.pop %v1709
    %v1711 = vadd.f32 %v1710, 1.0
    %v1712 = vrcp.pop %v1711
    %v1713 = vmul.f32 1.0, %v1712
    %v1714 = vadd.f32 %v887, %v1663
    %v1715 = vxor.u32 %v1714, 2147483648
    %v1716 = vmul.f32 %v1715, 1.442695
    %v1717 = vpow.pop %v1716
    %v1718 = vadd.f32 %v1717, 1.0
    %v1719 = vrcp.pop %v1718
    %v1720 = vmul.f32 1.0, %v1719
    %v1721 = vmul.f32 %v1713, %v1702
    %v1722 = vadd.f32 %v888, %v1721
    %v1723 = vtanh.pop %v1722
    %v1724 = vsub.f32 1.0, %v1720
    %v1725 = vmul.f32 %v1724, %v1723
    %v1726 = vmul.f32 %v1720, %v1624
    %v1727 = vadd.f32 %v1725, %v1726
    %v1728 = vld [vmem:[#allocation8] sm:$0xff]
    %v1729 = vld [vmem:[#allocation8 + $0x8] sm:$0xff]
    %v1730 = vld [vmem:[#allocation8 + $0x10] sm:$0xff]
    %v1731 = vld [vmem:[#allocation8 + $0x18] sm:$0xff]
    %v1732 = vld [vmem:[#allocation8 + $0x20] sm:$0xff]
    %v1733 = vld [vmem:[#allocation8 + $0x28] sm:$0xff]
    %v1734 = vld [vmem:[#allocation8 + $0x30] sm:$0xff]
    %v1735 = vld [vmem:[#allocation8 + $0x38] sm:$0xff]
    %v1736 = vld [vmem:[#allocation8 + $0x40] sm:$0xff]
    %v1737 = vld [vmem:[#allocation8 + $0x48] sm:$0xff]
    %v1738 = vld [vmem:[#allocation8 + $0x50] sm:$0xff]
    %v1739 = vld [vmem:[#allocation8 + $0x58] sm:$0xff]
    %v1740 = vld [vmem:[#allocation8 + $0x60] sm:$0xff]
    %v1741 = vld [vmem:[#allocation8 + $0x68] sm:$0xff]
    %v1742 = vld [vmem:[#allocation8 + $0x70] sm:$0xff]
    %v1743 = vld [vmem:[#allocation8 + $0x78] sm:$0xff]
    %v1744 = vld [vmem:[#allocation8 + $0x80] sm:$0xff]
    %v1745 = vld [vmem:[#allocation8 + $0x88] sm:$0xff]
    %v1746 = vld [vmem:[#allocation8 + $0x90] sm:$0xff]
    %v1747 = vld [vmem:[#allocation8 + $0x98] sm:$0xff]
    %v1748 = vld [vmem:[#allocation8 + $0xa0] sm:$0xff]
    %v1749 = vld [vmem:[#allocation8 + $0xa8] sm:$0xff]
    %v1750 = vld [vmem:[#allocation8 + $0xb0] sm:$0xff]
    %v1751 = vld [vmem:[#allocation8 + $0xb8] sm:$0xff]
    %v1752 = vld [vmem:[#allocation8 + $0xc0] sm:$0xff]
    %v1753 = vld [vmem:[#allocation8 + $0xc8] sm:$0xff]
    %v1754 = vld [vmem:[#allocation8 + $0xd0] sm:$0xff]
    %v1755 = vld [vmem:[#allocation8 + $0xd8] sm:$0xff]
    %v1756 = vld [vmem:[#allocation8 + $0xe0] sm:$0xff]
    %v1757 = vld [vmem:[#allocation8 + $0xe8] sm:$0xff]
    %v1758 = vld [vmem:[#allocation8 + $0xf0] sm:$0xff]
    %v1759 = vld [vmem:[#allocation8 + $0xf8] sm:$0xff]
    %v1760 = vld [vmem:[#allocation8 + $0x100] sm:$0xff]
    %v1761 = vld [vmem:[#allocation8 + $0x108] sm:$0xff]
    %v1762 = vld [vmem:[#allocation8 + $0x110] sm:$0xff]
    %v1763 = vld [vmem:[#allocation8 + $0x118] sm:$0xff]
    %v1764 = vld [vmem:[#allocation8 + $0x120] sm:$0xff]
    %v1765 = vld [vmem:[#allocation8 + $0x128] sm:$0xff]
    %v1766 = vld [vmem:[#allocation8 + $0x130] sm:$0xff]
    %v1767 = vld [vmem:[#allocation8 + $0x138] sm:$0xff]
    %v1768 = vld [vmem:[#allocation8 + $0x140] sm:$0xff]
    %v1769 = vld [vmem:[#allocation8 + $0x148] sm:$0xff]
    %v1770 = vld [vmem:[#allocation8 + $0x150] sm:$0xff]
    %v1771 = vld [vmem:[#allocation8 + $0x158] sm:$0xff]
    %v1772 = vld [vmem:[#allocation8 + $0x160] sm:$0xff]
    %v1773 = vld [vmem:[#allocation8 + $0x168] sm:$0xff]
    %v1774 = vld [vmem:[#allocation8 + $0x170] sm:$0xff]
    %v1775 = vld [vmem:[#allocation8 + $0x178] sm:$0xff]
    %v1776 = vpack.c.bf16 %v1727, %v1727
    %v1777 = vpack.c.bf16 %v1731, %v1728
    %v1778 = vpack.c.bf16 %v1732, %v1729
    %v1779 = vpack.c.bf16 %v1733, %v1730
    %v1780 = vpack.c.bf16 %v1737, %v1734
    %v1781 = vpack.c.bf16 %v1738, %v1735
    %v1782 = vpack.c.bf16 %v1739, %v1736
    %v1783 = vpack.c.bf16 %v1743, %v1740
    %v1784 = vpack.c.bf16 %v1744, %v1741
    %v1785 = vpack.c.bf16 %v1745, %v1742
    %v1786 = vpack.c.bf16 %v1749, %v1746
    %v1787 = vpack.c.bf16 %v1750, %v1747
    %v1788 = vpack.c.bf16 %v1751, %v1748
    %v1789 = vpack.c.bf16 %v1755, %v1752
    %v1790 = vpack.c.bf16 %v1756, %v1753
    %v1791 = vpack.c.bf16 %v1757, %v1754
    %v1792 = vpack.c.bf16 %v1761, %v1758
    %v1793 = vpack.c.bf16 %v1762, %v1759
    %v1794 = vpack.c.bf16 %v1763, %v1760
    %v1795 = vpack.c.bf16 %v1767, %v1764
    %v1796 = vpack.c.bf16 %v1768, %v1765
    %v1797 = vpack.c.bf16 %v1769, %v1766
    %v1798 = vpack.c.bf16 %v1773, %v1770
    %v1799 = vpack.c.bf16 %v1774, %v1771
    %v1800 = vpack.c.bf16 %v1775, %v1772
    %v1801 = vld [vmem:[%s11] sm:$0x7]
    %v1803 = vlaneseq
    %v1804 = vshrl.u32 %v1803, 7
    %v1805 = vsub.s32 0, %v1804
    %v1806 = vrot.slane %v1801, %v1805
    %v1807 = vlaneseq
    %v1808 = vshrl.u32 %v1807, 7
    %v1809 = vsub.s32 1, %v1808
    %v1810 = vrot.slane %v1801, %v1809
    %v1811 = vlaneseq
    %v1812 = vshrl.u32 %v1811, 7
    %v1813 = vsub.s32 2, %v1812
    %v1814 = vrot.slane %v1801, %v1813
    %1818 = vmatprep.subr.bf16.mxu0 %v1799
    %1819 = vmatpush1.bf16.msra.mxu0 %v1798
    %1820 = vmatprep.subr.bf16.mxu0 %v1796
    %1821 = vmatpush1.bf16.msra.mxu0 %v1795
    %1822 = vmatprep.subr.bf16.mxu0 %v1793
    %1823 = vmatpush1.bf16.msra.mxu0 %v1792
    %1824 = vmatprep.subr.bf16.mxu0 %v1790
    %1825 = vmatpush1.bf16.msra.mxu0 %v1789
    %1826 = vmatprep.subr.bf16.mxu0 %v1787
    %1827 = vmatpush1.bf16.msra.mxu0 %v1786
    %1828 = vmatprep.subr.bf16.mxu0 %v1784
    %1829 = vmatpush1.bf16.msra.mxu0 %v1783
    %1830 = vmatprep.subr.bf16.mxu0 %v1781
    %1831 = vmatpush1.bf16.msra.mxu0 %v1780
    %1832 = vmatprep.subr.bf16.mxu0 %v1778
    %1833 = vmatpush1.bf16.msra.mxu0 %v1777
    %1834 = vmatprep.subr.bf16.mxu0 0
    %1835 = vmatpush2.bf16.msra.mxu0 0
    %1836 = vmatprep.subr.bf16.mxu0 0
    %1837 = vmatpush2.bf16.msra.mxu0 0
    %1838 = vmatprep.subr.bf16.mxu0 0
    %1839 = vmatpush2.bf16.msra.mxu0 0
    %1840 = vmatprep.subr.bf16.mxu0 0
    %1841 = vmatpush2.bf16.msra.mxu0 0
    %1842 = vmatprep.subr.bf16.mxu0 0
    %1843 = vmatpush2.bf16.msra.mxu0 0
    %1844 = vmatprep.subr.bf16.mxu0 0
    %1845 = vmatpush2.bf16.msra.mxu0 0
    %1846 = vmatprep.subr.bf16.mxu0 0
    %1847 = vmatpush2.bf16.msra.mxu0 0
    %1848 = vmatprep.subr.bf16.mxu0 0
    %1849 = vmatpush2.bf16.msra.mxu0 0
    %1850 = vmatprep.mubr.bf16.mxu0 0
    %1851 = vmatmul.mubr.bf16.gmra.mxu0 %v1776
    %v1852 = vpop.f32.mrf.mxu0
    %v1853 = vadd.f32 %v1806, %v1852
    %v1854 = vpop.f32.mrf.mxu0
    %v1855 = vadd.f32 %v1810, %v1854
    %v1856 = vpop.f32.mrf.mxu0
    %v1857 = vpop.f32.mrf.mxu0
    %1858 = vdwg.mxu0
    %1859 = vmatprep.subr.bf16.mxu0 0
    %1860 = vmatpush1.bf16.msra.mxu0 %v1800
    %1861 = vmatprep.subr.bf16.mxu0 0
    %1862 = vmatpush1.bf16.msra.mxu0 %v1797
    %1863 = vmatprep.subr.bf16.mxu0 0
    %1864 = vmatpush1.bf16.msra.mxu0 %v1794
    %1865 = vmatprep.subr.bf16.mxu0 0
    %1866 = vmatpush1.bf16.msra.mxu0 %v1791
    %1867 = vmatprep.subr.bf16.mxu0 0
    %1868 = vmatpush1.bf16.msra.mxu0 %v1788
    %1869 = vmatprep.subr.bf16.mxu0 0
    %1870 = vmatpush1.bf16.msra.mxu0 %v1785
    %1871 = vmatprep.subr.bf16.mxu0 0
    %1872 = vmatpush1.bf16.msra.mxu0 %v1782
    %1873 = vmatprep.subr.bf16.mxu0 0
    %1874 = vmatpush1.bf16.msra.mxu0 %v1779
    %1875 = vmatprep.subr.bf16.mxu0 0
    %1876 = vmatpush2.bf16.msra.mxu0 0
    %1877 = vmatprep.subr.bf16.mxu0 0
    %1878 = vmatpush2.bf16.msra.mxu0 0
    %1879 = vmatprep.subr.bf16.mxu0 0
    %1880 = vmatpush2.bf16.msra.mxu0 0
    %1881 = vmatprep.subr.bf16.mxu0 0
    %1882 = vmatpush2.bf16.msra.mxu0 0
    %1883 = vmatprep.subr.bf16.mxu0 0
    %1884 = vmatpush2.bf16.msra.mxu0 0
    %1885 = vmatprep.subr.bf16.mxu0 0
    %1886 = vmatpush2.bf16.msra.mxu0 0
    %1887 = vmatprep.subr.bf16.mxu0 0
    %1888 = vmatpush2.bf16.msra.mxu0 0
    %1889 = vmatprep.subr.bf16.mxu0 0
    %1890 = vmatpush2.bf16.msra.mxu0 0
    %1891 = vmatprep.mubr.bf16.mxu0 0
    %1892 = vmatmul.mubr.bf16.gmra.mxu0 %v1776
    %v1893 = vpop.f32.mrf.mxu0
    %v1894 = vadd.f32 %v1814, %v1893
    %v1895 = vpop.f32.mrf.mxu0
    %v1896 = vpop.f32.mrf.mxu0
    %v1897 = vpop.f32.mrf.mxu0
    %1898 = vdwg.mxu0
    %vm1899 = vcmp.eq.s32.totalorder %v528, 0
    %v1900 = vsel %vm1899, 1, 0
    %v1901 = vcvt.s32.f32 %v1900
    %1903 = vset.pattern.permute.xlu0 0
    %1904 = vperm.xlu0 %1903, %v1901
    %v1905 = vpop.permute.xlu0 %1904
    %v1907 = vlaneseq
    %v1908 = vshrl.u32 %v1907, 7
    %v1909 = vsub.s32 0, %v1908
    %v1910 = vrot.slane %v335, %v1909
    %v1911 = vlaneseq
    %v1912 = vshrl.u32 %v1911, 7
    %v1913 = vsub.s32 0, %v1912
    %v1914 = vrot.slane %v337, %v1913
    %v1915 = vlaneseq
    %v1916 = vshrl.u32 %v1915, 7
    %v1917 = vsub.s32 0, %v1916
    %v1918 = vrot.slane %v376, %v1917
    %v1919 = vmul.f32 %v1905, %v1910
    %v1920 = vmul.f32 %v1905, %v1914
    %v1921 = vmul.f32 %v1905, %v1918
    %vm1922 = vcmp.eq.s32.totalorder %v528, 1
    %v1923 = vsel %vm1922, 1, 0
    %v1924 = vcvt.s32.f32 %v1923
    %1926 = vset.pattern.permute.xlu0 0
    %1927 = vperm.xlu0 %1926, %v1924
    %v1928 = vpop.permute.xlu0 %1927
    %v1930 = vlaneseq
    %v1931 = vshrl.u32 %v1930, 7
    %v1932 = vsub.s32 1, %v1931
    %v1933 = vrot.slane %v335, %v1932
    %v1934 = vlaneseq
    %v1935 = vshrl.u32 %v1934, 7
    %v1936 = vsub.s32 1, %v1935
    %v1937 = vrot.slane %v337, %v1936
    %v1938 = vlaneseq
    %v1939 = vshrl.u32 %v1938, 7
    %v1940 = vsub.s32 1, %v1939
    %v1941 = vrot.slane %v376, %v1940
    %v1942 = vmul.f32 %v1928, %v1933
    %v1943 = vmul.f32 %v1928, %v1937
    %v1944 = vmul.f32 %v1928, %v1941
    %v1945 = vadd.f32 %v1919, %v1942
    %v1946 = vadd.f32 %v1920, %v1943
    %v1947 = vadd.f32 %v1921, %v1944
    %vm1948 = vcmp.eq.s32.totalorder %v528, 2
    %v1949 = vsel %vm1948, 1, 0
    %v1950 = vcvt.s32.f32 %v1949
    %1952 = vset.pattern.permute.xlu0 0
    %1953 = vperm.xlu0 %1952, %v1950
    %v1954 = vpop.permute.xlu0 %1953
    %v1956 = vlaneseq
    %v1957 = vshrl.u32 %v1956, 7
    %v1958 = vsub.s32 2, %v1957
    %v1959 = vrot.slane %v335, %v1958
    %v1960 = vlaneseq
    %v1961 = vshrl.u32 %v1960, 7
    %v1962 = vsub.s32 2, %v1961
    %v1963 = vrot.slane %v337, %v1962
    %v1964 = vlaneseq
    %v1965 = vshrl.u32 %v1964, 7
    %v1966 = vsub.s32 2, %v1965
    %v1967 = vrot.slane %v376, %v1966
    %v1968 = vmul.f32 %v1954, %v1959
    %v1969 = vmul.f32 %v1954, %v1963
    %v1970 = vmul.f32 %v1954, %v1967
    %v1971 = vadd.f32 %v1945, %v1968
    %v1972 = vadd.f32 %v1946, %v1969
    %v1973 = vadd.f32 %v1947, %v1970
    %vm1974 = vcmp.eq.s32.totalorder %v528, 3
    %v1975 = vsel %vm1974, 1, 0
    %v1976 = vcvt.s32.f32 %v1975
    %1978 = vset.pattern.permute.xlu0 0
    %1979 = vperm.xlu0 %1978, %v1976
    %v1980 = vpop.permute.xlu0 %1979
    %v1982 = vlaneseq
    %v1983 = vshrl.u32 %v1982, 7
    %v1984 = vsub.s32 3, %v1983
    %v1985 = vrot.slane %v335, %v1984
    %v1986 = vlaneseq
    %v1987 = vshrl.u32 %v1986, 7
    %v1988 = vsub.s32 3, %v1987
    %v1989 = vrot.slane %v337, %v1988
    %v1990 = vlaneseq
    %v1991 = vshrl.u32 %v1990, 7
    %v1992 = vsub.s32 3, %v1991
    %v1993 = vrot.slane %v376, %v1992
    %v1994 = vmul.f32 %v1980, %v1985
    %v1995 = vmul.f32 %v1980, %v1989
    %v1996 = vmul.f32 %v1980, %v1993
    %v1997 = vadd.f32 %v1971, %v1994
    %v1998 = vadd.f32 %v1972, %v1995
    %v1999 = vadd.f32 %v1973, %v1996
    %v2000 = vadd.f32 %v1997, %v1853
    %v2001 = vadd.f32 %v1998, %v1855
    %v2002 = vadd.f32 %v1999, %v1894
    %2003 = vset.pattern.permute.xlu0 1
    %2004 = vperm.xlu0 %2003, %v1901
    %v2005 = vpop.permute.xlu0 %2004
    %v2007 = vmul.f32 %v2005, %v1910
    %v2008 = vmul.f32 %v2005, %v1914
    %v2009 = vmul.f32 %v2005, %v1918
    %2010 = vset.pattern.permute.xlu0 1
    %2011 = vperm.xlu0 %2010, %v1924
    %v2012 = vpop.permute.xlu0 %2011
    %v2014 = vmul.f32 %v2012, %v1933
    %v2015 = vmul.f32 %v2012, %v1937
    %v2016 = vmul.f32 %v2012, %v1941
    %v2017 = vadd.f32 %v2007, %v2014
    %v2018 = vadd.f32 %v2008, %v2015
    %v2019 = vadd.f32 %v2009, %v2016
    %2020 = vset.pattern.permute.xlu0 1
    %2021 = vperm.xlu0 %2020, %v1950
    %v2022 = vpop.permute.xlu0 %2021
    %v2024 = vmul.f32 %v2022, %v1959
    %v2025 = vmul.f32 %v2022, %v1963
    %v2026 = vmul.f32 %v2022, %v1967
    %v2027 = vadd.f32 %v2017, %v2024
    %v2028 = vadd.f32 %v2018, %v2025
    %v2029 = vadd.f32 %v2019, %v2026
    %2030 = vset.pattern.permute.xlu0 1
    %2031 = vperm.xlu0 %2030, %v1976
    %v2032 = vpop.permute.xlu0 %2031
    %v2034 = vmul.f32 %v2032, %v1985
    %v2035 = vmul.f32 %v2032, %v1989
    %v2036 = vmul.f32 %v2032, %v1993
    %v2037 = vadd.f32 %v2027, %v2034
    %v2038 = vadd.f32 %v2028, %v2035
    %v2039 = vadd.f32 %v2029, %v2036
    %v2040 = vadd.f32 %v2037, %v1853
    %v2041 = vadd.f32 %v2038, %v1855
    %v2042 = vadd.f32 %v2039, %v1894
    %2043 = vset.pattern.permute.xlu0 2
    %2044 = vperm.xlu0 %2043, %v1901
    %v2045 = vpop.permute.xlu0 %2044
    %v2047 = vmul.f32 %v2045, %v1910
    %v2048 = vmul.f32 %v2045, %v1914
    %v2049 = vmul.f32 %v2045, %v1918
    %2050 = vset.pattern.permute.xlu0 2
    %2051 = vperm.xlu0 %2050, %v1924
    %v2052 = vpop.permute.xlu0 %2051
    %v2054 = vmul.f32 %v2052, %v1933
    %v2055 = vmul.f32 %v2052, %v1937
    %v2056 = vmul.f32 %v2052, %v1941
    %v2057 = vadd.f32 %v2047, %v2054
    %v2058 = vadd.f32 %v2048, %v2055
    %v2059 = vadd.f32 %v2049, %v2056
    %2060 = vset.pattern.permute.xlu0 2
    %2061 = vperm.xlu0 %2060, %v1950
    %v2062 = vpop.permute.xlu0 %2061
    %v2064 = vmul.f32 %v2062, %v1959
    %v2065 = vmul.f32 %v2062, %v1963
    %v2066 = vmul.f32 %v2062, %v1967
    %v2067 = vadd.f32 %v2057, %v2064
    %v2068 = vadd.f32 %v2058, %v2065
    %v2069 = vadd.f32 %v2059, %v2066
    %2070 = vset.pattern.permute.xlu0 2
    %2071 = vperm.xlu0 %2070, %v1976
    %v2072 = vpop.permute.xlu0 %2071
    %v2074 = vmul.f32 %v2072, %v1985
    %v2075 = vmul.f32 %v2072, %v1989
    %v2076 = vmul.f32 %v2072, %v1993
    %v2077 = vadd.f32 %v2067, %v2074
    %v2078 = vadd.f32 %v2068, %v2075
    %v2079 = vadd.f32 %v2069, %v2076
    %v2080 = vadd.f32 %v2077, %v1853
    %v2081 = vadd.f32 %v2078, %v1855
    %v2082 = vadd.f32 %v2079, %v1894
    %2083 = vset.pattern.permute.xlu0 3
    %2084 = vperm.xlu0 %2083, %v1901
    %v2085 = vpop.permute.xlu0 %2084
    %v2087 = vmul.f32 %v2085, %v1910
    %v2088 = vmul.f32 %v2085, %v1914
    %v2089 = vmul.f32 %v2085, %v1918
    %2090 = vset.pattern.permute.xlu0 3
    %2091 = vperm.xlu0 %2090, %v1924
    %v2092 = vpop.permute.xlu0 %2091
    %v2094 = vmul.f32 %v2092, %v1933
    %v2095 = vmul.f32 %v2092, %v1937
    %v2096 = vmul.f32 %v2092, %v1941
    %v2097 = vadd.f32 %v2087, %v2094
    %v2098 = vadd.f32 %v2088, %v2095
    %v2099 = vadd.f32 %v2089, %v2096
    %2100 = vset.pattern.permute.xlu0 3
    %2101 = vperm.xlu0 %2100, %v1950
    %v2102 = vpop.permute.xlu0 %2101
    %v2104 = vmul.f32 %v2102, %v1959
    %v2105 = vmul.f32 %v2102, %v1963
    %v2106 = vmul.f32 %v2102, %v1967
    %v2107 = vadd.f32 %v2097, %v2104
    %v2108 = vadd.f32 %v2098, %v2105
    %v2109 = vadd.f32 %v2099, %v2106
    %2110 = vset.pattern.permute.xlu0 3
    %2111 = vperm.xlu0 %2110, %v1976
    %v2112 = vpop.permute.xlu0 %2111
    %v2114 = vmul.f32 %v2112, %v1985
    %v2115 = vmul.f32 %v2112, %v1989
    %v2116 = vmul.f32 %v2112, %v1993
    %v2117 = vadd.f32 %v2107, %v2114
    %v2118 = vadd.f32 %v2108, %v2115
    %v2119 = vadd.f32 %v2109, %v2116
    %v2120 = vadd.f32 %v2117, %v1853
    %v2121 = vadd.f32 %v2118, %v1855
    %v2122 = vadd.f32 %v2119, %v1894
    %2123 = vset.pattern.permute.xlu0 4
    %2124 = vperm.xlu0 %2123, %v1901
    %v2125 = vpop.permute.xlu0 %2124
    %v2127 = vmul.f32 %v2125, %v1910
    %v2128 = vmul.f32 %v2125, %v1914
    %v2129 = vmul.f32 %v2125, %v1918
    %2130 = vset.pattern.permute.xlu0 4
    %2131 = vperm.xlu0 %2130, %v1924
    %v2132 = vpop.permute.xlu0 %2131
    %v2134 = vmul.f32 %v2132, %v1933
    %v2135 = vmul.f32 %v2132, %v1937
    %v2136 = vmul.f32 %v2132, %v1941
    %v2137 = vadd.f32 %v2127, %v2134
    %v2138 = vadd.f32 %v2128, %v2135
    %v2139 = vadd.f32 %v2129, %v2136
    %2140 = vset.pattern.permute.xlu0 4
    %2141 = vperm.xlu0 %2140, %v1950
    %v2142 = vpop.permute.xlu0 %2141
    %v2144 = vmul.f32 %v2142, %v1959
    %v2145 = vmul.f32 %v2142, %v1963
    %v2146 = vmul.f32 %v2142, %v1967
    %v2147 = vadd.f32 %v2137, %v2144
    %v2148 = vadd.f32 %v2138, %v2145
    %v2149 = vadd.f32 %v2139, %v2146
    %2150 = vset.pattern.permute.xlu0 4
    %2151 = vperm.xlu0 %2150, %v1976
    %v2152 = vpop.permute.xlu0 %2151
    %v2154 = vmul.f32 %v2152, %v1985
    %v2155 = vmul.f32 %v2152, %v1989
    %v2156 = vmul.f32 %v2152, %v1993
    %v2157 = vadd.f32 %v2147, %v2154
    %v2158 = vadd.f32 %v2148, %v2155
    %v2159 = vadd.f32 %v2149, %v2156
    %v2160 = vadd.f32 %v2157, %v1853
    %v2161 = vadd.f32 %v2158, %v1855
    %v2162 = vadd.f32 %v2159, %v1894
    %2163 = vset.pattern.permute.xlu0 5
    %2164 = vperm.xlu0 %2163, %v1901
    %v2165 = vpop.permute.xlu0 %2164
    %v2167 = vmul.f32 %v2165, %v1910
    %v2168 = vmul.f32 %v2165, %v1914
    %v2169 = vmul.f32 %v2165, %v1918
    %2170 = vset.pattern.permute.xlu0 5
    %2171 = vperm.xlu0 %2170, %v1924
    %v2172 = vpop.permute.xlu0 %2171
    %v2174 = vmul.f32 %v2172, %v1933
    %v2175 = vmul.f32 %v2172, %v1937
    %v2176 = vmul.f32 %v2172, %v1941
    %v2177 = vadd.f32 %v2167, %v2174
    %v2178 = vadd.f32 %v2168, %v2175
    %v2179 = vadd.f32 %v2169, %v2176
    %2180 = vset.pattern.permute.xlu0 5
    %2181 = vperm.xlu0 %2180, %v1950
    %v2182 = vpop.permute.xlu0 %2181
    %v2184 = vmul.f32 %v2182, %v1959
    %v2185 = vmul.f32 %v2182, %v1963
    %v2186 = vmul.f32 %v2182, %v1967
    %v2187 = vadd.f32 %v2177, %v2184
    %v2188 = vadd.f32 %v2178, %v2185
    %v2189 = vadd.f32 %v2179, %v2186
    %2190 = vset.pattern.permute.xlu0 5
    %2191 = vperm.xlu0 %2190, %v1976
    %v2192 = vpop.permute.xlu0 %2191
    %v2194 = vmul.f32 %v2192, %v1985
    %v2195 = vmul.f32 %v2192, %v1989
    %v2196 = vmul.f32 %v2192, %v1993
    %v2197 = vadd.f32 %v2187, %v2194
    %v2198 = vadd.f32 %v2188, %v2195
    %v2199 = vadd.f32 %v2189, %v2196
    %v2200 = vadd.f32 %v2197, %v1853
    %v2201 = vadd.f32 %v2198, %v1855
    %v2202 = vadd.f32 %v2199, %v1894
    %2203 = vset.pattern.permute.xlu0 6
    %2204 = vperm.xlu0 %2203, %v1901
    %v2205 = vpop.permute.xlu0 %2204
    %v2207 = vmul.f32 %v2205, %v1910
    %v2208 = vmul.f32 %v2205, %v1914
    %v2209 = vmul.f32 %v2205, %v1918
    %2210 = vset.pattern.permute.xlu0 6
    %2211 = vperm.xlu0 %2210, %v1924
    %v2212 = vpop.permute.xlu0 %2211
    %v2214 = vmul.f32 %v2212, %v1933
    %v2215 = vmul.f32 %v2212, %v1937
    %v2216 = vmul.f32 %v2212, %v1941
    %v2217 = vadd.f32 %v2207, %v2214
    %v2218 = vadd.f32 %v2208, %v2215
    %v2219 = vadd.f32 %v2209, %v2216
    %2220 = vset.pattern.permute.xlu0 6
    %2221 = vperm.xlu0 %2220, %v1950
    %v2222 = vpop.permute.xlu0 %2221
    %v2224 = vmul.f32 %v2222, %v1959
    %v2225 = vmul.f32 %v2222, %v1963
    %v2226 = vmul.f32 %v2222, %v1967
    %v2227 = vadd.f32 %v2217, %v2224
    %v2228 = vadd.f32 %v2218, %v2225
    %v2229 = vadd.f32 %v2219, %v2226
    %2230 = vset.pattern.permute.xlu0 6
    %2231 = vperm.xlu0 %2230, %v1976
    %v2232 = vpop.permute.xlu0 %2231
    %v2234 = vmul.f32 %v2232, %v1985
    %v2235 = vmul.f32 %v2232, %v1989
    %v2236 = vmul.f32 %v2232, %v1993
    %v2237 = vadd.f32 %v2227, %v2234
    %v2238 = vadd.f32 %v2228, %v2235
    %v2239 = vadd.f32 %v2229, %v2236
    %v2240 = vadd.f32 %v2237, %v1853
    %v2241 = vadd.f32 %v2238, %v1855
    %v2242 = vadd.f32 %v2239, %v1894
    %2243 = vst [vmem:[#allocation2] sm:$0xff] 0.0
    %2244 = vst [vmem:[#allocation2 + $0x8] sm:$0xff] 0.0
    %v2246 = vlaneseq
    %v2247 = vshrl.u32 %v2246, 7
    %v2248 = vsub.s32 0, %v2247
    %v2249 = vrot.slane %v526, %v2248
    %v2250 = vlaneseq
    %v2251 = vshrl.u32 %v2250, 7
    %v2252 = vsub.s32 1, %v2251
    %v2253 = vrot.slane %v526, %v2252
    %v2254 = vlaneseq
    %v2255 = vshrl.u32 %v2254, 7
    %v2256 = vsub.s32 2, %v2255
    %v2257 = vrot.slane %v526, %v2256
    %2261 = vmatprep.subr.bf16.mxu0 %v523
    %2262 = vmatpush1.bf16.msra.mxu0 %v522
    %2263 = vmatprep.subr.bf16.mxu0 %v520
    %2264 = vmatpush1.bf16.msra.mxu0 %v519
    %2265 = vmatprep.subr.bf16.mxu0 %v517
    %2266 = vmatpush1.bf16.msra.mxu0 %v516
    %2267 = vmatprep.subr.bf16.mxu0 %v514
    %2268 = vmatpush1.bf16.msra.mxu0 %v513
    %2269 = vmatprep.subr.bf16.mxu0 %v511
    %2270 = vmatpush1.bf16.msra.mxu0 %v510
    %2271 = vmatprep.subr.bf16.mxu0 %v508
    %2272 = vmatpush1.bf16.msra.mxu0 %v507
    %2273 = vmatprep.subr.bf16.mxu0 %v505
    %2274 = vmatpush1.bf16.msra.mxu0 %v504
    %2275 = vmatprep.subr.bf16.mxu0 %v502
    %2276 = vmatpush1.bf16.msra.mxu0 %v501
    %2277 = vmatprep.subr.bf16.mxu0 0
    %2278 = vmatpush2.bf16.msra.mxu0 0
    %2279 = vmatprep.subr.bf16.mxu0 0
    %2280 = vmatpush2.bf16.msra.mxu0 0
    %2281 = vmatprep.subr.bf16.mxu0 0
    %2282 = vmatpush2.bf16.msra.mxu0 0
    %2283 = vmatprep.subr.bf16.mxu0 0
    %2284 = vmatpush2.bf16.msra.mxu0 0
    %2285 = vmatprep.subr.bf16.mxu0 0
    %2286 = vmatpush2.bf16.msra.mxu0 0
    %2287 = vmatprep.subr.bf16.mxu0 0
    %2288 = vmatpush2.bf16.msra.mxu0 0
    %2289 = vmatprep.subr.bf16.mxu0 0
    %2290 = vmatpush2.bf16.msra.mxu0 0
    %2291 = vmatprep.subr.bf16.mxu0 0
    %2292 = vmatpush2.bf16.msra.mxu0 0
    %2293 = vmatprep.mubr.bf16.mxu0 0
    %2294 = vmatmul.mubr.bf16.gmra.mxu0 %v1776
    %v2295 = vpop.f32.mrf.mxu0
    %v2296 = vadd.f32 %v2249, %v2295
    %v2297 = vpop.f32.mrf.mxu0
    %v2298 = vadd.f32 %v2253, %v2297
    %v2299 = vpop.f32.mrf.mxu0
    %v2300 = vpop.f32.mrf.mxu0
    %2301 = vdwg.mxu0
    %2302 = vmatprep.subr.bf16.mxu0 0
    %2303 = vmatpush1.bf16.msra.mxu0 %v524
    %2304 = vmatprep.subr.bf16.mxu0 0
    %2305 = vmatpush1.bf16.msra.mxu0 %v521
    %2306 = vmatprep.subr.bf16.mxu0 0
    %2307 = vmatpush1.bf16.msra.mxu0 %v518
    %2308 = vmatprep.subr.bf16.mxu0 0
    %2309 = vmatpush1.bf16.msra.mxu0 %v515
    %2310 = vmatprep.subr.bf16.mxu0 0
    %2311 = vmatpush1.bf16.msra.mxu0 %v512
    %2312 = vmatprep.subr.bf16.mxu0 0
    %2313 = vmatpush1.bf16.msra.mxu0 %v509
    %2314 = vmatprep.subr.bf16.mxu0 0
    %2315 = vmatpush1.bf16.msra.mxu0 %v506
    %2316 = vmatprep.subr.bf16.mxu0 0
    %2317 = vmatpush1.bf16.msra.mxu0 %v503
    %2318 = vmatprep.subr.bf16.mxu0 0
    %2319 = vmatpush2.bf16.msra.mxu0 0
    %2320 = vmatprep.subr.bf16.mxu0 0
    %2321 = vmatpush2.bf16.msra.mxu0 0
    %2322 = vmatprep.subr.bf16.mxu0 0
    %2323 = vmatpush2.bf16.msra.mxu0 0
    %2324 = vmatprep.subr.bf16.mxu0 0
    %2325 = vmatpush2.bf16.msra.mxu0 0
    %2326 = vmatprep.subr.bf16.mxu0 0
    %2327 = vmatpush2.bf16.msra.mxu0 0
    %2328 = vmatprep.subr.bf16.mxu0 0
    %2329 = vmatpush2.bf16.msra.mxu0 0
    %2330 = vmatprep.subr.bf16.mxu0 0
    %2331 = vmatpush2.bf16.msra.mxu0 0
    %2332 = vmatprep.subr.bf16.mxu0 0
    %2333 = vmatpush2.bf16.msra.mxu0 0
    %2334 = vmatprep.mubr.bf16.mxu0 0
    %2335 = vmatmul.mubr.bf16.gmra.mxu0 %v1776
    %v2336 = vpop.f32.mrf.mxu0
    %v2337 = vadd.f32 %v2257, %v2336
    %v2338 = vpop.f32.mrf.mxu0
    %v2339 = vpop.f32.mrf.mxu0
    %v2340 = vpop.f32.mrf.mxu0
    %2341 = vdwg.mxu0
    %v2342 = vadd.f32 %v2000, %v2296
    %v2343 = vxor.u32 %v2342, 2147483648
    %v2344 = vmul.f32 %v2343, 1.442695
    %v2345 = vpow.pop %v2344
    %v2346 = vadd.f32 %v2345, 1.0
    %v2347 = vrcp.pop %v2346
    %v2348 = vmul.f32 1.0, %v2347
    %v2349 = vadd.f32 %v2001, %v2298
    %v2350 = vxor.u32 %v2349, 2147483648
    %v2351 = vmul.f32 %v2350, 1.442695
    %v2352 = vpow.pop %v2351
    %v2353 = vadd.f32 %v2352, 1.0
    %v2354 = vrcp.pop %v2353
    %v2355 = vmul.f32 1.0, %v2354
    %v2356 = vmul.f32 %v2348, %v2337
    %v2357 = vadd.f32 %v2002, %v2356
    %v2358 = vtanh.pop %v2357
    %v2359 = vsub.f32 1.0, %v2355
    %v2360 = vmul.f32 %v2359, %v2358
    %v2361 = vmul.f32 %v2355, %v1727
    %v2362 = vadd.f32 %v2360, %v2361
    %2363 = vst [vmem:[#allocation2] sm:$0x1] %v2362
    %2364 = vst [vmem:[#allocation2 + $0x7] sm:$0x2] %v2362
    %v2365 = vpack.c.bf16 %v2362, %v2362
    %2366 = vmatprep.subr.bf16.mxu0 %v523
    %2367 = vmatpush1.bf16.msra.mxu0 %v522
    %2368 = vmatprep.subr.bf16.mxu0 %v520
    %2369 = vmatpush1.bf16.msra.mxu0 %v519
    %2370 = vmatprep.subr.bf16.mxu0 %v517
    %2371 = vmatpush1.bf16.msra.mxu0 %v516
    %2372 = vmatprep.subr.bf16.mxu0 %v514
    %2373 = vmatpush1.bf16.msra.mxu0 %v513
    %2374 = vmatprep.subr.bf16.mxu0 %v511
    %2375 = vmatpush1.bf16.msra.mxu0 %v510
    %2376 = vmatprep.subr.bf16.mxu0 %v508
    %2377 = vmatpush1.bf16.msra.mxu0 %v507
    %2378 = vmatprep.subr.bf16.mxu0 %v505
    %2379 = vmatpush1.bf16.msra.mxu0 %v504
    %2380 = vmatprep.subr.bf16.mxu0 %v502
    %2381 = vmatpush1.bf16.msra.mxu0 %v501
    %2382 = vmatprep.subr.bf16.mxu0 0
    %2383 = vmatpush2.bf16.msra.mxu0 0
    %2384 = vmatprep.subr.bf16.mxu0 0
    %2385 = vmatpush2.bf16.msra.mxu0 0
    %2386 = vmatprep.subr.bf16.mxu0 0
    %2387 = vmatpush2.bf16.msra.mxu0 0
    %2388 = vmatprep.subr.bf16.mxu0 0
    %2389 = vmatpush2.bf16.msra.mxu0 0
    %2390 = vmatprep.subr.bf16.mxu0 0
    %2391 = vmatpush2.bf16.msra.mxu0 0
    %2392 = vmatprep.subr.bf16.mxu0 0
    %2393 = vmatpush2.bf16.msra.mxu0 0
    %2394 = vmatprep.subr.bf16.mxu0 0
    %2395 = vmatpush2.bf16.msra.mxu0 0
    %2396 = vmatprep.subr.bf16.mxu0 0
    %2397 = vmatpush2.bf16.msra.mxu0 0
    %2398 = vmatprep.mubr.bf16.mxu0 0
    %2399 = vmatmul.mubr.bf16.gmra.mxu0 %v2365
    %v2400 = vpop.f32.mrf.mxu0
    %v2401 = vadd.f32 %v2249, %v2400
    %v2402 = vpop.f32.mrf.mxu0
    %v2403 = vadd.f32 %v2253, %v2402
    %v2404 = vpop.f32.mrf.mxu0
    %v2405 = vpop.f32.mrf.mxu0
    %2406 = vdwg.mxu0
    %2407 = vmatprep.subr.bf16.mxu0 0
    %2408 = vmatpush1.bf16.msra.mxu0 %v524
    %2409 = vmatprep.subr.bf16.mxu0 0
    %2410 = vmatpush1.bf16.msra.mxu0 %v521
    %2411 = vmatprep.subr.bf16.mxu0 0
    %2412 = vmatpush1.bf16.msra.mxu0 %v518
    %2413 = vmatprep.subr.bf16.mxu0 0
    %2414 = vmatpush1.bf16.msra.mxu0 %v515
    %2415 = vmatprep.subr.bf16.mxu0 0
    %2416 = vmatpush1.bf16.msra.mxu0 %v512
    %2417 = vmatprep.subr.bf16.mxu0 0
    %2418 = vmatpush1.bf16.msra.mxu0 %v509
    %2419 = vmatprep.subr.bf16.mxu0 0
    %2420 = vmatpush1.bf16.msra.mxu0 %v506
    %2421 = vmatprep.subr.bf16.mxu0 0
    %2422 = vmatpush1.bf16.msra.mxu0 %v503
    %2423 = vmatprep.subr.bf16.mxu0 0
    %2424 = vmatpush2.bf16.msra.mxu0 0
    %2425 = vmatprep.subr.bf16.mxu0 0
    %2426 = vmatpush2.bf16.msra.mxu0 0
    %2427 = vmatprep.subr.bf16.mxu0 0
    %2428 = vmatpush2.bf16.msra.mxu0 0
    %2429 = vmatprep.subr.bf16.mxu0 0
    %2430 = vmatpush2.bf16.msra.mxu0 0
    %2431 = vmatprep.subr.bf16.mxu0 0
    %2432 = vmatpush2.bf16.msra.mxu0 0
    %2433 = vmatprep.subr.bf16.mxu0 0
    %2434 = vmatpush2.bf16.msra.mxu0 0
    %2435 = vmatprep.subr.bf16.mxu0 0
    %2436 = vmatpush2.bf16.msra.mxu0 0
    %2437 = vmatprep.subr.bf16.mxu0 0
    %2438 = vmatpush2.bf16.msra.mxu0 0
    %2439 = vmatprep.mubr.bf16.mxu0 0
    %2440 = vmatmul.mubr.bf16.gmra.mxu0 %v2365
    %v2441 = vpop.f32.mrf.mxu0
    %v2442 = vadd.f32 %v2257, %v2441
    %v2443 = vpop.f32.mrf.mxu0
    %v2444 = vpop.f32.mrf.mxu0
    %v2445 = vpop.f32.mrf.mxu0
    %2446 = vdwg.mxu0
    %v2447 = vadd.f32 %v2040, %v2401
    %v2448 = vxor.u32 %v2447, 2147483648
    %v2449 = vmul.f32 %v2448, 1.442695
    %v2450 = vpow.pop %v2449
    %v2451 = vadd.f32 %v2450, 1.0
    %v2452 = vrcp.pop %v2451
    %v2453 = vmul.f32 1.0, %v2452
    %v2454 = vadd.f32 %v2041, %v2403
    %v2455 = vxor.u32 %v2454, 2147483648
    %v2456 = vmul.f32 %v2455, 1.442695
    %v2457 = vpow.pop %v2456
    %v2458 = vadd.f32 %v2457, 1.0
    %v2459 = vrcp.pop %v2458
    %v2460 = vmul.f32 1.0, %v2459
    %v2461 = vmul.f32 %v2453, %v2442
    %v2462 = vadd.f32 %v2042, %v2461
    %v2463 = vtanh.pop %v2462
    %v2464 = vsub.f32 1.0, %v2460
    %v2465 = vmul.f32 %v2464, %v2463
    %v2466 = vmul.f32 %v2460, %v2362
    %v2467 = vadd.f32 %v2465, %v2466
    %2468 = vst [vmem:[#allocation2 + $0x1] sm:$0x1] %v2467
    %2469 = vst [vmem:[#allocation2 + $0x8] sm:$0x2] %v2467
    %v2470 = vpack.c.bf16 %v2467, %v2467
    %2471 = vmatprep.subr.bf16.mxu0 %v523
    %2472 = vmatpush1.bf16.msra.mxu0 %v522
    %2473 = vmatprep.subr.bf16.mxu0 %v520
    %2474 = vmatpush1.bf16.msra.mxu0 %v519
    %2475 = vmatprep.subr.bf16.mxu0 %v517
    %2476 = vmatpush1.bf16.msra.mxu0 %v516
    %2477 = vmatprep.subr.bf16.mxu0 %v514
    %2478 = vmatpush1.bf16.msra.mxu0 %v513
    %2479 = vmatprep.subr.bf16.mxu0 %v511
    %2480 = vmatpush1.bf16.msra.mxu0 %v510
    %2481 = vmatprep.subr.bf16.mxu0 %v508
    %2482 = vmatpush1.bf16.msra.mxu0 %v507
    %2483 = vmatprep.subr.bf16.mxu0 %v505
    %2484 = vmatpush1.bf16.msra.mxu0 %v504
    %2485 = vmatprep.subr.bf16.mxu0 %v502
    %2486 = vmatpush1.bf16.msra.mxu0 %v501
    %2487 = vmatprep.subr.bf16.mxu0 0
    %2488 = vmatpush2.bf16.msra.mxu0 0
    %2489 = vmatprep.subr.bf16.mxu0 0
    %2490 = vmatpush2.bf16.msra.mxu0 0
    %2491 = vmatprep.subr.bf16.mxu0 0
    %2492 = vmatpush2.bf16.msra.mxu0 0
    %2493 = vmatprep.subr.bf16.mxu0 0
    %2494 = vmatpush2.bf16.msra.mxu0 0
    %2495 = vmatprep.subr.bf16.mxu0 0
    %2496 = vmatpush2.bf16.msra.mxu0 0
    %2497 = vmatprep.subr.bf16.mxu0 0
    %2498 = vmatpush2.bf16.msra.mxu0 0
    %2499 = vmatprep.subr.bf16.mxu0 0
    %2500 = vmatpush2.bf16.msra.mxu0 0
    %2501 = vmatprep.subr.bf16.mxu0 0
    %2502 = vmatpush2.bf16.msra.mxu0 0
    %2503 = vmatprep.mubr.bf16.mxu0 0
    %2504 = vmatmul.mubr.bf16.gmra.mxu0 %v2470
    %v2505 = vpop.f32.mrf.mxu0
    %v2506 = vadd.f32 %v2249, %v2505
    %v2507 = vpop.f32.mrf.mxu0
    %v2508 = vadd.f32 %v2253, %v2507
    %v2509 = vpop.f32.mrf.mxu0
    %v2510 = vpop.f32.mrf.mxu0
    %2511 = vdwg.mxu0
    %2512 = vmatprep.subr.bf16.mxu0 0
    %2513 = vmatpush1.bf16.msra.mxu0 %v524
    %2514 = vmatprep.subr.bf16.mxu0 0
    %2515 = vmatpush1.bf16.msra.mxu0 %v521
    %2516 = vmatprep.subr.bf16.mxu0 0
    %2517 = vmatpush1.bf16.msra.mxu0 %v518
    %2518 = vmatprep.subr.bf16.mxu0 0
    %2519 = vmatpush1.bf16.msra.mxu0 %v515
    %2520 = vmatprep.subr.bf16.mxu0 0
    %2521 = vmatpush1.bf16.msra.mxu0 %v512
    %2522 = vmatprep.subr.bf16.mxu0 0
    %2523 = vmatpush1.bf16.msra.mxu0 %v509
    %2524 = vmatprep.subr.bf16.mxu0 0
    %2525 = vmatpush1.bf16.msra.mxu0 %v506
    %2526 = vmatprep.subr.bf16.mxu0 0
    %2527 = vmatpush1.bf16.msra.mxu0 %v503
    %2528 = vmatprep.subr.bf16.mxu0 0
    %2529 = vmatpush2.bf16.msra.mxu0 0
    %2530 = vmatprep.subr.bf16.mxu0 0
    %2531 = vmatpush2.bf16.msra.mxu0 0
    %2532 = vmatprep.subr.bf16.mxu0 0
    %2533 = vmatpush2.bf16.msra.mxu0 0
    %2534 = vmatprep.subr.bf16.mxu0 0
    %2535 = vmatpush2.bf16.msra.mxu0 0
    %2536 = vmatprep.subr.bf16.mxu0 0
    %2537 = vmatpush2.bf16.msra.mxu0 0
    %2538 = vmatprep.subr.bf16.mxu0 0
    %2539 = vmatpush2.bf16.msra.mxu0 0
    %2540 = vmatprep.subr.bf16.mxu0 0
    %2541 = vmatpush2.bf16.msra.mxu0 0
    %2542 = vmatprep.subr.bf16.mxu0 0
    %2543 = vmatpush2.bf16.msra.mxu0 0
    %2544 = vmatprep.mubr.bf16.mxu0 0
    %2545 = vmatmul.mubr.bf16.gmra.mxu0 %v2470
    %v2546 = vpop.f32.mrf.mxu0
    %v2547 = vadd.f32 %v2257, %v2546
    %v2548 = vpop.f32.mrf.mxu0
    %v2549 = vpop.f32.mrf.mxu0
    %v2550 = vpop.f32.mrf.mxu0
    %2551 = vdwg.mxu0
    %v2552 = vadd.f32 %v2080, %v2506
    %v2553 = vxor.u32 %v2552, 2147483648
    %v2554 = vmul.f32 %v2553, 1.442695
    %v2555 = vpow.pop %v2554
    %v2556 = vadd.f32 %v2555, 1.0
    %v2557 = vrcp.pop %v2556
    %v2558 = vmul.f32 1.0, %v2557
    %v2559 = vadd.f32 %v2081, %v2508
    %v2560 = vxor.u32 %v2559, 2147483648
    %v2561 = vmul.f32 %v2560, 1.442695
    %v2562 = vpow.pop %v2561
    %v2563 = vadd.f32 %v2562, 1.0
    %v2564 = vrcp.pop %v2563
    %v2565 = vmul.f32 1.0, %v2564
    %v2566 = vmul.f32 %v2558, %v2547
    %v2567 = vadd.f32 %v2082, %v2566
    %v2568 = vtanh.pop %v2567
    %v2569 = vsub.f32 1.0, %v2565
    %v2570 = vmul.f32 %v2569, %v2568
    %v2571 = vmul.f32 %v2565, %v2467
    %v2572 = vadd.f32 %v2570, %v2571
    %2573 = vst [vmem:[#allocation2 + $0x2] sm:$0x1] %v2572
    %2574 = vst [vmem:[#allocation2 + $0x9] sm:$0x2] %v2572
    %v2575 = vpack.c.bf16 %v2572, %v2572
    %2576 = vmatprep.subr.bf16.mxu0 %v523
    %2577 = vmatpush1.bf16.msra.mxu0 %v522
    %2578 = vmatprep.subr.bf16.mxu0 %v520
    %2579 = vmatpush1.bf16.msra.mxu0 %v519
    %2580 = vmatprep.subr.bf16.mxu0 %v517
    %2581 = vmatpush1.bf16.msra.mxu0 %v516
    %2582 = vmatprep.subr.bf16.mxu0 %v514
    %2583 = vmatpush1.bf16.msra.mxu0 %v513
    %2584 = vmatprep.subr.bf16.mxu0 %v511
    %2585 = vmatpush1.bf16.msra.mxu0 %v510
    %2586 = vmatprep.subr.bf16.mxu0 %v508
    %2587 = vmatpush1.bf16.msra.mxu0 %v507
    %2588 = vmatprep.subr.bf16.mxu0 %v505
    %2589 = vmatpush1.bf16.msra.mxu0 %v504
    %2590 = vmatprep.subr.bf16.mxu0 %v502
    %2591 = vmatpush1.bf16.msra.mxu0 %v501
    %2592 = vmatprep.subr.bf16.mxu0 0
    %2593 = vmatpush2.bf16.msra.mxu0 0
    %2594 = vmatprep.subr.bf16.mxu0 0
    %2595 = vmatpush2.bf16.msra.mxu0 0
    %2596 = vmatprep.subr.bf16.mxu0 0
    %2597 = vmatpush2.bf16.msra.mxu0 0
    %2598 = vmatprep.subr.bf16.mxu0 0
    %2599 = vmatpush2.bf16.msra.mxu0 0
    %2600 = vmatprep.subr.bf16.mxu0 0
    %2601 = vmatpush2.bf16.msra.mxu0 0
    %2602 = vmatprep.subr.bf16.mxu0 0
    %2603 = vmatpush2.bf16.msra.mxu0 0
    %2604 = vmatprep.subr.bf16.mxu0 0
    %2605 = vmatpush2.bf16.msra.mxu0 0
    %2606 = vmatprep.subr.bf16.mxu0 0
    %2607 = vmatpush2.bf16.msra.mxu0 0
    %2608 = vmatprep.mubr.bf16.mxu0 0
    %2609 = vmatmul.mubr.bf16.gmra.mxu0 %v2575
    %v2610 = vpop.f32.mrf.mxu0
    %v2611 = vadd.f32 %v2249, %v2610
    %v2612 = vpop.f32.mrf.mxu0
    %v2613 = vadd.f32 %v2253, %v2612
    %v2614 = vpop.f32.mrf.mxu0
    %v2615 = vpop.f32.mrf.mxu0
    %2616 = vdwg.mxu0
    %2617 = vmatprep.subr.bf16.mxu0 0
    %2618 = vmatpush1.bf16.msra.mxu0 %v524
    %2619 = vmatprep.subr.bf16.mxu0 0
    %2620 = vmatpush1.bf16.msra.mxu0 %v521
    %2621 = vmatprep.subr.bf16.mxu0 0
    %2622 = vmatpush1.bf16.msra.mxu0 %v518
    %2623 = vmatprep.subr.bf16.mxu0 0
    %2624 = vmatpush1.bf16.msra.mxu0 %v515
    %2625 = vmatprep.subr.bf16.mxu0 0
    %2626 = vmatpush1.bf16.msra.mxu0 %v512
    %2627 = vmatprep.subr.bf16.mxu0 0
    %2628 = vmatpush1.bf16.msra.mxu0 %v509
    %2629 = vmatprep.subr.bf16.mxu0 0
    %2630 = vmatpush1.bf16.msra.mxu0 %v506
    %2631 = vmatprep.subr.bf16.mxu0 0
    %2632 = vmatpush1.bf16.msra.mxu0 %v503
    %2633 = vmatprep.subr.bf16.mxu0 0
    %2634 = vmatpush2.bf16.msra.mxu0 0
    %2635 = vmatprep.subr.bf16.mxu0 0
    %2636 = vmatpush2.bf16.msra.mxu0 0
    %2637 = vmatprep.subr.bf16.mxu0 0
    %2638 = vmatpush2.bf16.msra.mxu0 0
    %2639 = vmatprep.subr.bf16.mxu0 0
    %2640 = vmatpush2.bf16.msra.mxu0 0
    %2641 = vmatprep.subr.bf16.mxu0 0
    %2642 = vmatpush2.bf16.msra.mxu0 0
    %2643 = vmatprep.subr.bf16.mxu0 0
    %2644 = vmatpush2.bf16.msra.mxu0 0
    %2645 = vmatprep.subr.bf16.mxu0 0
    %2646 = vmatpush2.bf16.msra.mxu0 0
    %2647 = vmatprep.subr.bf16.mxu0 0
    %2648 = vmatpush2.bf16.msra.mxu0 0
    %2649 = vmatprep.mubr.bf16.mxu0 0
    %2650 = vmatmul.mubr.bf16.gmra.mxu0 %v2575
    %v2651 = vpop.f32.mrf.mxu0
    %v2652 = vadd.f32 %v2257, %v2651
    %v2653 = vpop.f32.mrf.mxu0
    %v2654 = vpop.f32.mrf.mxu0
    %v2655 = vpop.f32.mrf.mxu0
    %2656 = vdwg.mxu0
    %v2657 = vadd.f32 %v2120, %v2611
    %v2658 = vxor.u32 %v2657, 2147483648
    %v2659 = vmul.f32 %v2658, 1.442695
    %v2660 = vpow.pop %v2659
    %v2661 = vadd.f32 %v2660, 1.0
    %v2662 = vrcp.pop %v2661
    %v2663 = vmul.f32 1.0, %v2662
    %v2664 = vadd.f32 %v2121, %v2613
    %v2665 = vxor.u32 %v2664, 2147483648
    %v2666 = vmul.f32 %v2665, 1.442695
    %v2667 = vpow.pop %v2666
    %v2668 = vadd.f32 %v2667, 1.0
    %v2669 = vrcp.pop %v2668
    %v2670 = vmul.f32 1.0, %v2669
    %v2671 = vmul.f32 %v2663, %v2652
    %v2672 = vadd.f32 %v2122, %v2671
    %v2673 = vtanh.pop %v2672
    %v2674 = vsub.f32 1.0, %v2670
    %v2675 = vmul.f32 %v2674, %v2673
    %v2676 = vmul.f32 %v2670, %v2572
    %v2677 = vadd.f32 %v2675, %v2676
    %2678 = vst [vmem:[#allocation2 + $0x3] sm:$0x1] %v2677
    %2679 = vst [vmem:[#allocation2 + $0xa] sm:$0x2] %v2677
    %v2680 = vpack.c.bf16 %v2677, %v2677
    %2681 = vmatprep.subr.bf16.mxu0 %v523
    %2682 = vmatpush1.bf16.msra.mxu0 %v522
    %2683 = vmatprep.subr.bf16.mxu0 %v520
    %2684 = vmatpush1.bf16.msra.mxu0 %v519
    %2685 = vmatprep.subr.bf16.mxu0 %v517
    %2686 = vmatpush1.bf16.msra.mxu0 %v516
    %2687 = vmatprep.subr.bf16.mxu0 %v514
    %2688 = vmatpush1.bf16.msra.mxu0 %v513
    %2689 = vmatprep.subr.bf16.mxu0 %v511
    %2690 = vmatpush1.bf16.msra.mxu0 %v510
    %2691 = vmatprep.subr.bf16.mxu0 %v508
    %2692 = vmatpush1.bf16.msra.mxu0 %v507
    %2693 = vmatprep.subr.bf16.mxu0 %v505
    %2694 = vmatpush1.bf16.msra.mxu0 %v504
    %2695 = vmatprep.subr.bf16.mxu0 %v502
    %2696 = vmatpush1.bf16.msra.mxu0 %v501
    %2697 = vmatprep.subr.bf16.mxu0 0
    %2698 = vmatpush2.bf16.msra.mxu0 0
    %2699 = vmatprep.subr.bf16.mxu0 0
    %2700 = vmatpush2.bf16.msra.mxu0 0
    %2701 = vmatprep.subr.bf16.mxu0 0
    %2702 = vmatpush2.bf16.msra.mxu0 0
    %2703 = vmatprep.subr.bf16.mxu0 0
    %2704 = vmatpush2.bf16.msra.mxu0 0
    %2705 = vmatprep.subr.bf16.mxu0 0
    %2706 = vmatpush2.bf16.msra.mxu0 0
    %2707 = vmatprep.subr.bf16.mxu0 0
    %2708 = vmatpush2.bf16.msra.mxu0 0
    %2709 = vmatprep.subr.bf16.mxu0 0
    %2710 = vmatpush2.bf16.msra.mxu0 0
    %2711 = vmatprep.subr.bf16.mxu0 0
    %2712 = vmatpush2.bf16.msra.mxu0 0
    %2713 = vmatprep.mubr.bf16.mxu0 0
    %2714 = vmatmul.mubr.bf16.gmra.mxu0 %v2680
    %v2715 = vpop.f32.mrf.mxu0
    %v2716 = vadd.f32 %v2249, %v2715
    %v2717 = vpop.f32.mrf.mxu0
    %v2718 = vadd.f32 %v2253, %v2717
    %v2719 = vpop.f32.mrf.mxu0
    %v2720 = vpop.f32.mrf.mxu0
    %2721 = vdwg.mxu0
    %2722 = vmatprep.subr.bf16.mxu0 0
    %2723 = vmatpush1.bf16.msra.mxu0 %v524
    %2724 = vmatprep.subr.bf16.mxu0 0
    %2725 = vmatpush1.bf16.msra.mxu0 %v521
    %2726 = vmatprep.subr.bf16.mxu0 0
    %2727 = vmatpush1.bf16.msra.mxu0 %v518
    %2728 = vmatprep.subr.bf16.mxu0 0
    %2729 = vmatpush1.bf16.msra.mxu0 %v515
    %2730 = vmatprep.subr.bf16.mxu0 0
    %2731 = vmatpush1.bf16.msra.mxu0 %v512
    %2732 = vmatprep.subr.bf16.mxu0 0
    %2733 = vmatpush1.bf16.msra.mxu0 %v509
    %2734 = vmatprep.subr.bf16.mxu0 0
    %2735 = vmatpush1.bf16.msra.mxu0 %v506
    %2736 = vmatprep.subr.bf16.mxu0 0
    %2737 = vmatpush1.bf16.msra.mxu0 %v503
    %2738 = vmatprep.subr.bf16.mxu0 0
    %2739 = vmatpush2.bf16.msra.mxu0 0
    %2740 = vmatprep.subr.bf16.mxu0 0
    %2741 = vmatpush2.bf16.msra.mxu0 0
    %2742 = vmatprep.subr.bf16.mxu0 0
    %2743 = vmatpush2.bf16.msra.mxu0 0
    %2744 = vmatprep.subr.bf16.mxu0 0
    %2745 = vmatpush2.bf16.msra.mxu0 0
    %2746 = vmatprep.subr.bf16.mxu0 0
    %2747 = vmatpush2.bf16.msra.mxu0 0
    %2748 = vmatprep.subr.bf16.mxu0 0
    %2749 = vmatpush2.bf16.msra.mxu0 0
    %2750 = vmatprep.subr.bf16.mxu0 0
    %2751 = vmatpush2.bf16.msra.mxu0 0
    %2752 = vmatprep.subr.bf16.mxu0 0
    %2753 = vmatpush2.bf16.msra.mxu0 0
    %2754 = vmatprep.mubr.bf16.mxu0 0
    %2755 = vmatmul.mubr.bf16.gmra.mxu0 %v2680
    %v2756 = vpop.f32.mrf.mxu0
    %v2757 = vadd.f32 %v2257, %v2756
    %v2758 = vpop.f32.mrf.mxu0
    %v2759 = vpop.f32.mrf.mxu0
    %v2760 = vpop.f32.mrf.mxu0
    %2761 = vdwg.mxu0
    %v2762 = vadd.f32 %v2160, %v2716
    %v2763 = vxor.u32 %v2762, 2147483648
    %v2764 = vmul.f32 %v2763, 1.442695
    %v2765 = vpow.pop %v2764
    %v2766 = vadd.f32 %v2765, 1.0
    %v2767 = vrcp.pop %v2766
    %v2768 = vmul.f32 1.0, %v2767
    %v2769 = vadd.f32 %v2161, %v2718
    %v2770 = vxor.u32 %v2769, 2147483648
    %v2771 = vmul.f32 %v2770, 1.442695
    %v2772 = vpow.pop %v2771
    %v2773 = vadd.f32 %v2772, 1.0
    %v2774 = vrcp.pop %v2773
    %v2775 = vmul.f32 1.0, %v2774
    %v2776 = vmul.f32 %v2768, %v2757
    %v2777 = vadd.f32 %v2162, %v2776
    %v2778 = vtanh.pop %v2777
    %v2779 = vsub.f32 1.0, %v2775
    %v2780 = vmul.f32 %v2779, %v2778
    %v2781 = vmul.f32 %v2775, %v2677
    %v2782 = vadd.f32 %v2780, %v2781
    %2783 = vst [vmem:[#allocation2 + $0x4] sm:$0x1] %v2782
    %2784 = vst [vmem:[#allocation2 + $0xb] sm:$0x2] %v2782
    %v2785 = vpack.c.bf16 %v2782, %v2782
    %2786 = vmatprep.subr.bf16.mxu0 %v523
    %2787 = vmatpush1.bf16.msra.mxu0 %v522
    %2788 = vmatprep.subr.bf16.mxu0 %v520
    %2789 = vmatpush1.bf16.msra.mxu0 %v519
    %2790 = vmatprep.subr.bf16.mxu0 %v517
    %2791 = vmatpush1.bf16.msra.mxu0 %v516
    %2792 = vmatprep.subr.bf16.mxu0 %v514
    %2793 = vmatpush1.bf16.msra.mxu0 %v513
    %2794 = vmatprep.subr.bf16.mxu0 %v511
    %2795 = vmatpush1.bf16.msra.mxu0 %v510
    %2796 = vmatprep.subr.bf16.mxu0 %v508
    %2797 = vmatpush1.bf16.msra.mxu0 %v507
    %2798 = vmatprep.subr.bf16.mxu0 %v505
    %2799 = vmatpush1.bf16.msra.mxu0 %v504
    %2800 = vmatprep.subr.bf16.mxu0 %v502
    %2801 = vmatpush1.bf16.msra.mxu0 %v501
    %2802 = vmatprep.subr.bf16.mxu0 0
    %2803 = vmatpush2.bf16.msra.mxu0 0
    %2804 = vmatprep.subr.bf16.mxu0 0
    %2805 = vmatpush2.bf16.msra.mxu0 0
    %2806 = vmatprep.subr.bf16.mxu0 0
    %2807 = vmatpush2.bf16.msra.mxu0 0
    %2808 = vmatprep.subr.bf16.mxu0 0
    %2809 = vmatpush2.bf16.msra.mxu0 0
    %2810 = vmatprep.subr.bf16.mxu0 0
    %2811 = vmatpush2.bf16.msra.mxu0 0
    %2812 = vmatprep.subr.bf16.mxu0 0
    %2813 = vmatpush2.bf16.msra.mxu0 0
    %2814 = vmatprep.subr.bf16.mxu0 0
    %2815 = vmatpush2.bf16.msra.mxu0 0
    %2816 = vmatprep.subr.bf16.mxu0 0
    %2817 = vmatpush2.bf16.msra.mxu0 0
    %2818 = vmatprep.mubr.bf16.mxu0 0
    %2819 = vmatmul.mubr.bf16.gmra.mxu0 %v2785
    %v2820 = vpop.f32.mrf.mxu0
    %v2821 = vadd.f32 %v2249, %v2820
    %v2822 = vpop.f32.mrf.mxu0
    %v2823 = vadd.f32 %v2253, %v2822
    %v2824 = vpop.f32.mrf.mxu0
    %v2825 = vpop.f32.mrf.mxu0
    %2826 = vdwg.mxu0
    %2827 = vmatprep.subr.bf16.mxu0 0
    %2828 = vmatpush1.bf16.msra.mxu0 %v524
    %2829 = vmatprep.subr.bf16.mxu0 0
    %2830 = vmatpush1.bf16.msra.mxu0 %v521
    %2831 = vmatprep.subr.bf16.mxu0 0
    %2832 = vmatpush1.bf16.msra.mxu0 %v518
    %2833 = vmatprep.subr.bf16.mxu0 0
    %2834 = vmatpush1.bf16.msra.mxu0 %v515
    %2835 = vmatprep.subr.bf16.mxu0 0
    %2836 = vmatpush1.bf16.msra.mxu0 %v512
    %2837 = vmatprep.subr.bf16.mxu0 0
    %2838 = vmatpush1.bf16.msra.mxu0 %v509
    %2839 = vmatprep.subr.bf16.mxu0 0
    %2840 = vmatpush1.bf16.msra.mxu0 %v506
    %2841 = vmatprep.subr.bf16.mxu0 0
    %2842 = vmatpush1.bf16.msra.mxu0 %v503
    %2843 = vmatprep.subr.bf16.mxu0 0
    %2844 = vmatpush2.bf16.msra.mxu0 0
    %2845 = vmatprep.subr.bf16.mxu0 0
    %2846 = vmatpush2.bf16.msra.mxu0 0
    %2847 = vmatprep.subr.bf16.mxu0 0
    %2848 = vmatpush2.bf16.msra.mxu0 0
    %2849 = vmatprep.subr.bf16.mxu0 0
    %2850 = vmatpush2.bf16.msra.mxu0 0
    %2851 = vmatprep.subr.bf16.mxu0 0
    %2852 = vmatpush2.bf16.msra.mxu0 0
    %2853 = vmatprep.subr.bf16.mxu0 0
    %2854 = vmatpush2.bf16.msra.mxu0 0
    %2855 = vmatprep.subr.bf16.mxu0 0
    %2856 = vmatpush2.bf16.msra.mxu0 0
    %2857 = vmatprep.subr.bf16.mxu0 0
    %2858 = vmatpush2.bf16.msra.mxu0 0
    %2859 = vmatprep.mubr.bf16.mxu0 0
    %2860 = vmatmul.mubr.bf16.gmra.mxu0 %v2785
    %v2861 = vpop.f32.mrf.mxu0
    %v2862 = vadd.f32 %v2257, %v2861
    %v2863 = vpop.f32.mrf.mxu0
    %v2864 = vpop.f32.mrf.mxu0
    %v2865 = vpop.f32.mrf.mxu0
    %2866 = vdwg.mxu0
    %v2867 = vadd.f32 %v2200, %v2821
    %v2868 = vxor.u32 %v2867, 2147483648
    %v2869 = vmul.f32 %v2868, 1.442695
    %v2870 = vpow.pop %v2869
    %v2871 = vadd.f32 %v2870, 1.0
    %v2872 = vrcp.pop %v2871
    %v2873 = vmul.f32 1.0, %v2872
    %v2874 = vadd.f32 %v2201, %v2823
    %v2875 = vxor.u32 %v2874, 2147483648
    %v2876 = vmul.f32 %v2875, 1.442695
    %v2877 = vpow.pop %v2876
    %v2878 = vadd.f32 %v2877, 1.0
    %v2879 = vrcp.pop %v2878
    %v2880 = vmul.f32 1.0, %v2879
    %v2881 = vmul.f32 %v2873, %v2862
    %v2882 = vadd.f32 %v2202, %v2881
    %v2883 = vtanh.pop %v2882
    %v2884 = vsub.f32 1.0, %v2880
    %v2885 = vmul.f32 %v2884, %v2883
    %v2886 = vmul.f32 %v2880, %v2782
    %v2887 = vadd.f32 %v2885, %v2886
    %2888 = vst [vmem:[#allocation2 + $0x5] sm:$0x1] %v2887
    %2889 = vst [vmem:[#allocation2 + $0xc] sm:$0x2] %v2887
    %v2890 = vpack.c.bf16 %v2887, %v2887
    %2891 = vmatprep.subr.bf16.mxu0 %v523
    %2892 = vmatpush1.bf16.msra.mxu0 %v522
    %2893 = vmatprep.subr.bf16.mxu0 %v520
    %2894 = vmatpush1.bf16.msra.mxu0 %v519
    %2895 = vmatprep.subr.bf16.mxu0 %v517
    %2896 = vmatpush1.bf16.msra.mxu0 %v516
    %2897 = vmatprep.subr.bf16.mxu0 %v514
    %2898 = vmatpush1.bf16.msra.mxu0 %v513
    %2899 = vmatprep.subr.bf16.mxu0 %v511
    %2900 = vmatpush1.bf16.msra.mxu0 %v510
    %2901 = vmatprep.subr.bf16.mxu0 %v508
    %2902 = vmatpush1.bf16.msra.mxu0 %v507
    %2903 = vmatprep.subr.bf16.mxu0 %v505
    %2904 = vmatpush1.bf16.msra.mxu0 %v504
    %2905 = vmatprep.subr.bf16.mxu0 %v502
    %2906 = vmatpush1.bf16.msra.mxu0 %v501
    %2907 = vmatprep.subr.bf16.mxu0 0
    %2908 = vmatpush2.bf16.msra.mxu0 0
    %2909 = vmatprep.subr.bf16.mxu0 0
    %2910 = vmatpush2.bf16.msra.mxu0 0
    %2911 = vmatprep.subr.bf16.mxu0 0
    %2912 = vmatpush2.bf16.msra.mxu0 0
    %2913 = vmatprep.subr.bf16.mxu0 0
    %2914 = vmatpush2.bf16.msra.mxu0 0
    %2915 = vmatprep.subr.bf16.mxu0 0
    %2916 = vmatpush2.bf16.msra.mxu0 0
    %2917 = vmatprep.subr.bf16.mxu0 0
    %2918 = vmatpush2.bf16.msra.mxu0 0
    %2919 = vmatprep.subr.bf16.mxu0 0
    %2920 = vmatpush2.bf16.msra.mxu0 0
    %2921 = vmatprep.subr.bf16.mxu0 0
    %2922 = vmatpush2.bf16.msra.mxu0 0
    %2923 = vmatprep.mubr.bf16.mxu0 0
    %2924 = vmatmul.mubr.bf16.gmra.mxu0 %v2890
    %v2925 = vpop.f32.mrf.mxu0
    %v2926 = vadd.f32 %v2249, %v2925
    %v2927 = vpop.f32.mrf.mxu0
    %v2928 = vadd.f32 %v2253, %v2927
    %v2929 = vpop.f32.mrf.mxu0
    %v2930 = vpop.f32.mrf.mxu0
    %2931 = vdwg.mxu0
    %2932 = vmatprep.subr.bf16.mxu0 0
    %2933 = vmatpush1.bf16.msra.mxu0 %v524
    %2934 = vmatprep.subr.bf16.mxu0 0
    %2935 = vmatpush1.bf16.msra.mxu0 %v521
    %2936 = vmatprep.subr.bf16.mxu0 0
    %2937 = vmatpush1.bf16.msra.mxu0 %v518
    %2938 = vmatprep.subr.bf16.mxu0 0
    %2939 = vmatpush1.bf16.msra.mxu0 %v515
    %2940 = vmatprep.subr.bf16.mxu0 0
    %2941 = vmatpush1.bf16.msra.mxu0 %v512
    %2942 = vmatprep.subr.bf16.mxu0 0
    %2943 = vmatpush1.bf16.msra.mxu0 %v509
    %2944 = vmatprep.subr.bf16.mxu0 0
    %2945 = vmatpush1.bf16.msra.mxu0 %v506
    %2946 = vmatprep.subr.bf16.mxu0 0
    %2947 = vmatpush1.bf16.msra.mxu0 %v503
    %2948 = vmatprep.subr.bf16.mxu0 0
    %2949 = vmatpush2.bf16.msra.mxu0 0
    %2950 = vmatprep.subr.bf16.mxu0 0
    %2951 = vmatpush2.bf16.msra.mxu0 0
    %2952 = vmatprep.subr.bf16.mxu0 0
    %2953 = vmatpush2.bf16.msra.mxu0 0
    %2954 = vmatprep.subr.bf16.mxu0 0
    %2955 = vmatpush2.bf16.msra.mxu0 0
    %2956 = vmatprep.subr.bf16.mxu0 0
    %2957 = vmatpush2.bf16.msra.mxu0 0
    %2958 = vmatprep.subr.bf16.mxu0 0
    %2959 = vmatpush2.bf16.msra.mxu0 0
    %2960 = vmatprep.subr.bf16.mxu0 0
    %2961 = vmatpush2.bf16.msra.mxu0 0
    %2962 = vmatprep.subr.bf16.mxu0 0
    %2963 = vmatpush2.bf16.msra.mxu0 0
    %2964 = vmatprep.mubr.bf16.mxu0 0
    %2965 = vmatmul.mubr.bf16.gmra.mxu0 %v2890
    %v2966 = vpop.f32.mrf.mxu0
    %v2967 = vadd.f32 %v2257, %v2966
    %v2968 = vpop.f32.mrf.mxu0
    %v2969 = vpop.f32.mrf.mxu0
    %v2970 = vpop.f32.mrf.mxu0
    %2971 = vdwg.mxu0
    %v2972 = vadd.f32 %v2240, %v2926
    %v2973 = vxor.u32 %v2972, 2147483648
    %v2974 = vmul.f32 %v2973, 1.442695
    %v2975 = vpow.pop %v2974
    %v2976 = vadd.f32 %v2975, 1.0
    %v2977 = vrcp.pop %v2976
    %v2978 = vmul.f32 1.0, %v2977
    %v2979 = vadd.f32 %v2241, %v2928
    %v2980 = vxor.u32 %v2979, 2147483648
    %v2981 = vmul.f32 %v2980, 1.442695
    %v2982 = vpow.pop %v2981
    %v2983 = vadd.f32 %v2982, 1.0
    %v2984 = vrcp.pop %v2983
    %v2985 = vmul.f32 1.0, %v2984
    %v2986 = vmul.f32 %v2978, %v2967
    %v2987 = vadd.f32 %v2242, %v2986
    %v2988 = vtanh.pop %v2987
    %v2989 = vsub.f32 1.0, %v2985
    %v2990 = vmul.f32 %v2989, %v2988
    %v2991 = vmul.f32 %v2985, %v2887
    %v2992 = vadd.f32 %v2990, %v2991
    %2993 = vst [vmem:[#allocation2 + $0x6] sm:$0x1] %v2992
    %2994 = vst [vmem:[#allocation2 + $0xd] sm:$0x2] %v2992
    %v2995 = vld [vmem:[#allocation2] sm:$0xff]
    %v2996 = vld [vmem:[#allocation2 + $0x8] sm:$0xff]
    %v2997 = vld [vmem:[%s13] sm:$0xff]
    %v2998 = vld [vmem:[%s13 + $0x8] sm:$0xff]
    %v2999 = vld [vmem:[%s13 + $0x10] sm:$0xff]
    %v3000 = vld [vmem:[%s13 + $0x18] sm:$0xff]
    %v3001 = vld [vmem:[%s13 + $0x20] sm:$0xff]
    %v3002 = vld [vmem:[%s13 + $0x28] sm:$0xff]
    %v3003 = vld [vmem:[%s13 + $0x30] sm:$0xff]
    %v3004 = vld [vmem:[%s13 + $0x38] sm:$0xff]
    %v3005 = vld [vmem:[%s13 + $0x40] sm:$0xff]
    %v3006 = vld [vmem:[%s13 + $0x48] sm:$0xff]
    %v3007 = vld [vmem:[%s13 + $0x50] sm:$0xff]
    %v3008 = vld [vmem:[%s13 + $0x58] sm:$0xff]
    %v3009 = vld [vmem:[%s13 + $0x60] sm:$0xff]
    %v3010 = vld [vmem:[%s13 + $0x68] sm:$0xff]
    %v3011 = vld [vmem:[%s13 + $0x70] sm:$0xff]
    %v3012 = vld [vmem:[%s13 + $0x78] sm:$0xff]
    %v3013 = vpack.c.bf16 %v2996, %v2995
    %v3014 = vpack.c.bf16 %v2998, %v2997
    %v3015 = vpack.c.bf16 %v3000, %v2999
    %v3016 = vpack.c.bf16 %v3002, %v3001
    %v3017 = vpack.c.bf16 %v3004, %v3003
    %v3018 = vpack.c.bf16 %v3006, %v3005
    %v3019 = vpack.c.bf16 %v3008, %v3007
    %v3020 = vpack.c.bf16 %v3010, %v3009
    %v3021 = vpack.c.bf16 %v3012, %v3011
    %v3022 = vld [vmem:[%s14] sm:$0x1]
    %v3024 = vlaneseq
    %v3025 = vshrl.u32 %v3024, 7
    %v3026 = vsub.s32 0, %v3025
    %v3027 = vrot.slane %v3022, %v3026
    %3029 = vmatprep.subr.bf16.mxu0 0
    %3030 = vmatpush1.bf16.msra.mxu0 %v3021
    %3031 = vmatprep.subr.bf16.mxu0 0
    %3032 = vmatpush1.bf16.msra.mxu0 %v3020
    %3033 = vmatprep.subr.bf16.mxu0 0
    %3034 = vmatpush1.bf16.msra.mxu0 %v3019
    %3035 = vmatprep.subr.bf16.mxu0 0
    %3036 = vmatpush1.bf16.msra.mxu0 %v3018
    %3037 = vmatprep.subr.bf16.mxu0 0
    %3038 = vmatpush1.bf16.msra.mxu0 %v3017
    %3039 = vmatprep.subr.bf16.mxu0 0
    %3040 = vmatpush1.bf16.msra.mxu0 %v3016
    %3041 = vmatprep.subr.bf16.mxu0 0
    %3042 = vmatpush1.bf16.msra.mxu0 %v3015
    %3043 = vmatprep.subr.bf16.mxu0 0
    %3044 = vmatpush1.bf16.msra.mxu0 %v3014
    %3045 = vmatprep.subr.bf16.mxu0 0
    %3046 = vmatpush2.bf16.msra.mxu0 0
    %3047 = vmatprep.subr.bf16.mxu0 0
    %3048 = vmatpush2.bf16.msra.mxu0 0
    %3049 = vmatprep.subr.bf16.mxu0 0
    %3050 = vmatpush2.bf16.msra.mxu0 0
    %3051 = vmatprep.subr.bf16.mxu0 0
    %3052 = vmatpush2.bf16.msra.mxu0 0
    %3053 = vmatprep.subr.bf16.mxu0 0
    %3054 = vmatpush2.bf16.msra.mxu0 0
    %3055 = vmatprep.subr.bf16.mxu0 0
    %3056 = vmatpush2.bf16.msra.mxu0 0
    %3057 = vmatprep.subr.bf16.mxu0 0
    %3058 = vmatpush2.bf16.msra.mxu0 0
    %3059 = vmatprep.subr.bf16.mxu0 0
    %3060 = vmatpush2.bf16.msra.mxu0 0
    %3061 = vmatprep.mubr.bf16.mxu0 0
    %3062 = vmatmul.mubr.bf16.gmra.mxu0 %v3013
    %v3063 = vpop.f32.mrf.mxu0
    %v3064 = vadd.f32 %v3027, %v3063
    %v3065 = vpop.f32.mrf.mxu0
    %v3066 = vpop.f32.mrf.mxu0
    %v3067 = vadd.f32 %v3027, %v3066
    %v3068 = vpop.f32.mrf.mxu0
    %3069 = vdwg.mxu0
    %vm3070 = vcmask 24576
    %3071 = vst.msk [vmem:[%s15] sm:$0x1] %vm3070, 0.0
    %3072 = vst.msk [vmem:[%s15 + $0x8] sm:$0x1] %vm3070, 0.0
    %vm3073 = vcmask 30720
    %3074 = vst.msk [vmem:[%s15 + $0x1] sm:$0x7f] %vm3073, %v3064
    %3075 = vst.msk [vmem:[%s15 + $0x9] sm:$0x7f] %vm3073, %v3067
    // Predicated region
    $region82: #{seq2seq_forward.1} parent=1 // pred_check
      _
    $region83: #{seq2seq_forward.1} parent=1 // pred_check_branch
      %3077 = sbr.rel (0) target = $region85
    $region84: #{seq2seq_forward.1} parent=1 // pred_region
      _
    $region85: #{seq2seq_forward.1} parent=1 // pred_fallthru
      _
    // Predicated region
    $region86: #{seq2seq_forward.1} parent=1 // pred_check
      _
    $region87: #{seq2seq_forward.1} parent=1 // pred_check_branch
      %3079 = sbr.rel (0) target = $region89
    $region88: #{seq2seq_forward.1} parent=1 // pred_region
      _
    $region89: #{seq2seq_forward.1} parent=1 // pred_fallthru
      _
    %3080 = vsyncpa [#allocation4], 1
    %3081 = vsyncpa [#allocation6], 1
    %3082 = vsyncpa [#allocation9], 1

</llo_original>
